<compile_context>
chip_gen: v5e
topology: v5e:2x2
jax: 0.10.0
libtpu: 0.0.40
codegen_flags: <defaults>
</compile_context>

<pallas_src>
import functools

import jax
import jax.numpy as jnp
import numpy as np
from jax import lax
from jax.experimental import pallas as pl
from jax.experimental.pallas import tpu as pltpu

LANE = 128       # feature dim padded to one full lane tile
HALF = LANE // 2 # each of the s/t hidden halves padded to 64 lanes


# ----------------------------------------------------------------------------
# Pallas kernel: one batch tile through all coupling blocks
# ----------------------------------------------------------------------------
def _realnvp_kernel(n_blocks, n_hidden, hp, dp,
                    x_ref, mask_ref, w0_ref, b0_ref, wh_ref, bh_ref,
                    wo_ref, bo_ref, out_ref):
    x = x_ref[...]                                   # (TN, dp) f32
    ld = jnp.zeros_like(x)                           # (TN, dp) f32

    # hoisted lane mask selecting the s-branch half of the fused hidden width
    col = lax.broadcasted_iota(jnp.int32, (1, 2 * hp), 1)
    s_half = col < hp                                # (1, 2*hp) bool

    def fused_act(h):
        # tanh on the s half (EUP), relu on the t half (VPU)
        return jnp.where(s_half, jnp.tanh(h), jnp.maximum(h, 0.0))

    for i in range(n_blocks):                        # blocks are sequential
        m = mask_ref[i]                              # (1, dp)  f32
        om = 1.0 - m
        mx = x * m                                   # (TN, dp) f32

        # fused s/t MLP: bf16 matmuls, f32 accumulation; weights read at the
        # call site (already resident in VMEM -> vld at use, short live range)
        h = jnp.dot(mx.astype(jnp.bfloat16), w0_ref[i],
                    preferred_element_type=jnp.float32) + b0_ref[i]   # (TN,2hp)
        for j in range(n_hidden):
            h = jnp.dot(fused_act(h).astype(jnp.bfloat16), wh_ref[i, j],
                        preferred_element_type=jnp.float32) + bh_ref[i, j]
        out = jnp.dot(fused_act(h).astype(jnp.bfloat16), wo_ref[i],
                      preferred_element_type=jnp.float32) + bo_ref[i]  # (TN,2dp)
        s = out[:, :dp]                              # lane-aligned static slices
        t = out[:, dp:]

        # coupling update + per-element log|det J| (f32)
        x = mx + om * (x - t) * jnp.exp(-s)
        ld = ld - om * s

    # fused lane-dense output slab: [u | log_det]
    out_ref[:, :dp] = x
    out_ref[:, dp:] = ld


# ----------------------------------------------------------------------------
# wrapper: batch grid, weights resident via constant index_maps
# ----------------------------------------------------------------------------
def mafrealnvp_forward(x, packed, *, n_blocks, n_hidden, tile_n=512):
    N, D = x.shape
    dp = packed["mask"].shape[-1]
    hp = packed["w0"].shape[-1] // 2

    # keep >= 2 grid tiles when the batch allows it (v7x: 2 TensorCores/chip)
    if N > 8:
        tile_n = min(tile_n, ((pl.cdiv(N, 2) + 7) // 8) * 8)
    tile_n = max(min(tile_n, N if N % 8 == 0 else ((N + 7) // 8) * 8), 8)

    n_tiles = pl.cdiv(N, tile_n)
    n_pad = n_tiles * tile_n

    x_pad = jnp.zeros((n_pad, dp), jnp.float32).at[:N, :D].set(x)

    kernel = functools.partial(_realnvp_kernel, n_blocks, n_hidden, hp, dp)

    batch_map = lambda i: (i, 0)
    const3 = lambda i: (0, 0, 0)
    const4 = lambda i: (0, 0, 0, 0)

    in_specs = [
        pl.BlockSpec((tile_n, dp), batch_map),            # x tile (pipelined)
        pl.BlockSpec(packed["mask"].shape, const3),       # weights: resident
        pl.BlockSpec(packed["w0"].shape, const3),
        pl.BlockSpec(packed["b0"].shape, const3),
        pl.BlockSpec(packed["wh"].shape, const4),
        pl.BlockSpec(packed["bh"].shape, const4),
        pl.BlockSpec(packed["wo"].shape, const3),
        pl.BlockSpec(packed["bo"].shape, const3),
    ]
    out_specs = pl.BlockSpec((tile_n, 2 * dp), batch_map)

    # real (post-compression) cost numbers so XLA schedules around the call
    flops_per_row = (2 * dp * (2 * hp)                  # first fused layer
                     + n_hidden * 2 * (2 * hp) * (2 * hp)
                     + 2 * (2 * hp) * (2 * dp))
    flops = int(n_blocks * n_pad * flops_per_row)
    transcendentals = int(n_blocks * n_pad * ((n_hidden + 1) * 2 * hp + dp))
    weight_bytes = int(sum(int(np.prod(v.shape)) * v.dtype.itemsize
                           for v in packed.values()))
    bytes_accessed = int(n_pad * dp * 4 + n_pad * 2 * dp * 4 + weight_bytes)

    fused = pl.pallas_call(
        kernel,
        grid=(n_tiles,),
        in_specs=in_specs,
        out_specs=out_specs,
        out_shape=jax.ShapeDtypeStruct((n_pad, 2 * dp), jnp.float32),
        compiler_params=pltpu.CompilerParams(
            dimension_semantics=("parallel",)),           # v7x: split over 2 TCs
        cost_estimate=pl.CostEstimate(flops=flops,
                                      transcendentals=transcendentals,
                                      bytes_accessed=bytes_accessed),
    )(x_pad, packed["mask"], packed["w0"], packed["b0"],
      packed["wh"], packed["bh"], packed["wo"], packed["bo"])

    return fused[:N, :D], fused[:N, dp:dp + D]


# ----------------------------------------------------------------------------
# parameter construction (deterministic, PyTorch-Linear-style init)
# ----------------------------------------------------------------------------
def init_params(key, input_size, hidden_size, n_blocks, n_hidden):
    D, H = input_size, hidden_size

    def linear(k, fan_in, fan_out):
        k1, k2 = jax.random.split(k)
        bound = 1.0 / np.sqrt(fan_in)
        w = jax.random.uniform(k1, (fan_in, fan_out), jnp.float32, -bound, bound)
        b = jax.random.uniform(k2, (fan_out,), jnp.float32, -bound, bound)
        # round to bf16 so the kernel's bf16 weights are exactly these values
        return (w.astype(jnp.bfloat16).astype(jnp.float32),
                b.astype(jnp.bfloat16).astype(jnp.float32))

    def build_net(k):
        ks = jax.random.split(k, n_hidden + 2)
        w0, b0 = linear(ks[0], D, H)
        whs, bhs = [], []
        for j in range(n_hidden):
            wh, bh = linear(ks[1 + j], H, H)
            whs.append(wh)
            bhs.append(bh)
        wo, bo = linear(ks[-1], H, D)
        return w0, b0, jnp.stack(whs), jnp.stack(bhs), wo, bo

    keys = jax.random.split(key, 2 * n_blocks)
    s_nets = [build_net(keys[i]) for i in range(n_blocks)]
    t_nets = [build_net(keys[n_blocks + i]) for i in range(n_blocks)]

    def stack(nets, idx):
        return jnp.stack([n[idx] for n in nets])

    # mask alternates per block: arange(D)%2, then 1 - previous, ...
    m0 = (jnp.arange(D) % 2).astype(jnp.float32)
    mask = jnp.stack([m0 if (i % 2 == 0) else 1.0 - m0 for i in range(n_blocks)])

    return {
        "mask": mask,                                       # (nb, D)
        "sW0": stack(s_nets, 0), "sb0": stack(s_nets, 1),
        "sWh": stack(s_nets, 2), "sbh": stack(s_nets, 3),
        "sWo": stack(s_nets, 4), "sbo": stack(s_nets, 5),
        "tW0": stack(t_nets, 0), "tb0": stack(t_nets, 1),
        "tWh": stack(t_nets, 2), "tbh": stack(t_nets, 3),
        "tWo": stack(t_nets, 4), "tbo": stack(t_nets, 5),
    }


# ----------------------------------------------------------------------------
# host-side packing: D padded to 128 lanes, each of the s/t hidden halves
# padded to 64 lanes (fused width 128), nets fused, weights cast to bf16.
# Padded lanes are self-consistently zero (mask=0, zero weight rows/cols,
# zero biases, tanh(0)=relu(0)=0) so no garbage leaks into exp(-s).
# ----------------------------------------------------------------------------
def pack_params(raw, *, n_blocks, n_hidden, dp=LANE, hp=HALF):
    def pad2(w, rows, cols):
        return jnp.pad(w, ((0, rows - w.shape[0]), (0, cols - w.shape[1])))

    def pad1(b, cols):
        return jnp.pad(b, ((0, cols - b.shape[0]),))

    def blkdiag(a, b):
        top = jnp.concatenate([a, jnp.zeros((a.shape[0], b.shape[1]), a.dtype)], axis=1)
        bot = jnp.concatenate([jnp.zeros((b.shape[0], a.shape[1]), b.dtype), b], axis=1)
        return jnp.concatenate([top, bot], axis=0)

    mask = jnp.stack([pad1(raw["mask"][i], dp)
                      for i in range(n_blocks)])[:, None, :]               # (nb,1,dp)

    w0 = jnp.stack([jnp.concatenate([pad2(raw["sW0"][i], dp, hp),
                                     pad2(raw["tW0"][i], dp, hp)], axis=1)
                    for i in range(n_blocks)]).astype(jnp.bfloat16)        # (nb,dp,2hp)
    b0 = jnp.stack([jnp.concatenate([pad1(raw["sb0"][i], hp),
                                     pad1(raw["tb0"][i], hp)])
                    for i in range(n_blocks)])[:, None, :]                 # (nb,1,2hp)

    wh = jnp.stack([jnp.stack([blkdiag(pad2(raw["sWh"][i, j], hp, hp),
                                       pad2(raw["tWh"][i, j], hp, hp))
                               for j in range(n_hidden)])
                    for i in range(n_blocks)]).astype(jnp.bfloat16)        # (nb,nh,2hp,2hp)
    bh = jnp.stack([jnp.stack([jnp.concatenate([pad1(raw["sbh"][i, j], hp),
                                                pad1(raw["tbh"][i, j], hp)])
                               for j in range(n_hidden)])
                    for i in range(n_blocks)])[:, :, None, :]              # (nb,nh,1,2hp)

    wo = jnp.stack([blkdiag(pad2(raw["sWo"][i], hp, dp),
                            pad2(raw["tWo"][i], hp, dp))
                    for i in range(n_blocks)]).astype(jnp.bfloat16)        # (nb,2hp,2dp)
    bo = jnp.stack([jnp.concatenate([pad1(raw["sbo"][i], dp),
                                     pad1(raw["tbo"][i], dp)])
                    for i in range(n_blocks)])[:, None, :]                 # (nb,1,2dp)

    return {"mask": mask, "w0": w0, "b0": b0, "wh": wh, "bh": bh,
            "wo": wo, "bo": bo}


# ----------------------------------------------------------------------------
# pure-JAX f32 reference of MAFRealNVP.forward (for correctness check)
# ----------------------------------------------------------------------------
def reference_forward(x, raw, *, n_blocks, n_hidden):
    u = x
    ld = jnp.zeros_like(x)
    for i in range(n_blocks):
        m = raw["mask"][i]
        mx = u * m
        # s-net: Tanh before each linear after the first, none on the output
        h = mx @ raw["sW0"][i] + raw["sb0"][i]
        for j in range(n_hidden):
            h = jnp.tanh(h) @ raw["sWh"][i, j] + raw["sbh"][i, j]
        s = jnp.tanh(h) @ raw["sWo"][i] + raw["sbo"][i]
        # t-net: same with ReLU
        h = mx @ raw["tW0"][i] + raw["tb0"][i]
        for j in range(n_hidden):
            h = jnp.maximum(h, 0.0) @ raw["tWh"][i, j] + raw["tbh"][i, j]
        t = jnp.maximum(h, 0.0) @ raw["tWo"][i] + raw["tbo"][i]
        u = mx + (1.0 - m) * (u - t) * jnp.exp(-s)
        ld = ld - (1.0 - m) * s
    return u, ld


# ----------------------------------------------------------------------------
if __name__ == "__main__":
    N = 512          # batch (2 grid tiles of 256 -> both v7x TensorCores busy)
    D = 16           # input_size
    H = 32           # hidden_size
    N_BLOCKS = 4
    N_HIDDEN = 1

    key = jax.random.PRNGKey(0)
    kx, kp = jax.random.split(key)
    x = jax.random.normal(kx, (N, D), jnp.float32)

    raw = init_params(kp, D, H, N_BLOCKS, N_HIDDEN)
    packed = pack_params(raw, n_blocks=N_BLOCKS, n_hidden=N_HIDDEN)

    u_k, ld_k = mafrealnvp_forward(x, packed, n_blocks=N_BLOCKS,
                                   n_hidden=N_HIDDEN, tile_n=512)
    u_k = jax.block_until_ready(u_k)
    ld_k = jax.block_until_ready(ld_k)

    u_r, ld_r = reference_forward(x, raw, n_blocks=N_BLOCKS, n_hidden=N_HIDDEN)

    np.testing.assert_allclose(np.asarray(u_k), np.asarray(u_r), rtol=2e-2, atol=2e-2)
    np.testing.assert_allclose(np.asarray(ld_k), np.asarray(ld_r), rtol=2e-2, atol=2e-2)

    print("KERNEL_OK")
</pallas_src>

<mosaic_0001>
module attributes {stable_mosaic.version = 11 : i64} {
  func.func @_realnvp_kernel(%arg0: i32, %arg1: memref<256x128xf32, #tpu.memory_space<vmem>>, %arg2: memref<4x1x128xf32, #tpu.memory_space<vmem>>, %arg3: memref<4x128x128xbf16, #tpu.memory_space<vmem>>, %arg4: memref<4x1x128xf32, #tpu.memory_space<vmem>>, %arg5: memref<4x1x128x128xbf16, #tpu.memory_space<vmem>>, %arg6: memref<4x1x1x128xf32, #tpu.memory_space<vmem>>, %arg7: memref<4x128x256xbf16, #tpu.memory_space<vmem>>, %arg8: memref<4x1x256xf32, #tpu.memory_space<vmem>>, %arg9: memref<256x256xf32, #tpu.memory_space<vmem>>) attributes {dimension_semantics = [#tpu.dimension_semantics<parallel>], iteration_bounds = array<i64: 2>, scalar_prefetch = 0 : i64, scratch_operands = 0 : i64, tpu.core_type = #tpu.core_type<tc>, window_params = [{transform_indices = @transform_0, window_bounds = array<i64: 256, 128>}, {pipeline_mode = #tpu.pipeline_mode<synchronous>, transform_indices = @transform_1, window_bounds = array<i64: 4, 1, 128>}, {pipeline_mode = #tpu.pipeline_mode<synchronous>, transform_indices = @transform_2, window_bounds = array<i64: 4, 128, 128>}, {pipeline_mode = #tpu.pipeline_mode<synchronous>, transform_indices = @transform_3, window_bounds = array<i64: 4, 1, 128>}, {pipeline_mode = #tpu.pipeline_mode<synchronous>, transform_indices = @transform_4, window_bounds = array<i64: 4, 1, 128, 128>}, {pipeline_mode = #tpu.pipeline_mode<synchronous>, transform_indices = @transform_5, window_bounds = array<i64: 4, 1, 1, 128>}, {pipeline_mode = #tpu.pipeline_mode<synchronous>, transform_indices = @transform_6, window_bounds = array<i64: 4, 128, 256>}, {pipeline_mode = #tpu.pipeline_mode<synchronous>, transform_indices = @transform_7, window_bounds = array<i64: 4, 1, 256>}, {transform_indices = @transform_8, window_bounds = array<i64: 256, 256>}]} {
    %c0 = arith.constant 0 : index
    %c0_0 = arith.constant 0 : index
    %0 = vector.load %arg1[%c0, %c0_0] : memref<256x128xf32, #tpu.memory_space<vmem>>, vector<256x128xf32>
    %cst = arith.constant 0.000000e+00 : f32
    %1 = vector.broadcast %cst : f32 to vector<256x128xf32>
    %2 = tpu.iota {dimensions = array<i32: 1>} : vector<1x128xi32>
    %c64_i32 = arith.constant 64 : i32
    %3 = vector.broadcast %c64_i32 : i32 to vector<1x128xi32>
    %4 = arith.cmpi slt, %2, %3 : vector<1x128xi32>
    %c0_1 = arith.constant 0 : index
    %c0_2 = arith.constant 0 : index
    %c0_3 = arith.constant 0 : index
    %5 = vector.load %arg2[%c0_1, %c0_2, %c0_3] : memref<4x1x128xf32, #tpu.memory_space<vmem>>, vector<1x1x128xf32>
    %6 = vector.shape_cast %5 : vector<1x1x128xf32> to vector<1x128xf32>
    %cst_4 = arith.constant 1.000000e+00 : f32
    %7 = vector.broadcast %cst_4 : f32 to vector<1x128xf32>
    %8 = arith.subf %7, %6 : vector<1x128xf32>
    %9 = vector.broadcast %6 : vector<1x128xf32> to vector<256x128xf32>
    %10 = arith.mulf %0, %9 : vector<256x128xf32>
    %11 = arith.truncf %10 : vector<256x128xf32> to vector<256x128xbf16>
    %c0_5 = arith.constant 0 : index
    %c0_6 = arith.constant 0 : index
    %c0_7 = arith.constant 0 : index
    %12 = vector.load %arg3[%c0_5, %c0_6, %c0_7] : memref<4x128x128xbf16, #tpu.memory_space<vmem>>, vector<1x128x128xbf16>
    %13 = vector.shape_cast %12 : vector<1x128x128xbf16> to vector<128x128xbf16>
    %cst_8 = arith.constant dense<0.000000e+00> : vector<256x128xf32>
    %14 = tpu.matmul %11, %13, %cst_8 {dimension_numbers = #tpu.dot_dimension_numbers<[1], [0], [0], [1], [0, 0, 1, 1], [], []>} : vector<256x128xbf16>, vector<128x128xbf16>, vector<256x128xf32> -> vector<256x128xf32>
    %c0_9 = arith.constant 0 : index
    %c0_10 = arith.constant 0 : index
    %c0_11 = arith.constant 0 : index
    %15 = vector.load %arg4[%c0_9, %c0_10, %c0_11] : memref<4x1x128xf32, #tpu.memory_space<vmem>>, vector<1x1x128xf32>
    %16 = vector.shape_cast %15 : vector<1x1x128xf32> to vector<1x128xf32>
    %17 = vector.broadcast %16 : vector<1x128xf32> to vector<256x128xf32>
    %18 = arith.addf %14, %17 : vector<256x128xf32>
    %19 = math.tanh %18 : vector<256x128xf32>
    %cst_12 = arith.constant 0.000000e+00 : f32
    %20 = vector.broadcast %cst_12 : f32 to vector<256x128xf32>
    %21 = arith.maximumf %18, %20 : vector<256x128xf32>
    %22 = vector.shape_cast %4 : vector<1x128xi1> to vector<1x128xi1>
    %23 = vector.broadcast %22 : vector<1x128xi1> to vector<256x128xi1>
    %24 = arith.select %23, %19, %21 : vector<256x128xi1>, vector<256x128xf32>
    %25 = arith.truncf %24 : vector<256x128xf32> to vector<256x128xbf16>
    %c0_13 = arith.constant 0 : index
    %c0_14 = arith.constant 0 : index
    %c0_15 = arith.constant 0 : index
    %c0_16 = arith.constant 0 : index
    %26 = vector.load %arg5[%c0_13, %c0_14, %c0_15, %c0_16] : memref<4x1x128x128xbf16, #tpu.memory_space<vmem>>, vector<1x1x128x128xbf16>
    %27 = vector.shape_cast %26 : vector<1x1x128x128xbf16> to vector<128x128xbf16>
    %cst_17 = arith.constant dense<0.000000e+00> : vector<256x128xf32>
    %28 = tpu.matmul %25, %27, %cst_17 {dimension_numbers = #tpu.dot_dimension_numbers<[1], [0], [0], [1], [0, 0, 1, 1], [], []>} : vector<256x128xbf16>, vector<128x128xbf16>, vector<256x128xf32> -> vector<256x128xf32>
    %c0_18 = arith.constant 0 : index
    %c0_19 = arith.constant 0 : index
    %c0_20 = arith.constant 0 : index
    %c0_21 = arith.constant 0 : index
    %29 = vector.load %arg6[%c0_18, %c0_19, %c0_20, %c0_21] : memref<4x1x1x128xf32, #tpu.memory_space<vmem>>, vector<1x1x1x128xf32>
    %30 = vector.shape_cast %29 : vector<1x1x1x128xf32> to vector<1x128xf32>
    %31 = vector.broadcast %30 : vector<1x128xf32> to vector<256x128xf32>
    %32 = arith.addf %28, %31 : vector<256x128xf32>
    %33 = math.tanh %32 : vector<256x128xf32>
    %cst_22 = arith.constant 0.000000e+00 : f32
    %34 = vector.broadcast %cst_22 : f32 to vector<256x128xf32>
    %35 = arith.maximumf %32, %34 : vector<256x128xf32>
    %36 = vector.shape_cast %4 : vector<1x128xi1> to vector<1x128xi1>
    %37 = vector.broadcast %36 : vector<1x128xi1> to vector<256x128xi1>
    %38 = arith.select %37, %33, %35 : vector<256x128xi1>, vector<256x128xf32>
    %39 = arith.truncf %38 : vector<256x128xf32> to vector<256x128xbf16>
    %c0_23 = arith.constant 0 : index
    %c0_24 = arith.constant 0 : index
    %c0_25 = arith.constant 0 : index
    %40 = vector.load %arg7[%c0_23, %c0_24, %c0_25] : memref<4x128x256xbf16, #tpu.memory_space<vmem>>, vector<1x128x256xbf16>
    %41 = vector.shape_cast %40 : vector<1x128x256xbf16> to vector<128x256xbf16>
    %cst_26 = arith.constant dense<0.000000e+00> : vector<256x256xf32>
    %42 = tpu.matmul %39, %41, %cst_26 {dimension_numbers = #tpu.dot_dimension_numbers<[1], [0], [0], [1], [0, 0, 1, 1], [], []>} : vector<256x128xbf16>, vector<128x256xbf16>, vector<256x256xf32> -> vector<256x256xf32>
    %c0_27 = arith.constant 0 : index
    %c0_28 = arith.constant 0 : index
    %c0_29 = arith.constant 0 : index
    %43 = vector.load %arg8[%c0_27, %c0_28, %c0_29] : memref<4x1x256xf32, #tpu.memory_space<vmem>>, vector<1x1x256xf32>
    %44 = vector.shape_cast %43 : vector<1x1x256xf32> to vector<1x256xf32>
    %45 = vector.broadcast %44 : vector<1x256xf32> to vector<256x256xf32>
    %46 = arith.addf %42, %45 : vector<256x256xf32>
    %47 = vector.extract_strided_slice %46 {offsets = [0, 0], sizes = [256, 128], strides = [1, 1]} : vector<256x256xf32> to vector<256x128xf32>
    %48 = vector.extract_strided_slice %46 {offsets = [0, 128], sizes = [256, 128], strides = [1, 1]} : vector<256x256xf32> to vector<256x128xf32>
    %49 = arith.subf %0, %48 : vector<256x128xf32>
    %50 = vector.broadcast %8 : vector<1x128xf32> to vector<256x128xf32>
    %51 = arith.mulf %50, %49 : vector<256x128xf32>
    %cst_30 = arith.constant 0.000000e+00 : f32
    %52 = vector.broadcast %cst_30 : f32 to vector<256x128xf32>
    %53 = arith.subf %52, %47 : vector<256x128xf32>
    %54 = math.exp %53 : vector<256x128xf32>
    %55 = arith.mulf %51, %54 : vector<256x128xf32>
    %56 = arith.addf %10, %55 : vector<256x128xf32>
    %57 = vector.broadcast %8 : vector<1x128xf32> to vector<256x128xf32>
    %58 = arith.mulf %57, %47 : vector<256x128xf32>
    %59 = arith.subf %1, %58 : vector<256x128xf32>
    %c1 = arith.constant 1 : index
    %c0_31 = arith.constant 0 : index
    %c0_32 = arith.constant 0 : index
    %60 = vector.load %arg2[%c1, %c0_31, %c0_32] : memref<4x1x128xf32, #tpu.memory_space<vmem>>, vector<1x1x128xf32>
    %61 = vector.shape_cast %60 : vector<1x1x128xf32> to vector<1x128xf32>
    %cst_33 = arith.constant 1.000000e+00 : f32
    %62 = vector.broadcast %cst_33 : f32 to vector<1x128xf32>
    %63 = arith.subf %62, %61 : vector<1x128xf32>
    %64 = vector.broadcast %61 : vector<1x128xf32> to vector<256x128xf32>
    %65 = arith.mulf %56, %64 : vector<256x128xf32>
    %66 = arith.truncf %65 : vector<256x128xf32> to vector<256x128xbf16>
    %c1_34 = arith.constant 1 : index
    %c0_35 = arith.constant 0 : index
    %c0_36 = arith.constant 0 : index
    %67 = vector.load %arg3[%c1_34, %c0_35, %c0_36] : memref<4x128x128xbf16, #tpu.memory_space<vmem>>, vector<1x128x128xbf16>
    %68 = vector.shape_cast %67 : vector<1x128x128xbf16> to vector<128x128xbf16>
    %cst_37 = arith.constant dense<0.000000e+00> : vector<256x128xf32>
    %69 = tpu.matmul %66, %68, %cst_37 {dimension_numbers = #tpu.dot_dimension_numbers<[1], [0], [0], [1], [0, 0, 1, 1], [], []>} : vector<256x128xbf16>, vector<128x128xbf16>, vector<256x128xf32> -> vector<256x128xf32>
    %c1_38 = arith.constant 1 : index
    %c0_39 = arith.constant 0 : index
    %c0_40 = arith.constant 0 : index
    %70 = vector.load %arg4[%c1_38, %c0_39, %c0_40] : memref<4x1x128xf32, #tpu.memory_space<vmem>>, vector<1x1x128xf32>
    %71 = vector.shape_cast %70 : vector<1x1x128xf32> to vector<1x128xf32>
    %72 = vector.broadcast %71 : vector<1x128xf32> to vector<256x128xf32>
    %73 = arith.addf %69, %72 : vector<256x128xf32>
    %74 = math.tanh %73 : vector<256x128xf32>
    %cst_41 = arith.constant 0.000000e+00 : f32
    %75 = vector.broadcast %cst_41 : f32 to vector<256x128xf32>
    %76 = arith.maximumf %73, %75 : vector<256x128xf32>
    %77 = vector.shape_cast %4 : vector<1x128xi1> to vector<1x128xi1>
    %78 = vector.broadcast %77 : vector<1x128xi1> to vector<256x128xi1>
    %79 = arith.select %78, %74, %76 : vector<256x128xi1>, vector<256x128xf32>
    %80 = arith.truncf %79 : vector<256x128xf32> to vector<256x128xbf16>
    %c1_42 = arith.constant 1 : index
    %c0_43 = arith.constant 0 : index
    %c0_44 = arith.constant 0 : index
    %c0_45 = arith.constant 0 : index
    %81 = vector.load %arg5[%c1_42, %c0_43, %c0_44, %c0_45] : memref<4x1x128x128xbf16, #tpu.memory_space<vmem>>, vector<1x1x128x128xbf16>
    %82 = vector.shape_cast %81 : vector<1x1x128x128xbf16> to vector<128x128xbf16>
    %cst_46 = arith.constant dense<0.000000e+00> : vector<256x128xf32>
    %83 = tpu.matmul %80, %82, %cst_46 {dimension_numbers = #tpu.dot_dimension_numbers<[1], [0], [0], [1], [0, 0, 1, 1], [], []>} : vector<256x128xbf16>, vector<128x128xbf16>, vector<256x128xf32> -> vector<256x128xf32>
    %c1_47 = arith.constant 1 : index
    %c0_48 = arith.constant 0 : index
    %c0_49 = arith.constant 0 : index
    %c0_50 = arith.constant 0 : index
    %84 = vector.load %arg6[%c1_47, %c0_48, %c0_49, %c0_50] : memref<4x1x1x128xf32, #tpu.memory_space<vmem>>, vector<1x1x1x128xf32>
    %85 = vector.shape_cast %84 : vector<1x1x1x128xf32> to vector<1x128xf32>
    %86 = vector.broadcast %85 : vector<1x128xf32> to vector<256x128xf32>
    %87 = arith.addf %83, %86 : vector<256x128xf32>
    %88 = math.tanh %87 : vector<256x128xf32>
    %cst_51 = arith.constant 0.000000e+00 : f32
    %89 = vector.broadcast %cst_51 : f32 to vector<256x128xf32>
    %90 = arith.maximumf %87, %89 : vector<256x128xf32>
    %91 = vector.shape_cast %4 : vector<1x128xi1> to vector<1x128xi1>
    %92 = vector.broadcast %91 : vector<1x128xi1> to vector<256x128xi1>
    %93 = arith.select %92, %88, %90 : vector<256x128xi1>, vector<256x128xf32>
    %94 = arith.truncf %93 : vector<256x128xf32> to vector<256x128xbf16>
    %c1_52 = arith.constant 1 : index
    %c0_53 = arith.constant 0 : index
    %c0_54 = arith.constant 0 : index
    %95 = vector.load %arg7[%c1_52, %c0_53, %c0_54] : memref<4x128x256xbf16, #tpu.memory_space<vmem>>, vector<1x128x256xbf16>
    %96 = vector.shape_cast %95 : vector<1x128x256xbf16> to vector<128x256xbf16>
    %cst_55 = arith.constant dense<0.000000e+00> : vector<256x256xf32>
    %97 = tpu.matmul %94, %96, %cst_55 {dimension_numbers = #tpu.dot_dimension_numbers<[1], [0], [0], [1], [0, 0, 1, 1], [], []>} : vector<256x128xbf16>, vector<128x256xbf16>, vector<256x256xf32> -> vector<256x256xf32>
    %c1_56 = arith.constant 1 : index
    %c0_57 = arith.constant 0 : index
    %c0_58 = arith.constant 0 : index
    %98 = vector.load %arg8[%c1_56, %c0_57, %c0_58] : memref<4x1x256xf32, #tpu.memory_space<vmem>>, vector<1x1x256xf32>
    %99 = vector.shape_cast %98 : vector<1x1x256xf32> to vector<1x256xf32>
    %100 = vector.broadcast %99 : vector<1x256xf32> to vector<256x256xf32>
    %101 = arith.addf %97, %100 : vector<256x256xf32>
    %102 = vector.extract_strided_slice %101 {offsets = [0, 0], sizes = [256, 128], strides = [1, 1]} : vector<256x256xf32> to vector<256x128xf32>
    %103 = vector.extract_strided_slice %101 {offsets = [0, 128], sizes = [256, 128], strides = [1, 1]} : vector<256x256xf32> to vector<256x128xf32>
    %104 = arith.subf %56, %103 : vector<256x128xf32>
    %105 = vector.broadcast %63 : vector<1x128xf32> to vector<256x128xf32>
    %106 = arith.mulf %105, %104 : vector<256x128xf32>
    %cst_59 = arith.constant 0.000000e+00 : f32
    %107 = vector.broadcast %cst_59 : f32 to vector<256x128xf32>
    %108 = arith.subf %107, %102 : vector<256x128xf32>
    %109 = math.exp %108 : vector<256x128xf32>
    %110 = arith.mulf %106, %109 : vector<256x128xf32>
    %111 = arith.addf %65, %110 : vector<256x128xf32>
    %112 = vector.broadcast %63 : vector<1x128xf32> to vector<256x128xf32>
    %113 = arith.mulf %112, %102 : vector<256x128xf32>
    %114 = arith.subf %59, %113 : vector<256x128xf32>
    %c2 = arith.constant 2 : index
    %c0_60 = arith.constant 0 : index
    %c0_61 = arith.constant 0 : index
    %115 = vector.load %arg2[%c2, %c0_60, %c0_61] : memref<4x1x128xf32, #tpu.memory_space<vmem>>, vector<1x1x128xf32>
    %116 = vector.shape_cast %115 : vector<1x1x128xf32> to vector<1x128xf32>
    %cst_62 = arith.constant 1.000000e+00 : f32
    %117 = vector.broadcast %cst_62 : f32 to vector<1x128xf32>
    %118 = arith.subf %117, %116 : vector<1x128xf32>
    %119 = vector.broadcast %116 : vector<1x128xf32> to vector<256x128xf32>
    %120 = arith.mulf %111, %119 : vector<256x128xf32>
    %121 = arith.truncf %120 : vector<256x128xf32> to vector<256x128xbf16>
    %c2_63 = arith.constant 2 : index
    %c0_64 = arith.constant 0 : index
    %c0_65 = arith.constant 0 : index
    %122 = vector.load %arg3[%c2_63, %c0_64, %c0_65] : memref<4x128x128xbf16, #tpu.memory_space<vmem>>, vector<1x128x128xbf16>
    %123 = vector.shape_cast %122 : vector<1x128x128xbf16> to vector<128x128xbf16>
    %cst_66 = arith.constant dense<0.000000e+00> : vector<256x128xf32>
    %124 = tpu.matmul %121, %123, %cst_66 {dimension_numbers = #tpu.dot_dimension_numbers<[1], [0], [0], [1], [0, 0, 1, 1], [], []>} : vector<256x128xbf16>, vector<128x128xbf16>, vector<256x128xf32> -> vector<256x128xf32>
    %c2_67 = arith.constant 2 : index
    %c0_68 = arith.constant 0 : index
    %c0_69 = arith.constant 0 : index
    %125 = vector.load %arg4[%c2_67, %c0_68, %c0_69] : memref<4x1x128xf32, #tpu.memory_space<vmem>>, vector<1x1x128xf32>
    %126 = vector.shape_cast %125 : vector<1x1x128xf32> to vector<1x128xf32>
    %127 = vector.broadcast %126 : vector<1x128xf32> to vector<256x128xf32>
    %128 = arith.addf %124, %127 : vector<256x128xf32>
    %129 = math.tanh %128 : vector<256x128xf32>
    %cst_70 = arith.constant 0.000000e+00 : f32
    %130 = vector.broadcast %cst_70 : f32 to vector<256x128xf32>
    %131 = arith.maximumf %128, %130 : vector<256x128xf32>
    %132 = vector.shape_cast %4 : vector<1x128xi1> to vector<1x128xi1>
    %133 = vector.broadcast %132 : vector<1x128xi1> to vector<256x128xi1>
    %134 = arith.select %133, %129, %131 : vector<256x128xi1>, vector<256x128xf32>
    %135 = arith.truncf %134 : vector<256x128xf32> to vector<256x128xbf16>
    %c2_71 = arith.constant 2 : index
    %c0_72 = arith.constant 0 : index
    %c0_73 = arith.constant 0 : index
    %c0_74 = arith.constant 0 : index
    %136 = vector.load %arg5[%c2_71, %c0_72, %c0_73, %c0_74] : memref<4x1x128x128xbf16, #tpu.memory_space<vmem>>, vector<1x1x128x128xbf16>
    %137 = vector.shape_cast %136 : vector<1x1x128x128xbf16> to vector<128x128xbf16>
    %cst_75 = arith.constant dense<0.000000e+00> : vector<256x128xf32>
    %138 = tpu.matmul %135, %137, %cst_75 {dimension_numbers = #tpu.dot_dimension_numbers<[1], [0], [0], [1], [0, 0, 1, 1], [], []>} : vector<256x128xbf16>, vector<128x128xbf16>, vector<256x128xf32> -> vector<256x128xf32>
    %c2_76 = arith.constant 2 : index
    %c0_77 = arith.constant 0 : index
    %c0_78 = arith.constant 0 : index
    %c0_79 = arith.constant 0 : index
    %139 = vector.load %arg6[%c2_76, %c0_77, %c0_78, %c0_79] : memref<4x1x1x128xf32, #tpu.memory_space<vmem>>, vector<1x1x1x128xf32>
    %140 = vector.shape_cast %139 : vector<1x1x1x128xf32> to vector<1x128xf32>
    %141 = vector.broadcast %140 : vector<1x128xf32> to vector<256x128xf32>
    %142 = arith.addf %138, %141 : vector<256x128xf32>
    %143 = math.tanh %142 : vector<256x128xf32>
    %cst_80 = arith.constant 0.000000e+00 : f32
    %144 = vector.broadcast %cst_80 : f32 to vector<256x128xf32>
    %145 = arith.maximumf %142, %144 : vector<256x128xf32>
    %146 = vector.shape_cast %4 : vector<1x128xi1> to vector<1x128xi1>
    %147 = vector.broadcast %146 : vector<1x128xi1> to vector<256x128xi1>
    %148 = arith.select %147, %143, %145 : vector<256x128xi1>, vector<256x128xf32>
    %149 = arith.truncf %148 : vector<256x128xf32> to vector<256x128xbf16>
    %c2_81 = arith.constant 2 : index
    %c0_82 = arith.constant 0 : index
    %c0_83 = arith.constant 0 : index
    %150 = vector.load %arg7[%c2_81, %c0_82, %c0_83] : memref<4x128x256xbf16, #tpu.memory_space<vmem>>, vector<1x128x256xbf16>
    %151 = vector.shape_cast %150 : vector<1x128x256xbf16> to vector<128x256xbf16>
    %cst_84 = arith.constant dense<0.000000e+00> : vector<256x256xf32>
    %152 = tpu.matmul %149, %151, %cst_84 {dimension_numbers = #tpu.dot_dimension_numbers<[1], [0], [0], [1], [0, 0, 1, 1], [], []>} : vector<256x128xbf16>, vector<128x256xbf16>, vector<256x256xf32> -> vector<256x256xf32>
    %c2_85 = arith.constant 2 : index
    %c0_86 = arith.constant 0 : index
    %c0_87 = arith.constant 0 : index
    %153 = vector.load %arg8[%c2_85, %c0_86, %c0_87] : memref<4x1x256xf32, #tpu.memory_space<vmem>>, vector<1x1x256xf32>
    %154 = vector.shape_cast %153 : vector<1x1x256xf32> to vector<1x256xf32>
    %155 = vector.broadcast %154 : vector<1x256xf32> to vector<256x256xf32>
    %156 = arith.addf %152, %155 : vector<256x256xf32>
    %157 = vector.extract_strided_slice %156 {offsets = [0, 0], sizes = [256, 128], strides = [1, 1]} : vector<256x256xf32> to vector<256x128xf32>
    %158 = vector.extract_strided_slice %156 {offsets = [0, 128], sizes = [256, 128], strides = [1, 1]} : vector<256x256xf32> to vector<256x128xf32>
    %159 = arith.subf %111, %158 : vector<256x128xf32>
    %160 = vector.broadcast %118 : vector<1x128xf32> to vector<256x128xf32>
    %161 = arith.mulf %160, %159 : vector<256x128xf32>
    %cst_88 = arith.constant 0.000000e+00 : f32
    %162 = vector.broadcast %cst_88 : f32 to vector<256x128xf32>
    %163 = arith.subf %162, %157 : vector<256x128xf32>
    %164 = math.exp %163 : vector<256x128xf32>
    %165 = arith.mulf %161, %164 : vector<256x128xf32>
    %166 = arith.addf %120, %165 : vector<256x128xf32>
    %167 = vector.broadcast %118 : vector<1x128xf32> to vector<256x128xf32>
    %168 = arith.mulf %167, %157 : vector<256x128xf32>
    %169 = arith.subf %114, %168 : vector<256x128xf32>
    %c3 = arith.constant 3 : index
    %c0_89 = arith.constant 0 : index
    %c0_90 = arith.constant 0 : index
    %170 = vector.load %arg2[%c3, %c0_89, %c0_90] : memref<4x1x128xf32, #tpu.memory_space<vmem>>, vector<1x1x128xf32>
    %171 = vector.shape_cast %170 : vector<1x1x128xf32> to vector<1x128xf32>
    %cst_91 = arith.constant 1.000000e+00 : f32
    %172 = vector.broadcast %cst_91 : f32 to vector<1x128xf32>
    %173 = arith.subf %172, %171 : vector<1x128xf32>
    %174 = vector.broadcast %171 : vector<1x128xf32> to vector<256x128xf32>
    %175 = arith.mulf %166, %174 : vector<256x128xf32>
    %176 = arith.truncf %175 : vector<256x128xf32> to vector<256x128xbf16>
    %c3_92 = arith.constant 3 : index
    %c0_93 = arith.constant 0 : index
    %c0_94 = arith.constant 0 : index
    %177 = vector.load %arg3[%c3_92, %c0_93, %c0_94] : memref<4x128x128xbf16, #tpu.memory_space<vmem>>, vector<1x128x128xbf16>
    %178 = vector.shape_cast %177 : vector<1x128x128xbf16> to vector<128x128xbf16>
    %cst_95 = arith.constant dense<0.000000e+00> : vector<256x128xf32>
    %179 = tpu.matmul %176, %178, %cst_95 {dimension_numbers = #tpu.dot_dimension_numbers<[1], [0], [0], [1], [0, 0, 1, 1], [], []>} : vector<256x128xbf16>, vector<128x128xbf16>, vector<256x128xf32> -> vector<256x128xf32>
    %c3_96 = arith.constant 3 : index
    %c0_97 = arith.constant 0 : index
    %c0_98 = arith.constant 0 : index
    %180 = vector.load %arg4[%c3_96, %c0_97, %c0_98] : memref<4x1x128xf32, #tpu.memory_space<vmem>>, vector<1x1x128xf32>
    %181 = vector.shape_cast %180 : vector<1x1x128xf32> to vector<1x128xf32>
    %182 = vector.broadcast %181 : vector<1x128xf32> to vector<256x128xf32>
    %183 = arith.addf %179, %182 : vector<256x128xf32>
    %184 = math.tanh %183 : vector<256x128xf32>
    %cst_99 = arith.constant 0.000000e+00 : f32
    %185 = vector.broadcast %cst_99 : f32 to vector<256x128xf32>
    %186 = arith.maximumf %183, %185 : vector<256x128xf32>
    %187 = vector.shape_cast %4 : vector<1x128xi1> to vector<1x128xi1>
    %188 = vector.broadcast %187 : vector<1x128xi1> to vector<256x128xi1>
    %189 = arith.select %188, %184, %186 : vector<256x128xi1>, vector<256x128xf32>
    %190 = arith.truncf %189 : vector<256x128xf32> to vector<256x128xbf16>
    %c3_100 = arith.constant 3 : index
    %c0_101 = arith.constant 0 : index
    %c0_102 = arith.constant 0 : index
    %c0_103 = arith.constant 0 : index
    %191 = vector.load %arg5[%c3_100, %c0_101, %c0_102, %c0_103] : memref<4x1x128x128xbf16, #tpu.memory_space<vmem>>, vector<1x1x128x128xbf16>
    %192 = vector.shape_cast %191 : vector<1x1x128x128xbf16> to vector<128x128xbf16>
    %cst_104 = arith.constant dense<0.000000e+00> : vector<256x128xf32>
    %193 = tpu.matmul %190, %192, %cst_104 {dimension_numbers = #tpu.dot_dimension_numbers<[1], [0], [0], [1], [0, 0, 1, 1], [], []>} : vector<256x128xbf16>, vector<128x128xbf16>, vector<256x128xf32> -> vector<256x128xf32>
    %c3_105 = arith.constant 3 : index
    %c0_106 = arith.constant 0 : index
    %c0_107 = arith.constant 0 : index
    %c0_108 = arith.constant 0 : index
    %194 = vector.load %arg6[%c3_105, %c0_106, %c0_107, %c0_108] : memref<4x1x1x128xf32, #tpu.memory_space<vmem>>, vector<1x1x1x128xf32>
    %195 = vector.shape_cast %194 : vector<1x1x1x128xf32> to vector<1x128xf32>
    %196 = vector.broadcast %195 : vector<1x128xf32> to vector<256x128xf32>
    %197 = arith.addf %193, %196 : vector<256x128xf32>
    %198 = math.tanh %197 : vector<256x128xf32>
    %cst_109 = arith.constant 0.000000e+00 : f32
    %199 = vector.broadcast %cst_109 : f32 to vector<256x128xf32>
    %200 = arith.maximumf %197, %199 : vector<256x128xf32>
    %201 = vector.shape_cast %4 : vector<1x128xi1> to vector<1x128xi1>
    %202 = vector.broadcast %201 : vector<1x128xi1> to vector<256x128xi1>
    %203 = arith.select %202, %198, %200 : vector<256x128xi1>, vector<256x128xf32>
    %204 = arith.truncf %203 : vector<256x128xf32> to vector<256x128xbf16>
    %c3_110 = arith.constant 3 : index
    %c0_111 = arith.constant 0 : index
    %c0_112 = arith.constant 0 : index
    %205 = vector.load %arg7[%c3_110, %c0_111, %c0_112] : memref<4x128x256xbf16, #tpu.memory_space<vmem>>, vector<1x128x256xbf16>
    %206 = vector.shape_cast %205 : vector<1x128x256xbf16> to vector<128x256xbf16>
    %cst_113 = arith.constant dense<0.000000e+00> : vector<256x256xf32>
    %207 = tpu.matmul %204, %206, %cst_113 {dimension_numbers = #tpu.dot_dimension_numbers<[1], [0], [0], [1], [0, 0, 1, 1], [], []>} : vector<256x128xbf16>, vector<128x256xbf16>, vector<256x256xf32> -> vector<256x256xf32>
    %c3_114 = arith.constant 3 : index
    %c0_115 = arith.constant 0 : index
    %c0_116 = arith.constant 0 : index
    %208 = vector.load %arg8[%c3_114, %c0_115, %c0_116] : memref<4x1x256xf32, #tpu.memory_space<vmem>>, vector<1x1x256xf32>
    %209 = vector.shape_cast %208 : vector<1x1x256xf32> to vector<1x256xf32>
    %210 = vector.broadcast %209 : vector<1x256xf32> to vector<256x256xf32>
    %211 = arith.addf %207, %210 : vector<256x256xf32>
    %212 = vector.extract_strided_slice %211 {offsets = [0, 0], sizes = [256, 128], strides = [1, 1]} : vector<256x256xf32> to vector<256x128xf32>
    %213 = vector.extract_strided_slice %211 {offsets = [0, 128], sizes = [256, 128], strides = [1, 1]} : vector<256x256xf32> to vector<256x128xf32>
    %214 = arith.subf %166, %213 : vector<256x128xf32>
    %215 = vector.broadcast %173 : vector<1x128xf32> to vector<256x128xf32>
    %216 = arith.mulf %215, %214 : vector<256x128xf32>
    %cst_117 = arith.constant 0.000000e+00 : f32
    %217 = vector.broadcast %cst_117 : f32 to vector<256x128xf32>
    %218 = arith.subf %217, %212 : vector<256x128xf32>
    %219 = math.exp %218 : vector<256x128xf32>
    %220 = arith.mulf %216, %219 : vector<256x128xf32>
    %221 = arith.addf %175, %220 : vector<256x128xf32>
    %222 = vector.broadcast %173 : vector<1x128xf32> to vector<256x128xf32>
    %223 = arith.mulf %222, %212 : vector<256x128xf32>
    %224 = arith.subf %169, %223 : vector<256x128xf32>
    %c0_118 = arith.constant 0 : index
    %c0_119 = arith.constant 0 : index
    %225 = vector.load %arg9[%c0_118, %c0_119] : memref<256x256xf32, #tpu.memory_space<vmem>>, vector<256x128xf32>
    tpu.vector_store %arg9[%c0_118, %c0_119], %221 {strides = array<i32>} : memref<256x256xf32, #tpu.memory_space<vmem>>, vector<256x128xf32>,
    %c0_120 = arith.constant 0 : index
    %c128 = arith.constant 128 : index
    %226 = vector.load %arg9[%c0_120, %c128] : memref<256x256xf32, #tpu.memory_space<vmem>>, vector<256x128xf32>
    tpu.vector_store %arg9[%c0_120, %c128], %224 {strides = array<i32>} : memref<256x256xf32, #tpu.memory_space<vmem>>, vector<256x128xf32>,
    return
  }
  func.func @transform_0(%arg0: i32) -> (i32, i32) {
    %c0_i32 = arith.constant 0 : i32
    %c0_i32_0 = arith.constant 0 : i32
    return %arg0, %c0_i32 : i32, i32
  }
  func.func @transform_1(%arg0: i32) -> (i32, i32, i32) {
    %c0_i32 = arith.constant 0 : i32
    %c0_i32_0 = arith.constant 0 : i32
    %c0_i32_1 = arith.constant 0 : i32
    %c0_i32_2 = arith.constant 0 : i32
    return %c0_i32, %c0_i32_0, %c0_i32_1 : i32, i32, i32
  }
  func.func @transform_2(%arg0: i32) -> (i32, i32, i32) {
    %c0_i32 = arith.constant 0 : i32
    %c0_i32_0 = arith.constant 0 : i32
    %c0_i32_1 = arith.constant 0 : i32
    %c0_i32_2 = arith.constant 0 : i32
    return %c0_i32, %c0_i32_0, %c0_i32_1 : i32, i32, i32
  }
  func.func @transform_3(%arg0: i32) -> (i32, i32, i32) {
    %c0_i32 = arith.constant 0 : i32
    %c0_i32_0 = arith.constant 0 : i32
    %c0_i32_1 = arith.constant 0 : i32
    %c0_i32_2 = arith.constant 0 : i32
    return %c0_i32, %c0_i32_0, %c0_i32_1 : i32, i32, i32
  }
  func.func @transform_4(%arg0: i32) -> (i32, i32, i32, i32) {
    %c0_i32 = arith.constant 0 : i32
    %c0_i32_0 = arith.constant 0 : i32
    %c0_i32_1 = arith.constant 0 : i32
    %c0_i32_2 = arith.constant 0 : i32
    %c0_i32_3 = arith.constant 0 : i32
    return %c0_i32, %c0_i32_0, %c0_i32_1, %c0_i32_2 : i32, i32, i32, i32
  }
  func.func @transform_5(%arg0: i32) -> (i32, i32, i32, i32) {
    %c0_i32 = arith.constant 0 : i32
    %c0_i32_0 = arith.constant 0 : i32
    %c0_i32_1 = arith.constant 0 : i32
    %c0_i32_2 = arith.constant 0 : i32
    %c0_i32_3 = arith.constant 0 : i32
    return %c0_i32, %c0_i32_0, %c0_i32_1, %c0_i32_2 : i32, i32, i32, i32
  }
  func.func @transform_6(%arg0: i32) -> (i32, i32, i32) {
    %c0_i32 = arith.constant 0 : i32
    %c0_i32_0 = arith.constant 0 : i32
    %c0_i32_1 = arith.constant 0 : i32
    %c0_i32_2 = arith.constant 0 : i32
    return %c0_i32, %c0_i32_0, %c0_i32_1 : i32, i32, i32
  }
  func.func @transform_7(%arg0: i32) -> (i32, i32, i32) {
    %c0_i32 = arith.constant 0 : i32
    %c0_i32_0 = arith.constant 0 : i32
    %c0_i32_1 = arith.constant 0 : i32
    %c0_i32_2 = arith.constant 0 : i32
    return %c0_i32, %c0_i32_0, %c0_i32_1 : i32, i32, i32
  }
  func.func @transform_8(%arg0: i32) -> (i32, i32) {
    %c0_i32 = arith.constant 0 : i32
    %c0_i32_0 = arith.constant 0 : i32
    return %arg0, %c0_i32 : i32, i32
  }
}

</mosaic_0001>

<llo_original>
// kernel: tpu_custom_call.1
$region0: #{tpu_custom_call.1}
  #allocation0 [shape = 'u32[]', space=smem, size = 0x4, offset = 0x4, fixed_abs, tag = 'smem constant byte address 0x4 - core index']
  #allocation1 [shape = 'u32[72,128]{1,0:T(1,128)}', space=vmem, size = 0x9000, scoped, tag = 'internal scratch']
  %s0 = inlined_call_operand.hbm [shape: f32[512,128], index: 0, kind: input, shape index: {}]
  %s1 = inlined_call_operand.hbm [shape: f32[4,1,128], index: 1, kind: input, shape index: {}]
  %s2 = inlined_call_operand.hbm [shape: bf16[4,128,128], index: 2, kind: input, shape index: {}]
  %s3 = inlined_call_operand.hbm [shape: f32[4,1,128], index: 3, kind: input, shape index: {}]
  %s4 = inlined_call_operand.hbm [shape: bf16[4,1,128,128], index: 4, kind: input, shape index: {}]
  %s5 = inlined_call_operand.vmem [shape: f32[4,1,1,128], index: 5, kind: input, shape index: {}]
  %s6 = inlined_call_operand.hbm [shape: bf16[4,128,256], index: 6, kind: input, shape index: {}]
  %s7 = inlined_call_operand.hbm [shape: f32[4,1,256], index: 7, kind: input, shape index: {}]
  %s8 = inlined_call_operand.hbm [shape: f32[512,256], index: 8, kind: output, shape index: {}]
  %s9 = sld [smem:[#allocation0]]
  $region93: #{tpu_custom_call.1} parent=0
    _
  %s11 = ssub.s32 1, %s9
  %s12 = scalar_select 0, %s11, %s9
  $region1: #{tpu_custom_call.1} parent=0
    #allocation2 [shape = 'u8[262144]{0}', space=vmem, size = 0x40000, scoped, tag = 'input window, operand 0']
    #allocation3 [shape = 's32[2]{0}', space=sflag, size = 0x8, scoped, tag = 'scoped memory for tpu_custom_call.1']
    #allocation4 [shape = 's32[2]{0}', space=sflag, size = 0x8, scoped, tag = 'scoped memory for tpu_custom_call.1']
    #allocation5 [shape = 'u8[2048]{0}', space=vmem, size = 0x800, scoped, tag = 'input window, operand 1, single buffered']
    #allocation6 [shape = 's32[1]{0}', space=sflag, size = 0x4, scoped, tag = 'scoped memory for tpu_custom_call.1']
    #allocation7 [shape = 'u8[131072]{0}', space=vmem, size = 0x20000, scoped, tag = 'input window, operand 2, single buffered']
    #allocation8 [shape = 'u8[2048]{0}', space=vmem, size = 0x800, scoped, tag = 'input window, operand 3, single buffered']
    #allocation9 [shape = 's32[1]{0}', space=sflag, size = 0x4, scoped, tag = 'scoped memory for tpu_custom_call.1']
    #allocation10 [shape = 'u8[131072]{0}', space=vmem, size = 0x20000, scoped, tag = 'input window, operand 4, single buffered']
    #allocation11 [shape = 'u8[262144]{0}', space=vmem, size = 0x40000, scoped, tag = 'input window, operand 6, single buffered']
    #allocation12 [shape = 's32[1]{0}', space=sflag, size = 0x4, scoped, tag = 'scoped memory for tpu_custom_call.1']
    #allocation13 [shape = 'u8[4096]{0}', space=vmem, size = 0x1000, scoped, tag = 'input window, operand 7, single buffered']
    #allocation14 [shape = 'u8[524288]{0}', space=vmem, size = 0x80000, scoped, tag = 'output window, operand 0']
    %13 = vsyncpa [#allocation3], 0
    %s14 = scalar_lea.sflag [#allocation3], 1
    %15 = vsyncpa %s14, 0
    %16 = vsyncpa [#allocation6], 0
    %17 = vsyncpa [#allocation9], 0
    %18 = vsyncpa [#allocation12], 0
    %19 = vsyncpa [#allocation4], 0
    %s20 = scalar_lea.sflag [#allocation4], 1
    %21 = vsyncpa %s20, 0
    loop: start=0, step=1, limit=4
    $region2: #{tpu_custom_call.1} parent=1 // loop_pre_header
      _
    $region3: #{tpu_custom_call.1} parent=1 // loop_header
      %s23 = sphi 0, %s27
      %p24 = scmp.ge.s32.totalorder %s23, 4
      %s33 = sphi 0, %s35
      %s36 = sphi 0, %s33
      %s37 = sphi 0, %s36
      %s53 = sphi 0, %s37
      %s57 = sphi 0, %s57
      %s59 = sphi 0, %s57
      %s60 = sphi 0, %s59
      %s74 = sphi 0, %s60
      %s78 = sphi 0, %s78
      %s80 = sphi 0, %s78
      %s81 = sphi 0, %s80
      %s95 = sphi 0, %s81
      %s99 = sphi 0, %s99
      %s101 = sphi 0, %s99
      %s102 = sphi 0, %s101
      %s116 = sphi 0, %s102
      %s120 = sphi 0, %s120
      %s122 = sphi 0, %s120
      %s123 = sphi 0, %s122
      %s137 = sphi 0, %s123
      %s141 = sphi 0, %s141
      %s143 = sphi 0, %s141
      %s144 = sphi 0, %s143
      %s158 = sphi 0, %s144
      %s162 = sphi 0, %s162
      %s164 = sphi 0, %s162
      %s165 = sphi 0, %s164
      %s179 = sphi 0, %s165
      %s183 = sphi 0, %s183
      %s185 = sphi 0, %s183
      %s186 = sphi 0, %s185
      %s200 = sphi 0, %s186
      %s206 = sphi 0, %s208
      %s209 = sphi 0, %s206
      %s210 = sphi 0, %s209
      %s226 = sphi 0, %s210
    $region4: #{tpu_custom_call.1} parent=1 // loop_header_branch
      %26 = sbr.rel (%p24) target = $region8
    $region5: #{tpu_custom_call.1} parent=1 // loop_body
      %s28 = ssub.s32 %s23, 1
      %s29 = ssub.s32 %s23, 2
      %s30 = sadd.s32 %s23, 1
      %s31 = ssub.s32 %s23, %s30
      %p32 = scmp.eq.s32.totalorder %s31, 0
      %s34 = sadd.s32 %s33, 1
      %s35 = scalar_select %p32, %s33, %s34
      %p38 = pneg %p32
      %p39 = scmp.eq.s32.totalorder %s23, 1
      %p40 = por %p38, %p39
      %p41 = scmp.ne.s32.totalorder %s33, %s36
      %p42 = scmp.eq.s32.totalorder %s23, 0
      %p43 = por %p41, %p42
      %p44 = scmp.ne.s32.totalorder %s33, %s36
      %p45 = scmp.eq.s32.totalorder %s28, 1
      %p46 = por %p44, %p45
      %p47 = scmp.ne.s32.totalorder %s36, %s37
      %p48 = scmp.eq.s32.totalorder %s28, 0
      %p49 = por %p47, %p48
      %p50 = scmp.ne.s32.totalorder %s36, %s37
      %p51 = scmp.eq.s32.totalorder %s29, 1
      %p52 = por %p50, %p51
      %p54 = scmp.ne.s32.totalorder %s37, %s53
      %p55 = scmp.eq.s32.totalorder %s29, 0
      %p56 = por %p54, %p55
      %s58 = sadd.s32 %s57, 1
      %p61 = scmp.eq.s32.totalorder %s23, 1
      %p62 = scmp.ne.s32.totalorder %s57, %s59
      %p63 = scmp.eq.s32.totalorder %s23, 0
      %p64 = por %p62, %p63
      %p65 = scmp.ne.s32.totalorder %s57, %s59
      %p66 = scmp.eq.s32.totalorder %s28, 1
      %p67 = por %p65, %p66
      %p68 = scmp.ne.s32.totalorder %s59, %s60
      %p69 = scmp.eq.s32.totalorder %s28, 0
      %p70 = por %p68, %p69
      %p71 = scmp.ne.s32.totalorder %s59, %s60
      %p72 = scmp.eq.s32.totalorder %s29, 1
      %p73 = por %p71, %p72
      %p75 = scmp.ne.s32.totalorder %s60, %s74
      %p76 = scmp.eq.s32.totalorder %s29, 0
      %p77 = por %p75, %p76
      %s79 = sadd.s32 %s78, 1
      %p82 = scmp.eq.s32.totalorder %s23, 1
      %p83 = scmp.ne.s32.totalorder %s78, %s80
      %p84 = scmp.eq.s32.totalorder %s23, 0
      %p85 = por %p83, %p84
      %p86 = scmp.ne.s32.totalorder %s78, %s80
      %p87 = scmp.eq.s32.totalorder %s28, 1
      %p88 = por %p86, %p87
      %p89 = scmp.ne.s32.totalorder %s80, %s81
      %p90 = scmp.eq.s32.totalorder %s28, 0
      %p91 = por %p89, %p90
      %p92 = scmp.ne.s32.totalorder %s80, %s81
      %p93 = scmp.eq.s32.totalorder %s29, 1
      %p94 = por %p92, %p93
      %p96 = scmp.ne.s32.totalorder %s81, %s95
      %p97 = scmp.eq.s32.totalorder %s29, 0
      %p98 = por %p96, %p97
      %s100 = sadd.s32 %s99, 1
      %p103 = scmp.eq.s32.totalorder %s23, 1
      %p104 = scmp.ne.s32.totalorder %s99, %s101
      %p105 = scmp.eq.s32.totalorder %s23, 0
      %p106 = por %p104, %p105
      %p107 = scmp.ne.s32.totalorder %s99, %s101
      %p108 = scmp.eq.s32.totalorder %s28, 1
      %p109 = por %p107, %p108
      %p110 = scmp.ne.s32.totalorder %s101, %s102
      %p111 = scmp.eq.s32.totalorder %s28, 0
      %p112 = por %p110, %p111
      %p113 = scmp.ne.s32.totalorder %s101, %s102
      %p114 = scmp.eq.s32.totalorder %s29, 1
      %p115 = por %p113, %p114
      %p117 = scmp.ne.s32.totalorder %s102, %s116
      %p118 = scmp.eq.s32.totalorder %s29, 0
      %p119 = por %p117, %p118
      %s121 = sadd.s32 %s120, 1
      %p124 = scmp.eq.s32.totalorder %s23, 1
      %p125 = scmp.ne.s32.totalorder %s120, %s122
      %p126 = scmp.eq.s32.totalorder %s23, 0
      %p127 = por %p125, %p126
      %p128 = scmp.ne.s32.totalorder %s120, %s122
      %p129 = scmp.eq.s32.totalorder %s28, 1
      %p130 = por %p128, %p129
      %p131 = scmp.ne.s32.totalorder %s122, %s123
      %p132 = scmp.eq.s32.totalorder %s28, 0
      %p133 = por %p131, %p132
      %p134 = scmp.ne.s32.totalorder %s122, %s123
      %p135 = scmp.eq.s32.totalorder %s29, 1
      %p136 = por %p134, %p135
      %p138 = scmp.ne.s32.totalorder %s123, %s137
      %p139 = scmp.eq.s32.totalorder %s29, 0
      %p140 = por %p138, %p139
      %s142 = sadd.s32 %s141, 1
      %p145 = scmp.eq.s32.totalorder %s23, 1
      %p146 = scmp.ne.s32.totalorder %s141, %s143
      %p147 = scmp.eq.s32.totalorder %s23, 0
      %p148 = por %p146, %p147
      %p149 = scmp.ne.s32.totalorder %s141, %s143
      %p150 = scmp.eq.s32.totalorder %s28, 1
      %p151 = por %p149, %p150
      %p152 = scmp.ne.s32.totalorder %s143, %s144
      %p153 = scmp.eq.s32.totalorder %s28, 0
      %p154 = por %p152, %p153
      %p155 = scmp.ne.s32.totalorder %s143, %s144
      %p156 = scmp.eq.s32.totalorder %s29, 1
      %p157 = por %p155, %p156
      %p159 = scmp.ne.s32.totalorder %s144, %s158
      %p160 = scmp.eq.s32.totalorder %s29, 0
      %p161 = por %p159, %p160
      %s163 = sadd.s32 %s162, 1
      %p166 = scmp.eq.s32.totalorder %s23, 1
      %p167 = scmp.ne.s32.totalorder %s162, %s164
      %p168 = scmp.eq.s32.totalorder %s23, 0
      %p169 = por %p167, %p168
      %p170 = scmp.ne.s32.totalorder %s162, %s164
      %p171 = scmp.eq.s32.totalorder %s28, 1
      %p172 = por %p170, %p171
      %p173 = scmp.ne.s32.totalorder %s164, %s165
      %p174 = scmp.eq.s32.totalorder %s28, 0
      %p175 = por %p173, %p174
      %p176 = scmp.ne.s32.totalorder %s164, %s165
      %p177 = scmp.eq.s32.totalorder %s29, 1
      %p178 = por %p176, %p177
      %p180 = scmp.ne.s32.totalorder %s165, %s179
      %p181 = scmp.eq.s32.totalorder %s29, 0
      %p182 = por %p180, %p181
      %s184 = sadd.s32 %s183, 1
      %p187 = scmp.eq.s32.totalorder %s23, 1
      %p188 = scmp.ne.s32.totalorder %s183, %s185
      %p189 = scmp.eq.s32.totalorder %s23, 0
      %p190 = por %p188, %p189
      %p191 = scmp.ne.s32.totalorder %s183, %s185
      %p192 = scmp.eq.s32.totalorder %s28, 1
      %p193 = por %p191, %p192
      %p194 = scmp.ne.s32.totalorder %s185, %s186
      %p195 = scmp.eq.s32.totalorder %s28, 0
      %p196 = por %p194, %p195
      %p197 = scmp.ne.s32.totalorder %s185, %s186
      %p198 = scmp.eq.s32.totalorder %s29, 1
      %p199 = por %p197, %p198
      %p201 = scmp.ne.s32.totalorder %s186, %s200
      %p202 = scmp.eq.s32.totalorder %s29, 0
      %p203 = por %p201, %p202
      %s204 = ssub.s32 %s23, %s30
      %p205 = scmp.eq.s32.totalorder %s204, 0
      %s207 = sadd.s32 %s206, 1
      %s208 = scalar_select %p205, %s206, %s207
      %p211 = pneg %p205
      %p212 = scmp.eq.s32.totalorder %s23, 1
      %p213 = por %p211, %p212
      %p214 = scmp.ne.s32.totalorder %s206, %s209
      %p215 = scmp.eq.s32.totalorder %s23, 0
      %p216 = por %p214, %p215
      %p217 = scmp.ne.s32.totalorder %s206, %s209
      %p218 = scmp.eq.s32.totalorder %s28, 1
      %p219 = por %p217, %p218
      %p220 = scmp.ne.s32.totalorder %s209, %s210
      %p221 = scmp.eq.s32.totalorder %s28, 0
      %p222 = por %p220, %p221
      %p223 = scmp.ne.s32.totalorder %s209, %s210
      %p224 = scmp.eq.s32.totalorder %s29, 1
      %p225 = por %p223, %p224
      %p227 = scmp.ne.s32.totalorder %s210, %s226
      %p228 = scmp.eq.s32.totalorder %s29, 0
      %p229 = por %p227, %p228
      %p230 = scmp.le.s32.totalorder 1, %s23
      %p231 = scmp.lt.s32.totalorder %s23, 3
      %p232 = pnand %p230, %p231
      %p233 = pneg %p232
      // Predicated region
      $region9: #{tpu_custom_call.1} parent=5 // pred_check
        _
      $region10: #{tpu_custom_call.1} parent=5 // pred_check_branch
        %235 = sbr.rel (%p232) target = $region12
      $region11: #{tpu_custom_call.1} parent=5 // pred_region
        %s236 = ssub.s32 %s23, 1
        // Predicated region
        $region13: #{tpu_custom_call.1} parent=11 // pred_check
          %p237 = pneg %p70
        $region14: #{tpu_custom_call.1} parent=11 // pred_check_branch
          %239 = sbr.rel (%p237) target = $region16
        $region15: #{tpu_custom_call.1} parent=11 // pred_region
          %241 = vsyncadd [#allocation6], 0
          %s242 = sshll.u32 %s1, 4
          %s243 = int_to_ptr.hbm [resolvable:$true] %s242
          %s244 = sshll.u32 [#allocation5], 4
          %s245 = int_to_ptr.vmem [resolvable:$true] %s244
          %250 = dma.hbm_to_vmem [thread:$0]  %s243, 64, %s245, [#allocation6], 16, 16, 1
        $region16: #{tpu_custom_call.1} parent=11 // pred_fallthru
          _
        // Predicated region
        $region17: #{tpu_custom_call.1} parent=11 // pred_check
          %p251 = pneg %p91
        $region18: #{tpu_custom_call.1} parent=11 // pred_check_branch
          %253 = sbr.rel (%p251) target = $region20
        $region19: #{tpu_custom_call.1} parent=11 // pred_region
          %255 = vsyncadd [#allocation6], 0
          %s256 = sshll.u32 %s2, 4
          %s257 = int_to_ptr.hbm [resolvable:$true] %s256
          %s258 = sshll.u32 [#allocation7], 4
          %s259 = int_to_ptr.vmem [resolvable:$true] %s258
          %264 = dma.hbm_to_vmem [thread:$0]  %s257, 4096, %s259, [#allocation6], 64, 64, 4
        $region20: #{tpu_custom_call.1} parent=11 // pred_fallthru
          _
        // Predicated region
        $region21: #{tpu_custom_call.1} parent=11 // pred_check
          %p265 = pneg %p112
        $region22: #{tpu_custom_call.1} parent=11 // pred_check_branch
          %267 = sbr.rel (%p265) target = $region24
        $region23: #{tpu_custom_call.1} parent=11 // pred_region
          %269 = vsyncadd [#allocation9], 0
          %s270 = sshll.u32 %s3, 4
          %s271 = int_to_ptr.hbm [resolvable:$true] %s270
          %s272 = sshll.u32 [#allocation8], 4
          %s273 = int_to_ptr.vmem [resolvable:$true] %s272
          %278 = dma.hbm_to_vmem [thread:$0]  %s271, 64, %s273, [#allocation9], 16, 16, 1
        $region24: #{tpu_custom_call.1} parent=11 // pred_fallthru
          _
        // Predicated region
        $region25: #{tpu_custom_call.1} parent=11 // pred_check
          %p279 = pneg %p133
        $region26: #{tpu_custom_call.1} parent=11 // pred_check_branch
          %281 = sbr.rel (%p279) target = $region28
        $region27: #{tpu_custom_call.1} parent=11 // pred_region
          %283 = vsyncadd [#allocation9], 0
          %s284 = sshll.u32 %s4, 4
          %s285 = int_to_ptr.hbm [resolvable:$true] %s284
          %s286 = sshll.u32 [#allocation10], 4
          %s287 = int_to_ptr.vmem [resolvable:$true] %s286
          %292 = dma.hbm_to_vmem [thread:$0]  %s285, 4096, %s287, [#allocation9], 64, 64, 4
        $region28: #{tpu_custom_call.1} parent=11 // pred_fallthru
          _
        // Predicated region
        $region29: #{tpu_custom_call.1} parent=11 // pred_check
          %p293 = pneg %p154
        $region30: #{tpu_custom_call.1} parent=11 // pred_check_branch
          %295 = sbr.rel (%p293) target = $region32
        $region31: #{tpu_custom_call.1} parent=11 // pred_region
          _
        $region32: #{tpu_custom_call.1} parent=11 // pred_fallthru
          _
        // Predicated region
        $region33: #{tpu_custom_call.1} parent=11 // pred_check
          %p296 = pneg %p175
        $region34: #{tpu_custom_call.1} parent=11 // pred_check_branch
          %298 = sbr.rel (%p296) target = $region36
        $region35: #{tpu_custom_call.1} parent=11 // pred_region
          %300 = vsyncadd [#allocation12], 0
          %s301 = sshll.u32 %s6, 4
          %s302 = int_to_ptr.hbm [resolvable:$true] %s301
          %s303 = sshll.u32 [#allocation11], 4
          %s304 = int_to_ptr.vmem [resolvable:$true] %s303
          %309 = dma.hbm_to_vmem [thread:$0]  %s302, 8192, %s304, [#allocation12], 128, 128, 8
        $region36: #{tpu_custom_call.1} parent=11 // pred_fallthru
          _
        // Predicated region
        $region37: #{tpu_custom_call.1} parent=11 // pred_check
          %p310 = pneg %p196
        $region38: #{tpu_custom_call.1} parent=11 // pred_check_branch
          %312 = sbr.rel (%p310) target = $region40
        $region39: #{tpu_custom_call.1} parent=11 // pred_region
          %314 = vsyncadd [#allocation12], 0
          %s315 = sshll.u32 %s7, 4
          %s316 = int_to_ptr.hbm [resolvable:$true] %s315
          %s317 = sshll.u32 [#allocation13], 4
          %s318 = int_to_ptr.vmem [resolvable:$true] %s317
          %323 = dma.hbm_to_vmem [thread:$0]  %s316, 128, %s318, [#allocation12], 32, 32, 2
        $region40: #{tpu_custom_call.1} parent=11 // pred_fallthru
          _
      $region12: #{tpu_custom_call.1} parent=5 // pred_fallthru
        _
      %p324 = scmp.lt.s32.totalorder %s23, 2
      // Predicated region
      $region41: #{tpu_custom_call.1} parent=5 // pred_check
        %p325 = pneg %p324
      $region42: #{tpu_custom_call.1} parent=5 // pred_check_branch
        %327 = sbr.rel (%p325) target = $region44
      $region43: #{tpu_custom_call.1} parent=5 // pred_region
        // Predicated region
        $region45: #{tpu_custom_call.1} parent=43 // pred_check
          %p328 = pneg %p43
        $region46: #{tpu_custom_call.1} parent=43 // pred_check_branch
          %330 = sbr.rel (%p328) target = $region48
        $region47: #{tpu_custom_call.1} parent=43 // pred_region
          %s331 = sand.u32 %s33, 1
          %s332 = scalar_lea.sflag [#allocation3], %s331
          %s333 = sand.u32 %s33, 1
          %s334 = smul.addr %s333, 256
          %s335 = scalar_lea.vmem [#allocation2], %s334
          %s336 = smul.u32 32, %s23
          %338 = vsyncadd %s332, 0
          %s339 = smul.addr %s336, 8
          %s340 = scalar_lea.hbm %s0, %s339
          %s341 = sshll.u32 %s340, 4
          %s342 = int_to_ptr.hbm [resolvable:$true] %s341
          %s343 = sshll.u32 %s335, 4
          %s344 = int_to_ptr.vmem [resolvable:$true] %s343
          %349 = dma.hbm_to_vmem [thread:$0]  %s342, 4096, %s344, %s332, 128, 128, 8
        $region48: #{tpu_custom_call.1} parent=43 // pred_fallthru
          _
      $region44: #{tpu_custom_call.1} parent=5 // pred_fallthru
        _
      %p350 = scmp.le.s32.totalorder 1, %s23
      %p351 = scmp.lt.s32.totalorder %s23, 3
      %p352 = pnand %p350, %p351
      %p353 = pneg %p352
      // Predicated region
      $region49: #{tpu_custom_call.1} parent=5 // pred_check
        _
      $region50: #{tpu_custom_call.1} parent=5 // pred_check_branch
        %355 = sbr.rel (%p352) target = $region52
      $region51: #{tpu_custom_call.1} parent=5 // pred_region
        %s356 = ssub.s32 %s23, 1
        %s357 = sand.u32 %s36, 1
        %s358 = scalar_lea.sflag [#allocation3], %s357
        %s359 = sand.u32 %s36, 1
        %s360 = smul.addr %s359, 256
        %s361 = scalar_lea.vmem [#allocation2], %s360
        // Predicated region
        $region53: #{tpu_custom_call.1} parent=51 // pred_check
          %p362 = pneg %p49
        $region54: #{tpu_custom_call.1} parent=51 // pred_check_branch
          %364 = sbr.rel (%p362) target = $region56
        $region55: #{tpu_custom_call.1} parent=51 // pred_region
          %366 = dma.done %s358, 4096
        $region56: #{tpu_custom_call.1} parent=51 // pred_fallthru
          _
        // Predicated region
        $region57: #{tpu_custom_call.1} parent=51 // pred_check
          %p367 = pneg %p70
        $region58: #{tpu_custom_call.1} parent=51 // pred_check_branch
          %369 = sbr.rel (%p367) target = $region60
        $region59: #{tpu_custom_call.1} parent=51 // pred_region
          %371 = dma.done [#allocation6], 64
        $region60: #{tpu_custom_call.1} parent=51 // pred_fallthru
          _
        // Predicated region
        $region61: #{tpu_custom_call.1} parent=51 // pred_check
          %p372 = pneg %p91
        $region62: #{tpu_custom_call.1} parent=51 // pred_check_branch
          %374 = sbr.rel (%p372) target = $region64
        $region63: #{tpu_custom_call.1} parent=51 // pred_region
          %376 = dma.done [#allocation6], 4096
        $region64: #{tpu_custom_call.1} parent=51 // pred_fallthru
          _
        // Predicated region
        $region65: #{tpu_custom_call.1} parent=51 // pred_check
          %p377 = pneg %p112
        $region66: #{tpu_custom_call.1} parent=51 // pred_check_branch
          %379 = sbr.rel (%p377) target = $region68
        $region67: #{tpu_custom_call.1} parent=51 // pred_region
          %381 = dma.done [#allocation9], 64
        $region68: #{tpu_custom_call.1} parent=51 // pred_fallthru
          _
        // Predicated region
        $region69: #{tpu_custom_call.1} parent=51 // pred_check
          %p382 = pneg %p133
        $region70: #{tpu_custom_call.1} parent=51 // pred_check_branch
          %384 = sbr.rel (%p382) target = $region72
        $region71: #{tpu_custom_call.1} parent=51 // pred_region
          %386 = dma.done [#allocation9], 4096
        $region72: #{tpu_custom_call.1} parent=51 // pred_fallthru
          _
        // Predicated region
        $region73: #{tpu_custom_call.1} parent=51 // pred_check
          %p387 = pneg %p175
        $region74: #{tpu_custom_call.1} parent=51 // pred_check_branch
          %389 = sbr.rel (%p387) target = $region76
        $region75: #{tpu_custom_call.1} parent=51 // pred_region
          %391 = dma.done [#allocation12], 8192
        $region76: #{tpu_custom_call.1} parent=51 // pred_fallthru
          _
        // Predicated region
        $region77: #{tpu_custom_call.1} parent=51 // pred_check
          %p392 = pneg %p196
        $region78: #{tpu_custom_call.1} parent=51 // pred_check_branch
          %394 = sbr.rel (%p392) target = $region80
        $region79: #{tpu_custom_call.1} parent=51 // pred_region
          %396 = dma.done [#allocation12], 128
        $region80: #{tpu_custom_call.1} parent=51 // pred_fallthru
          _
        %s397 = sand.u32 %s36, 1
        %s398 = scalar_lea.sflag [#allocation3], %s397
        %s399 = sand.u32 %s36, 1
        %s400 = smul.addr %s399, 256
        %s401 = scalar_lea.vmem [#allocation2], %s400
        %p402 = pneg %p49
        %p403 = pneg %p46
        %p404 = pneg %p70
        %p405 = pneg %p67
        %p406 = pneg %p91
        %p407 = pneg %p88
        %p408 = pneg %p112
        %p409 = pneg %p109
        %p410 = pneg %p133
        %p411 = pneg %p130
        %p412 = pneg %p154
        %p413 = pneg %p151
        %p414 = pneg %p175
        %p415 = pneg %p172
        %p416 = pneg %p196
        %p417 = pneg %p193
        %p418 = pneg %p222
        %p419 = pneg %p219
        %s420 = sand.u32 %s209, 1
        %s421 = scalar_lea.sflag [#allocation4], %s420
        %s422 = sand.u32 %s209, 1
        %s423 = smul.addr %s422, 512
        %s424 = scalar_lea.vmem [#allocation14], %s423
        %s425 = smul.u32 32, %s28
        %s426 = smul.u32 32, %s28
        %v427 = vld [vmem:[%s361] sm:$0xff]
        %v428 = vld [vmem:[%s361 + $0x8] sm:$0xff]
        %v429 = vld [vmem:[%s361 + $0x10] sm:$0xff]
        %v430 = vld [vmem:[%s361 + $0x18] sm:$0xff]
        %v431 = vld [vmem:[%s361 + $0x20] sm:$0xff]
        %v432 = vld [vmem:[%s361 + $0x28] sm:$0xff]
        %v433 = vld [vmem:[%s361 + $0x30] sm:$0xff]
        %v434 = vld [vmem:[%s361 + $0x38] sm:$0xff]
        %v435 = vld [vmem:[%s361 + $0x40] sm:$0xff]
        %v436 = vld [vmem:[%s361 + $0x48] sm:$0xff]
        %v437 = vld [vmem:[%s361 + $0x50] sm:$0xff]
        %v438 = vld [vmem:[%s361 + $0x58] sm:$0xff]
        %v439 = vld [vmem:[%s361 + $0x60] sm:$0xff]
        %v440 = vld [vmem:[%s361 + $0x68] sm:$0xff]
        %v441 = vld [vmem:[%s361 + $0x70] sm:$0xff]
        %v442 = vld [vmem:[%s361 + $0x78] sm:$0xff]
        %v443 = vld [vmem:[%s361 + $0x80] sm:$0xff]
        %v444 = vld [vmem:[%s361 + $0x88] sm:$0xff]
        %v445 = vld [vmem:[%s361 + $0x90] sm:$0xff]
        %v446 = vld [vmem:[%s361 + $0x98] sm:$0xff]
        %v447 = vld [vmem:[%s361 + $0xa0] sm:$0xff]
        %v448 = vld [vmem:[%s361 + $0xa8] sm:$0xff]
        %v449 = vld [vmem:[%s361 + $0xb0] sm:$0xff]
        %v450 = vld [vmem:[%s361 + $0xb8] sm:$0xff]
        %v451 = vld [vmem:[%s361 + $0xc0] sm:$0xff]
        %v452 = vld [vmem:[%s361 + $0xc8] sm:$0xff]
        %v453 = vld [vmem:[%s361 + $0xd0] sm:$0xff]
        %v454 = vld [vmem:[%s361 + $0xd8] sm:$0xff]
        %v455 = vld [vmem:[%s361 + $0xe0] sm:$0xff]
        %v456 = vld [vmem:[%s361 + $0xe8] sm:$0xff]
        %v457 = vld [vmem:[%s361 + $0xf0] sm:$0xff]
        %v458 = vld [vmem:[%s361 + $0xf8] sm:$0xff]
        %v459 = vlaneseq
        %v460 = vand.u32 %v459, 127
        %vm461 = vcmp.lt.s32.totalorder %v460, 64
        %v462 = vld [vmem:[#allocation5] sm:$0x1]
        %v463 = vsub.f32 1.0, %v462
        %v465 = vperm.slane %v462, 0
        %v467 = vmul.f32 %v427, %v465
        %v468 = vmul.f32 %v428, %v465
        %v469 = vmul.f32 %v429, %v465
        %v470 = vmul.f32 %v430, %v465
        %v471 = vmul.f32 %v431, %v465
        %v472 = vmul.f32 %v432, %v465
        %v473 = vmul.f32 %v433, %v465
        %v474 = vmul.f32 %v434, %v465
        %v475 = vmul.f32 %v435, %v465
        %v476 = vmul.f32 %v436, %v465
        %v477 = vmul.f32 %v437, %v465
        %v478 = vmul.f32 %v438, %v465
        %v479 = vmul.f32 %v439, %v465
        %v480 = vmul.f32 %v440, %v465
        %v481 = vmul.f32 %v441, %v465
        %v482 = vmul.f32 %v442, %v465
        %v483 = vmul.f32 %v443, %v465
        %v484 = vmul.f32 %v444, %v465
        %v485 = vmul.f32 %v445, %v465
        %v486 = vmul.f32 %v446, %v465
        %v487 = vmul.f32 %v447, %v465
        %v488 = vmul.f32 %v448, %v465
        %v489 = vmul.f32 %v449, %v465
        %v490 = vmul.f32 %v450, %v465
        %v491 = vmul.f32 %v451, %v465
        %v492 = vmul.f32 %v452, %v465
        %v493 = vmul.f32 %v453, %v465
        %v494 = vmul.f32 %v454, %v465
        %v495 = vmul.f32 %v455, %v465
        %v496 = vmul.f32 %v456, %v465
        %v497 = vmul.f32 %v457, %v465
        %v498 = vmul.f32 %v458, %v465
        %v499 = vpack.c.bf16 %v468, %v467
        %v500 = vpack.c.bf16 %v470, %v469
        %v501 = vpack.c.bf16 %v472, %v471
        %v502 = vpack.c.bf16 %v474, %v473
        %v503 = vpack.c.bf16 %v476, %v475
        %v504 = vpack.c.bf16 %v478, %v477
        %v505 = vpack.c.bf16 %v480, %v479
        %v506 = vpack.c.bf16 %v482, %v481
        %v507 = vpack.c.bf16 %v484, %v483
        %v508 = vpack.c.bf16 %v486, %v485
        %v509 = vpack.c.bf16 %v488, %v487
        %v510 = vpack.c.bf16 %v490, %v489
        %v511 = vpack.c.bf16 %v492, %v491
        %v512 = vpack.c.bf16 %v494, %v493
        %v513 = vpack.c.bf16 %v496, %v495
        %v514 = vpack.c.bf16 %v498, %v497
        %v515 = vld [vmem:[#allocation7] sm:$0xf]
        %v516 = vld [vmem:[#allocation7 + $0x4] sm:$0xf]
        %v517 = vld [vmem:[#allocation7 + $0x8] sm:$0xf]
        %v518 = vld [vmem:[#allocation7 + $0xc] sm:$0xf]
        %v519 = vld [vmem:[#allocation7 + $0x10] sm:$0xf]
        %v520 = vld [vmem:[#allocation7 + $0x14] sm:$0xf]
        %v521 = vld [vmem:[#allocation7 + $0x18] sm:$0xf]
        %v522 = vld [vmem:[#allocation7 + $0x1c] sm:$0xf]
        %v523 = vld [vmem:[#allocation7 + $0x20] sm:$0xf]
        %v524 = vld [vmem:[#allocation7 + $0x24] sm:$0xf]
        %v525 = vld [vmem:[#allocation7 + $0x28] sm:$0xf]
        %v526 = vld [vmem:[#allocation7 + $0x2c] sm:$0xf]
        %v527 = vld [vmem:[#allocation7 + $0x30] sm:$0xf]
        %v528 = vld [vmem:[#allocation7 + $0x34] sm:$0xf]
        %v529 = vld [vmem:[#allocation7 + $0x38] sm:$0xf]
        %v530 = vld [vmem:[#allocation7 + $0x3c] sm:$0xf]
        %v531 = vld [vmem:[#allocation8] sm:$0x1]
        %v533 = vperm.slane %v531, 0
        %v551 = vunpack.c.l.b16 %v515
        %v552 = vunpack.c.l.b16 %v516
        %v553 = vunpack.c.l.b16 %v517
        %v554 = vunpack.c.l.b16 %v518
        %v555 = vunpack.c.l.b16 %v519
        %v556 = vunpack.c.l.b16 %v520
        %v557 = vunpack.c.l.b16 %v521
        %v558 = vunpack.c.l.b16 %v522
        %v559 = vunpack.c.l.b16 %v523
        %v560 = vunpack.c.l.b16 %v524
        %v561 = vunpack.c.l.b16 %v525
        %v562 = vunpack.c.l.b16 %v526
        %v563 = vunpack.c.l.b16 %v527
        %v564 = vunpack.c.l.b16 %v528
        %v565 = vunpack.c.l.b16 %v529
        %v566 = vunpack.c.l.b16 %v530
        %v567 = vpack.c.b16 %v552, %v551
        %v568 = vpack.c.b16 %v554, %v553
        %v569 = vpack.c.b16 %v556, %v555
        %v570 = vpack.c.b16 %v558, %v557
        %v571 = vpack.c.b16 %v560, %v559
        %v572 = vpack.c.b16 %v562, %v561
        %v573 = vpack.c.b16 %v564, %v563
        %v574 = vpack.c.b16 %v566, %v565
        %583 = vmatpush.bf16.msra.mxu0 %v574
        %584 = vmatpush.bf16.msra.mxu0 %v573
        %585 = vmatpush.bf16.msra.mxu0 %v572
        %586 = vmatpush.bf16.msra.mxu0 %v571
        %587 = vmatpush.bf16.msra.mxu0 %v570
        %588 = vmatpush.bf16.msra.mxu0 %v569
        %589 = vmatpush.bf16.msra.mxu0 %v568
        %590 = vmatpush.bf16.msra.mxu0 %v567
        %591 = vmatmul.bf16.gmra.mxu0 %v499
        %v592 = vpop.f32.mrf.mxu0
        %v593 = vadd.f32 %v533, %v592
        %v594 = vpop.f32.mrf.mxu0
        %v595 = vadd.f32 %v533, %v594
        %596 = vmatmul.bf16.gmra.mxu0 %v500
        %v597 = vpop.f32.mrf.mxu0
        %v598 = vadd.f32 %v533, %v597
        %v599 = vpop.f32.mrf.mxu0
        %v600 = vadd.f32 %v533, %v599
        %601 = vmatmul.bf16.gmra.mxu0 %v501
        %v602 = vpop.f32.mrf.mxu0
        %v603 = vadd.f32 %v533, %v602
        %v604 = vpop.f32.mrf.mxu0
        %v605 = vadd.f32 %v533, %v604
        %606 = vmatmul.bf16.gmra.mxu0 %v502
        %v607 = vpop.f32.mrf.mxu0
        %v608 = vadd.f32 %v533, %v607
        %v609 = vpop.f32.mrf.mxu0
        %v610 = vadd.f32 %v533, %v609
        %611 = vmatmul.bf16.gmra.mxu0 %v503
        %v612 = vpop.f32.mrf.mxu0
        %v613 = vadd.f32 %v533, %v612
        %v614 = vpop.f32.mrf.mxu0
        %v615 = vadd.f32 %v533, %v614
        %616 = vmatmul.bf16.gmra.mxu0 %v504
        %v617 = vpop.f32.mrf.mxu0
        %v618 = vadd.f32 %v533, %v617
        %v619 = vpop.f32.mrf.mxu0
        %v620 = vadd.f32 %v533, %v619
        %621 = vmatmul.bf16.gmra.mxu0 %v505
        %v622 = vpop.f32.mrf.mxu0
        %v623 = vadd.f32 %v533, %v622
        %v624 = vpop.f32.mrf.mxu0
        %v625 = vadd.f32 %v533, %v624
        %626 = vmatmul.bf16.gmra.mxu0 %v506
        %v627 = vpop.f32.mrf.mxu0
        %v628 = vadd.f32 %v533, %v627
        %v629 = vpop.f32.mrf.mxu0
        %v630 = vadd.f32 %v533, %v629
        %631 = vmatmul.bf16.gmra.mxu0 %v507
        %v632 = vpop.f32.mrf.mxu0
        %v633 = vadd.f32 %v533, %v632
        %v634 = vpop.f32.mrf.mxu0
        %v635 = vadd.f32 %v533, %v634
        %636 = vmatmul.bf16.gmra.mxu0 %v508
        %v637 = vpop.f32.mrf.mxu0
        %v638 = vadd.f32 %v533, %v637
        %v639 = vpop.f32.mrf.mxu0
        %v640 = vadd.f32 %v533, %v639
        %641 = vmatmul.bf16.gmra.mxu0 %v509
        %v642 = vpop.f32.mrf.mxu0
        %v643 = vadd.f32 %v533, %v642
        %v644 = vpop.f32.mrf.mxu0
        %v645 = vadd.f32 %v533, %v644
        %646 = vmatmul.bf16.gmra.mxu0 %v510
        %v647 = vpop.f32.mrf.mxu0
        %v648 = vadd.f32 %v533, %v647
        %v649 = vpop.f32.mrf.mxu0
        %v650 = vadd.f32 %v533, %v649
        %651 = vmatmul.bf16.gmra.mxu0 %v511
        %v652 = vpop.f32.mrf.mxu0
        %v653 = vadd.f32 %v533, %v652
        %v654 = vpop.f32.mrf.mxu0
        %v655 = vadd.f32 %v533, %v654
        %656 = vmatmul.bf16.gmra.mxu0 %v512
        %v657 = vpop.f32.mrf.mxu0
        %v658 = vadd.f32 %v533, %v657
        %v659 = vpop.f32.mrf.mxu0
        %v660 = vadd.f32 %v533, %v659
        %661 = vmatmul.bf16.gmra.mxu0 %v513
        %v662 = vpop.f32.mrf.mxu0
        %v663 = vadd.f32 %v533, %v662
        %v664 = vpop.f32.mrf.mxu0
        %v665 = vadd.f32 %v533, %v664
        %666 = vmatmul.bf16.gmra.mxu0 %v514
        %v667 = vpop.f32.mrf.mxu0
        %v668 = vadd.f32 %v533, %v667
        %v669 = vpop.f32.mrf.mxu0
        %v670 = vadd.f32 %v533, %v669
        %671 = vdwg.mxu0
        %v672 = vtanh.pop %v593
        %v673 = vtanh.pop %v595
        %v674 = vtanh.pop %v598
        %v675 = vtanh.pop %v600
        %v676 = vtanh.pop %v603
        %v677 = vtanh.pop %v605
        %v678 = vtanh.pop %v608
        %v679 = vtanh.pop %v610
        %v680 = vtanh.pop %v613
        %v681 = vtanh.pop %v615
        %v682 = vtanh.pop %v618
        %v683 = vtanh.pop %v620
        %v684 = vtanh.pop %v623
        %v685 = vtanh.pop %v625
        %v686 = vtanh.pop %v628
        %v687 = vtanh.pop %v630
        %v688 = vtanh.pop %v633
        %v689 = vtanh.pop %v635
        %v690 = vtanh.pop %v638
        %v691 = vtanh.pop %v640
        %v692 = vtanh.pop %v643
        %v693 = vtanh.pop %v645
        %v694 = vtanh.pop %v648
        %v695 = vtanh.pop %v650
        %v696 = vtanh.pop %v653
        %v697 = vtanh.pop %v655
        %v698 = vtanh.pop %v658
        %v699 = vtanh.pop %v660
        %v700 = vtanh.pop %v663
        %v701 = vtanh.pop %v665
        %v702 = vtanh.pop %v668
        %v703 = vtanh.pop %v670
        %v704 = vmax.f32 %v593, 0.0
        %v705 = vmax.f32 %v595, 0.0
        %v706 = vmax.f32 %v598, 0.0
        %v707 = vmax.f32 %v600, 0.0
        %v708 = vmax.f32 %v603, 0.0
        %v709 = vmax.f32 %v605, 0.0
        %v710 = vmax.f32 %v608, 0.0
        %v711 = vmax.f32 %v610, 0.0
        %v712 = vmax.f32 %v613, 0.0
        %v713 = vmax.f32 %v615, 0.0
        %v714 = vmax.f32 %v618, 0.0
        %v715 = vmax.f32 %v620, 0.0
        %v716 = vmax.f32 %v623, 0.0
        %v717 = vmax.f32 %v625, 0.0
        %v718 = vmax.f32 %v628, 0.0
        %v719 = vmax.f32 %v630, 0.0
        %v720 = vmax.f32 %v633, 0.0
        %v721 = vmax.f32 %v635, 0.0
        %v722 = vmax.f32 %v638, 0.0
        %v723 = vmax.f32 %v640, 0.0
        %v724 = vmax.f32 %v643, 0.0
        %v725 = vmax.f32 %v645, 0.0
        %v726 = vmax.f32 %v648, 0.0
        %v727 = vmax.f32 %v650, 0.0
        %v728 = vmax.f32 %v653, 0.0
        %v729 = vmax.f32 %v655, 0.0
        %v730 = vmax.f32 %v658, 0.0
        %v731 = vmax.f32 %v660, 0.0
        %v732 = vmax.f32 %v663, 0.0
        %v733 = vmax.f32 %v665, 0.0
        %v734 = vmax.f32 %v668, 0.0
        %v735 = vmax.f32 %v670, 0.0
        %v736 = vsel %vm461, 1, 0
        %vm737 = vcmp.eq.s32.totalorder %v736, 1
        %v738 = vsel %vm737, %v672, %v704
        %v739 = vsel %vm737, %v673, %v705
        %v740 = vsel %vm737, %v674, %v706
        %v741 = vsel %vm737, %v675, %v707
        %v742 = vsel %vm737, %v676, %v708
        %v743 = vsel %vm737, %v677, %v709
        %v744 = vsel %vm737, %v678, %v710
        %v745 = vsel %vm737, %v679, %v711
        %v746 = vsel %vm737, %v680, %v712
        %v747 = vsel %vm737, %v681, %v713
        %v748 = vsel %vm737, %v682, %v714
        %v749 = vsel %vm737, %v683, %v715
        %v750 = vsel %vm737, %v684, %v716
        %v751 = vsel %vm737, %v685, %v717
        %v752 = vsel %vm737, %v686, %v718
        %v753 = vsel %vm737, %v687, %v719
        %v754 = vsel %vm737, %v688, %v720
        %v755 = vsel %vm737, %v689, %v721
        %v756 = vsel %vm737, %v690, %v722
        %v757 = vsel %vm737, %v691, %v723
        %v758 = vsel %vm737, %v692, %v724
        %v759 = vsel %vm737, %v693, %v725
        %v760 = vsel %vm737, %v694, %v726
        %v761 = vsel %vm737, %v695, %v727
        %v762 = vsel %vm737, %v696, %v728
        %v763 = vsel %vm737, %v697, %v729
        %v764 = vsel %vm737, %v698, %v730
        %v765 = vsel %vm737, %v699, %v731
        %v766 = vsel %vm737, %v700, %v732
        %v767 = vsel %vm737, %v701, %v733
        %v768 = vsel %vm737, %v702, %v734
        %v769 = vsel %vm737, %v703, %v735
        %v770 = vpack.c.bf16 %v739, %v738
        %v771 = vpack.c.bf16 %v741, %v740
        %v772 = vpack.c.bf16 %v743, %v742
        %v773 = vpack.c.bf16 %v745, %v744
        %v774 = vpack.c.bf16 %v747, %v746
        %v775 = vpack.c.bf16 %v749, %v748
        %v776 = vpack.c.bf16 %v751, %v750
        %v777 = vpack.c.bf16 %v753, %v752
        %v778 = vpack.c.bf16 %v755, %v754
        %v779 = vpack.c.bf16 %v757, %v756
        %v780 = vpack.c.bf16 %v759, %v758
        %v781 = vpack.c.bf16 %v761, %v760
        %v782 = vpack.c.bf16 %v763, %v762
        %v783 = vpack.c.bf16 %v765, %v764
        %v784 = vpack.c.bf16 %v767, %v766
        %v785 = vpack.c.bf16 %v769, %v768
        %v786 = vld [vmem:[#allocation10] sm:$0xf]
        %v787 = vld [vmem:[#allocation10 + $0x4] sm:$0xf]
        %v788 = vld [vmem:[#allocation10 + $0x8] sm:$0xf]
        %v789 = vld [vmem:[#allocation10 + $0xc] sm:$0xf]
        %v790 = vld [vmem:[#allocation10 + $0x10] sm:$0xf]
        %v791 = vld [vmem:[#allocation10 + $0x14] sm:$0xf]
        %v792 = vld [vmem:[#allocation10 + $0x18] sm:$0xf]
        %v793 = vld [vmem:[#allocation10 + $0x1c] sm:$0xf]
        %v794 = vld [vmem:[#allocation10 + $0x20] sm:$0xf]
        %v795 = vld [vmem:[#allocation10 + $0x24] sm:$0xf]
        %v796 = vld [vmem:[#allocation10 + $0x28] sm:$0xf]
        %v797 = vld [vmem:[#allocation10 + $0x2c] sm:$0xf]
        %v798 = vld [vmem:[#allocation10 + $0x30] sm:$0xf]
        %v799 = vld [vmem:[#allocation10 + $0x34] sm:$0xf]
        %v800 = vld [vmem:[#allocation10 + $0x38] sm:$0xf]
        %v801 = vld [vmem:[#allocation10 + $0x3c] sm:$0xf]
        %v802 = vld [vmem:[%s5] sm:$0x1]
        %v804 = vperm.slane %v802, 0
        %v822 = vunpack.c.l.b16 %v786
        %v823 = vunpack.c.l.b16 %v787
        %v824 = vunpack.c.l.b16 %v788
        %v825 = vunpack.c.l.b16 %v789
        %v826 = vunpack.c.l.b16 %v790
        %v827 = vunpack.c.l.b16 %v791
        %v828 = vunpack.c.l.b16 %v792
        %v829 = vunpack.c.l.b16 %v793
        %v830 = vunpack.c.l.b16 %v794
        %v831 = vunpack.c.l.b16 %v795
        %v832 = vunpack.c.l.b16 %v796
        %v833 = vunpack.c.l.b16 %v797
        %v834 = vunpack.c.l.b16 %v798
        %v835 = vunpack.c.l.b16 %v799
        %v836 = vunpack.c.l.b16 %v800
        %v837 = vunpack.c.l.b16 %v801
        %v838 = vpack.c.b16 %v823, %v822
        %v839 = vpack.c.b16 %v825, %v824
        %v840 = vpack.c.b16 %v827, %v826
        %v841 = vpack.c.b16 %v829, %v828
        %v842 = vpack.c.b16 %v831, %v830
        %v843 = vpack.c.b16 %v833, %v832
        %v844 = vpack.c.b16 %v835, %v834
        %v845 = vpack.c.b16 %v837, %v836
        %854 = vmatpush.bf16.msra.mxu0 %v845
        %855 = vmatpush.bf16.msra.mxu0 %v844
        %856 = vmatpush.bf16.msra.mxu0 %v843
        %857 = vmatpush.bf16.msra.mxu0 %v842
        %858 = vmatpush.bf16.msra.mxu0 %v841
        %859 = vmatpush.bf16.msra.mxu0 %v840
        %860 = vmatpush.bf16.msra.mxu0 %v839
        %861 = vmatpush.bf16.msra.mxu0 %v838
        %862 = vmatmul.bf16.gmra.mxu0 %v770
        %v863 = vpop.f32.mrf.mxu0
        %v864 = vadd.f32 %v804, %v863
        %v865 = vpop.f32.mrf.mxu0
        %v866 = vadd.f32 %v804, %v865
        %867 = vmatmul.bf16.gmra.mxu0 %v771
        %v868 = vpop.f32.mrf.mxu0
        %v869 = vadd.f32 %v804, %v868
        %v870 = vpop.f32.mrf.mxu0
        %v871 = vadd.f32 %v804, %v870
        %872 = vmatmul.bf16.gmra.mxu0 %v772
        %v873 = vpop.f32.mrf.mxu0
        %v874 = vadd.f32 %v804, %v873
        %v875 = vpop.f32.mrf.mxu0
        %v876 = vadd.f32 %v804, %v875
        %877 = vmatmul.bf16.gmra.mxu0 %v773
        %v878 = vpop.f32.mrf.mxu0
        %v879 = vadd.f32 %v804, %v878
        %v880 = vpop.f32.mrf.mxu0
        %v881 = vadd.f32 %v804, %v880
        %882 = vmatmul.bf16.gmra.mxu0 %v774
        %v883 = vpop.f32.mrf.mxu0
        %v884 = vadd.f32 %v804, %v883
        %v885 = vpop.f32.mrf.mxu0
        %v886 = vadd.f32 %v804, %v885
        %887 = vmatmul.bf16.gmra.mxu0 %v775
        %v888 = vpop.f32.mrf.mxu0
        %v889 = vadd.f32 %v804, %v888
        %v890 = vpop.f32.mrf.mxu0
        %v891 = vadd.f32 %v804, %v890
        %892 = vmatmul.bf16.gmra.mxu0 %v776
        %v893 = vpop.f32.mrf.mxu0
        %v894 = vadd.f32 %v804, %v893
        %v895 = vpop.f32.mrf.mxu0
        %v896 = vadd.f32 %v804, %v895
        %897 = vmatmul.bf16.gmra.mxu0 %v777
        %v898 = vpop.f32.mrf.mxu0
        %v899 = vadd.f32 %v804, %v898
        %v900 = vpop.f32.mrf.mxu0
        %v901 = vadd.f32 %v804, %v900
        %902 = vmatmul.bf16.gmra.mxu0 %v778
        %v903 = vpop.f32.mrf.mxu0
        %v904 = vadd.f32 %v804, %v903
        %v905 = vpop.f32.mrf.mxu0
        %v906 = vadd.f32 %v804, %v905
        %907 = vmatmul.bf16.gmra.mxu0 %v779
        %v908 = vpop.f32.mrf.mxu0
        %v909 = vadd.f32 %v804, %v908
        %v910 = vpop.f32.mrf.mxu0
        %v911 = vadd.f32 %v804, %v910
        %912 = vmatmul.bf16.gmra.mxu0 %v780
        %v913 = vpop.f32.mrf.mxu0
        %v914 = vadd.f32 %v804, %v913
        %v915 = vpop.f32.mrf.mxu0
        %v916 = vadd.f32 %v804, %v915
        %917 = vmatmul.bf16.gmra.mxu0 %v781
        %v918 = vpop.f32.mrf.mxu0
        %v919 = vadd.f32 %v804, %v918
        %v920 = vpop.f32.mrf.mxu0
        %v921 = vadd.f32 %v804, %v920
        %922 = vmatmul.bf16.gmra.mxu0 %v782
        %v923 = vpop.f32.mrf.mxu0
        %v924 = vadd.f32 %v804, %v923
        %v925 = vpop.f32.mrf.mxu0
        %v926 = vadd.f32 %v804, %v925
        %927 = vmatmul.bf16.gmra.mxu0 %v783
        %v928 = vpop.f32.mrf.mxu0
        %v929 = vadd.f32 %v804, %v928
        %v930 = vpop.f32.mrf.mxu0
        %v931 = vadd.f32 %v804, %v930
        %932 = vmatmul.bf16.gmra.mxu0 %v784
        %v933 = vpop.f32.mrf.mxu0
        %v934 = vadd.f32 %v804, %v933
        %v935 = vpop.f32.mrf.mxu0
        %v936 = vadd.f32 %v804, %v935
        %937 = vmatmul.bf16.gmra.mxu0 %v785
        %v938 = vpop.f32.mrf.mxu0
        %v939 = vadd.f32 %v804, %v938
        %v940 = vpop.f32.mrf.mxu0
        %v941 = vadd.f32 %v804, %v940
        %942 = vdwg.mxu0
        %v943 = vtanh.pop %v864
        %v944 = vtanh.pop %v866
        %v945 = vtanh.pop %v869
        %v946 = vtanh.pop %v871
        %v947 = vtanh.pop %v874
        %v948 = vtanh.pop %v876
        %v949 = vtanh.pop %v879
        %v950 = vtanh.pop %v881
        %v951 = vtanh.pop %v884
        %v952 = vtanh.pop %v886
        %v953 = vtanh.pop %v889
        %v954 = vtanh.pop %v891
        %v955 = vtanh.pop %v894
        %v956 = vtanh.pop %v896
        %v957 = vtanh.pop %v899
        %v958 = vtanh.pop %v901
        %v959 = vtanh.pop %v904
        %v960 = vtanh.pop %v906
        %v961 = vtanh.pop %v909
        %v962 = vtanh.pop %v911
        %v963 = vtanh.pop %v914
        %v964 = vtanh.pop %v916
        %v965 = vtanh.pop %v919
        %v966 = vtanh.pop %v921
        %v967 = vtanh.pop %v924
        %v968 = vtanh.pop %v926
        %v969 = vtanh.pop %v929
        %v970 = vtanh.pop %v931
        %v971 = vtanh.pop %v934
        %v972 = vtanh.pop %v936
        %v973 = vtanh.pop %v939
        %v974 = vtanh.pop %v941
        %v975 = vmax.f32 %v864, 0.0
        %v976 = vmax.f32 %v866, 0.0
        %v977 = vmax.f32 %v869, 0.0
        %v978 = vmax.f32 %v871, 0.0
        %v979 = vmax.f32 %v874, 0.0
        %v980 = vmax.f32 %v876, 0.0
        %v981 = vmax.f32 %v879, 0.0
        %v982 = vmax.f32 %v881, 0.0
        %v983 = vmax.f32 %v884, 0.0
        %v984 = vmax.f32 %v886, 0.0
        %v985 = vmax.f32 %v889, 0.0
        %v986 = vmax.f32 %v891, 0.0
        %v987 = vmax.f32 %v894, 0.0
        %v988 = vmax.f32 %v896, 0.0
        %v989 = vmax.f32 %v899, 0.0
        %v990 = vmax.f32 %v901, 0.0
        %v991 = vmax.f32 %v904, 0.0
        %v992 = vmax.f32 %v906, 0.0
        %v993 = vmax.f32 %v909, 0.0
        %v994 = vmax.f32 %v911, 0.0
        %v995 = vmax.f32 %v914, 0.0
        %v996 = vmax.f32 %v916, 0.0
        %v997 = vmax.f32 %v919, 0.0
        %v998 = vmax.f32 %v921, 0.0
        %v999 = vmax.f32 %v924, 0.0
        %v1000 = vmax.f32 %v926, 0.0
        %v1001 = vmax.f32 %v929, 0.0
        %v1002 = vmax.f32 %v931, 0.0
        %v1003 = vmax.f32 %v934, 0.0
        %v1004 = vmax.f32 %v936, 0.0
        %v1005 = vmax.f32 %v939, 0.0
        %v1006 = vmax.f32 %v941, 0.0
        %v1007 = vsel %vm737, %v943, %v975
        %v1008 = vsel %vm737, %v944, %v976
        %v1009 = vsel %vm737, %v945, %v977
        %v1010 = vsel %vm737, %v946, %v978
        %v1011 = vsel %vm737, %v947, %v979
        %v1012 = vsel %vm737, %v948, %v980
        %v1013 = vsel %vm737, %v949, %v981
        %v1014 = vsel %vm737, %v950, %v982
        %v1015 = vsel %vm737, %v951, %v983
        %v1016 = vsel %vm737, %v952, %v984
        %v1017 = vsel %vm737, %v953, %v985
        %v1018 = vsel %vm737, %v954, %v986
        %v1019 = vsel %vm737, %v955, %v987
        %v1020 = vsel %vm737, %v956, %v988
        %v1021 = vsel %vm737, %v957, %v989
        %v1022 = vsel %vm737, %v958, %v990
        %v1023 = vsel %vm737, %v959, %v991
        %v1024 = vsel %vm737, %v960, %v992
        %v1025 = vsel %vm737, %v961, %v993
        %v1026 = vsel %vm737, %v962, %v994
        %v1027 = vsel %vm737, %v963, %v995
        %v1028 = vsel %vm737, %v964, %v996
        %v1029 = vsel %vm737, %v965, %v997
        %v1030 = vsel %vm737, %v966, %v998
        %v1031 = vsel %vm737, %v967, %v999
        %v1032 = vsel %vm737, %v968, %v1000
        %v1033 = vsel %vm737, %v969, %v1001
        %v1034 = vsel %vm737, %v970, %v1002
        %v1035 = vsel %vm737, %v971, %v1003
        %v1036 = vsel %vm737, %v972, %v1004
        %v1037 = vsel %vm737, %v973, %v1005
        %v1038 = vsel %vm737, %v974, %v1006
        %v1039 = vpack.c.bf16 %v1008, %v1007
        %v1040 = vpack.c.bf16 %v1010, %v1009
        %v1041 = vpack.c.bf16 %v1012, %v1011
        %v1042 = vpack.c.bf16 %v1014, %v1013
        %v1043 = vpack.c.bf16 %v1016, %v1015
        %v1044 = vpack.c.bf16 %v1018, %v1017
        %v1045 = vpack.c.bf16 %v1020, %v1019
        %v1046 = vpack.c.bf16 %v1022, %v1021
        %v1047 = vpack.c.bf16 %v1024, %v1023
        %v1048 = vpack.c.bf16 %v1026, %v1025
        %v1049 = vpack.c.bf16 %v1028, %v1027
        %v1050 = vpack.c.bf16 %v1030, %v1029
        %v1051 = vpack.c.bf16 %v1032, %v1031
        %v1052 = vpack.c.bf16 %v1034, %v1033
        %v1053 = vpack.c.bf16 %v1036, %v1035
        %v1054 = vpack.c.bf16 %v1038, %v1037
        %v1055 = vld [vmem:[#allocation11] sm:$0xff]
        %v1056 = vld [vmem:[#allocation11 + $0x8] sm:$0xff]
        %v1057 = vld [vmem:[#allocation11 + $0x10] sm:$0xff]
        %v1058 = vld [vmem:[#allocation11 + $0x18] sm:$0xff]
        %v1059 = vld [vmem:[#allocation11 + $0x20] sm:$0xff]
        %v1060 = vld [vmem:[#allocation11 + $0x28] sm:$0xff]
        %v1061 = vld [vmem:[#allocation11 + $0x30] sm:$0xff]
        %v1062 = vld [vmem:[#allocation11 + $0x38] sm:$0xff]
        %v1063 = vld [vmem:[#allocation11 + $0x40] sm:$0xff]
        %v1064 = vld [vmem:[#allocation11 + $0x48] sm:$0xff]
        %v1065 = vld [vmem:[#allocation11 + $0x50] sm:$0xff]
        %v1066 = vld [vmem:[#allocation11 + $0x58] sm:$0xff]
        %v1067 = vld [vmem:[#allocation11 + $0x60] sm:$0xff]
        %v1068 = vld [vmem:[#allocation11 + $0x68] sm:$0xff]
        %v1069 = vld [vmem:[#allocation11 + $0x70] sm:$0xff]
        %v1070 = vld [vmem:[#allocation11 + $0x78] sm:$0xff]
        %v1071 = vld [vmem:[#allocation13] sm:$0x3]
        %v1073 = vperm.slane %v1071, 0
        %v1074 = vperm.slane %v1071, 1
        %v1093 = vunpack.c.l.b16 %v1055
        %v1094 = vunpack.c.h.b16 %v1055
        %v1095 = vunpack.c.l.b16 %v1056
        %v1096 = vunpack.c.h.b16 %v1056
        %v1097 = vunpack.c.l.b16 %v1057
        %v1098 = vunpack.c.h.b16 %v1057
        %v1099 = vunpack.c.l.b16 %v1058
        %v1100 = vunpack.c.h.b16 %v1058
        %v1101 = vunpack.c.l.b16 %v1059
        %v1102 = vunpack.c.h.b16 %v1059
        %v1103 = vunpack.c.l.b16 %v1060
        %v1104 = vunpack.c.h.b16 %v1060
        %v1105 = vunpack.c.l.b16 %v1061
        %v1106 = vunpack.c.h.b16 %v1061
        %v1107 = vunpack.c.l.b16 %v1062
        %v1108 = vunpack.c.h.b16 %v1062
        %v1109 = vunpack.c.l.b16 %v1063
        %v1110 = vunpack.c.h.b16 %v1063
        %v1111 = vunpack.c.l.b16 %v1064
        %v1112 = vunpack.c.h.b16 %v1064
        %v1113 = vunpack.c.l.b16 %v1065
        %v1114 = vunpack.c.h.b16 %v1065
        %v1115 = vunpack.c.l.b16 %v1066
        %v1116 = vunpack.c.h.b16 %v1066
        %v1117 = vunpack.c.l.b16 %v1067
        %v1118 = vunpack.c.h.b16 %v1067
        %v1119 = vunpack.c.l.b16 %v1068
        %v1120 = vunpack.c.h.b16 %v1068
        %v1121 = vunpack.c.l.b16 %v1069
        %v1122 = vunpack.c.h.b16 %v1069
        %v1123 = vunpack.c.l.b16 %v1070
        %v1124 = vunpack.c.h.b16 %v1070
        %v1125 = vpack.c.b16 %v1095, %v1093
        %v1126 = vpack.c.b16 %v1096, %v1094
        %v1127 = vpack.c.b16 %v1099, %v1097
        %v1128 = vpack.c.b16 %v1100, %v1098
        %v1129 = vpack.c.b16 %v1103, %v1101
        %v1130 = vpack.c.b16 %v1104, %v1102
        %v1131 = vpack.c.b16 %v1107, %v1105
        %v1132 = vpack.c.b16 %v1108, %v1106
        %v1133 = vpack.c.b16 %v1111, %v1109
        %v1134 = vpack.c.b16 %v1112, %v1110
        %v1135 = vpack.c.b16 %v1115, %v1113
        %v1136 = vpack.c.b16 %v1116, %v1114
        %v1137 = vpack.c.b16 %v1119, %v1117
        %v1138 = vpack.c.b16 %v1120, %v1118
        %v1139 = vpack.c.b16 %v1123, %v1121
        %v1140 = vpack.c.b16 %v1124, %v1122
        %1157 = vmatpush.bf16.msra.mxu0 %v1139
        %1158 = vmatpush.bf16.msra.mxu0 %v1137
        %1159 = vmatpush.bf16.msra.mxu0 %v1135
        %1160 = vmatpush.bf16.msra.mxu0 %v1133
        %1161 = vmatpush.bf16.msra.mxu0 %v1131
        %1162 = vmatpush.bf16.msra.mxu0 %v1129
        %1163 = vmatpush.bf16.msra.mxu0 %v1127
        %1164 = vmatpush.bf16.msra.mxu0 %v1125
        %1165 = vmatmul.bf16.gmra.mxu0 %v1039
        %v1166 = vpop.f32.mrf.mxu0
        %v1167 = vadd.f32 %v1073, %v1166
        %v1168 = vpop.f32.mrf.mxu0
        %v1169 = vadd.f32 %v1073, %v1168
        %1170 = vmatmul.bf16.gmra.mxu0 %v1040
        %v1171 = vpop.f32.mrf.mxu0
        %v1172 = vadd.f32 %v1073, %v1171
        %v1173 = vpop.f32.mrf.mxu0
        %v1174 = vadd.f32 %v1073, %v1173
        %1175 = vmatmul.bf16.gmra.mxu0 %v1041
        %v1176 = vpop.f32.mrf.mxu0
        %v1177 = vadd.f32 %v1073, %v1176
        %v1178 = vpop.f32.mrf.mxu0
        %v1179 = vadd.f32 %v1073, %v1178
        %1180 = vmatmul.bf16.gmra.mxu0 %v1042
        %v1181 = vpop.f32.mrf.mxu0
        %v1182 = vadd.f32 %v1073, %v1181
        %v1183 = vpop.f32.mrf.mxu0
        %v1184 = vadd.f32 %v1073, %v1183
        %1185 = vmatmul.bf16.gmra.mxu0 %v1043
        %v1186 = vpop.f32.mrf.mxu0
        %v1187 = vadd.f32 %v1073, %v1186
        %v1188 = vpop.f32.mrf.mxu0
        %v1189 = vadd.f32 %v1073, %v1188
        %1190 = vmatmul.bf16.gmra.mxu0 %v1044
        %v1191 = vpop.f32.mrf.mxu0
        %v1192 = vadd.f32 %v1073, %v1191
        %v1193 = vpop.f32.mrf.mxu0
        %v1194 = vadd.f32 %v1073, %v1193
        %1195 = vmatmul.bf16.gmra.mxu0 %v1045
        %v1196 = vpop.f32.mrf.mxu0
        %v1197 = vadd.f32 %v1073, %v1196
        %v1198 = vpop.f32.mrf.mxu0
        %v1199 = vadd.f32 %v1073, %v1198
        %1200 = vmatmul.bf16.gmra.mxu0 %v1046
        %v1201 = vpop.f32.mrf.mxu0
        %v1202 = vadd.f32 %v1073, %v1201
        %v1203 = vpop.f32.mrf.mxu0
        %v1204 = vadd.f32 %v1073, %v1203
        %1205 = vmatmul.bf16.gmra.mxu0 %v1047
        %v1206 = vpop.f32.mrf.mxu0
        %v1207 = vadd.f32 %v1073, %v1206
        %v1208 = vpop.f32.mrf.mxu0
        %v1209 = vadd.f32 %v1073, %v1208
        %1210 = vmatmul.bf16.gmra.mxu0 %v1048
        %v1211 = vpop.f32.mrf.mxu0
        %v1212 = vadd.f32 %v1073, %v1211
        %v1213 = vpop.f32.mrf.mxu0
        %v1214 = vadd.f32 %v1073, %v1213
        %1215 = vmatmul.bf16.gmra.mxu0 %v1049
        %v1216 = vpop.f32.mrf.mxu0
        %v1217 = vadd.f32 %v1073, %v1216
        %v1218 = vpop.f32.mrf.mxu0
        %v1219 = vadd.f32 %v1073, %v1218
        %1220 = vmatmul.bf16.gmra.mxu0 %v1050
        %v1221 = vpop.f32.mrf.mxu0
        %v1222 = vadd.f32 %v1073, %v1221
        %v1223 = vpop.f32.mrf.mxu0
        %v1224 = vadd.f32 %v1073, %v1223
        %1225 = vmatmul.bf16.gmra.mxu0 %v1051
        %v1226 = vpop.f32.mrf.mxu0
        %v1227 = vadd.f32 %v1073, %v1226
        %v1228 = vpop.f32.mrf.mxu0
        %v1229 = vadd.f32 %v1073, %v1228
        %1230 = vmatmul.bf16.gmra.mxu0 %v1052
        %v1231 = vpop.f32.mrf.mxu0
        %v1232 = vadd.f32 %v1073, %v1231
        %v1233 = vpop.f32.mrf.mxu0
        %v1234 = vadd.f32 %v1073, %v1233
        %1235 = vmatmul.bf16.gmra.mxu0 %v1053
        %v1236 = vpop.f32.mrf.mxu0
        %v1237 = vadd.f32 %v1073, %v1236
        %v1238 = vpop.f32.mrf.mxu0
        %v1239 = vadd.f32 %v1073, %v1238
        %1240 = vmatmul.bf16.gmra.mxu0 %v1054
        %v1241 = vpop.f32.mrf.mxu0
        %v1242 = vadd.f32 %v1073, %v1241
        %v1243 = vpop.f32.mrf.mxu0
        %v1244 = vadd.f32 %v1073, %v1243
        %1245 = vdwg.mxu0
        %1246 = vmatpush.bf16.msra.mxu0 %v1140
        %1247 = vmatpush.bf16.msra.mxu0 %v1138
        %1248 = vmatpush.bf16.msra.mxu0 %v1136
        %1249 = vmatpush.bf16.msra.mxu0 %v1134
        %1250 = vmatpush.bf16.msra.mxu0 %v1132
        %1251 = vmatpush.bf16.msra.mxu0 %v1130
        %1252 = vmatpush.bf16.msra.mxu0 %v1128
        %1253 = vmatpush.bf16.msra.mxu0 %v1126
        %1254 = vmatmul.bf16.gmra.mxu0 %v1039
        %v1255 = vpop.f32.mrf.mxu0
        %v1256 = vadd.f32 %v1074, %v1255
        %v1257 = vpop.f32.mrf.mxu0
        %v1258 = vadd.f32 %v1074, %v1257
        %1259 = vmatmul.bf16.gmra.mxu0 %v1040
        %v1260 = vpop.f32.mrf.mxu0
        %v1261 = vadd.f32 %v1074, %v1260
        %v1262 = vpop.f32.mrf.mxu0
        %v1263 = vadd.f32 %v1074, %v1262
        %1264 = vmatmul.bf16.gmra.mxu0 %v1041
        %v1265 = vpop.f32.mrf.mxu0
        %v1266 = vadd.f32 %v1074, %v1265
        %v1267 = vpop.f32.mrf.mxu0
        %v1268 = vadd.f32 %v1074, %v1267
        %1269 = vmatmul.bf16.gmra.mxu0 %v1042
        %v1270 = vpop.f32.mrf.mxu0
        %v1271 = vadd.f32 %v1074, %v1270
        %v1272 = vpop.f32.mrf.mxu0
        %v1273 = vadd.f32 %v1074, %v1272
        %1274 = vmatmul.bf16.gmra.mxu0 %v1043
        %v1275 = vpop.f32.mrf.mxu0
        %v1276 = vadd.f32 %v1074, %v1275
        %v1277 = vpop.f32.mrf.mxu0
        %v1278 = vadd.f32 %v1074, %v1277
        %1279 = vmatmul.bf16.gmra.mxu0 %v1044
        %v1280 = vpop.f32.mrf.mxu0
        %v1281 = vadd.f32 %v1074, %v1280
        %v1282 = vpop.f32.mrf.mxu0
        %v1283 = vadd.f32 %v1074, %v1282
        %1284 = vmatmul.bf16.gmra.mxu0 %v1045
        %v1285 = vpop.f32.mrf.mxu0
        %v1286 = vadd.f32 %v1074, %v1285
        %v1287 = vpop.f32.mrf.mxu0
        %v1288 = vadd.f32 %v1074, %v1287
        %1289 = vmatmul.bf16.gmra.mxu0 %v1046
        %v1290 = vpop.f32.mrf.mxu0
        %v1291 = vadd.f32 %v1074, %v1290
        %v1292 = vpop.f32.mrf.mxu0
        %v1293 = vadd.f32 %v1074, %v1292
        %1294 = vmatmul.bf16.gmra.mxu0 %v1047
        %v1295 = vpop.f32.mrf.mxu0
        %v1296 = vadd.f32 %v1074, %v1295
        %v1297 = vpop.f32.mrf.mxu0
        %v1298 = vadd.f32 %v1074, %v1297
        %1299 = vmatmul.bf16.gmra.mxu0 %v1048
        %v1300 = vpop.f32.mrf.mxu0
        %v1301 = vadd.f32 %v1074, %v1300
        %v1302 = vpop.f32.mrf.mxu0
        %v1303 = vadd.f32 %v1074, %v1302
        %1304 = vmatmul.bf16.gmra.mxu0 %v1049
        %v1305 = vpop.f32.mrf.mxu0
        %v1306 = vadd.f32 %v1074, %v1305
        %v1307 = vpop.f32.mrf.mxu0
        %v1308 = vadd.f32 %v1074, %v1307
        %1309 = vmatmul.bf16.gmra.mxu0 %v1050
        %v1310 = vpop.f32.mrf.mxu0
        %v1311 = vadd.f32 %v1074, %v1310
        %v1312 = vpop.f32.mrf.mxu0
        %v1313 = vadd.f32 %v1074, %v1312
        %1314 = vmatmul.bf16.gmra.mxu0 %v1051
        %v1315 = vpop.f32.mrf.mxu0
        %v1316 = vadd.f32 %v1074, %v1315
        %v1317 = vpop.f32.mrf.mxu0
        %v1318 = vadd.f32 %v1074, %v1317
        %1319 = vmatmul.bf16.gmra.mxu0 %v1052
        %v1320 = vpop.f32.mrf.mxu0
        %v1321 = vadd.f32 %v1074, %v1320
        %v1322 = vpop.f32.mrf.mxu0
        %v1323 = vadd.f32 %v1074, %v1322
        %1324 = vmatmul.bf16.gmra.mxu0 %v1053
        %v1325 = vpop.f32.mrf.mxu0
        %v1326 = vadd.f32 %v1074, %v1325
        %v1327 = vpop.f32.mrf.mxu0
        %v1328 = vadd.f32 %v1074, %v1327
        %1329 = vmatmul.bf16.gmra.mxu0 %v1054
        %v1330 = vpop.f32.mrf.mxu0
        %v1331 = vadd.f32 %v1074, %v1330
        %v1332 = vpop.f32.mrf.mxu0
        %v1333 = vadd.f32 %v1074, %v1332
        %1334 = vdwg.mxu0
        %v1335 = vsub.f32 %v427, %v1256
        %v1336 = vsub.f32 %v428, %v1258
        %v1337 = vsub.f32 %v429, %v1261
        %v1338 = vsub.f32 %v430, %v1263
        %v1339 = vsub.f32 %v431, %v1266
        %v1340 = vsub.f32 %v432, %v1268
        %v1341 = vsub.f32 %v433, %v1271
        %v1342 = vsub.f32 %v434, %v1273
        %v1343 = vsub.f32 %v435, %v1276
        %v1344 = vsub.f32 %v436, %v1278
        %v1345 = vsub.f32 %v437, %v1281
        %v1346 = vsub.f32 %v438, %v1283
        %v1347 = vsub.f32 %v439, %v1286
        %v1348 = vsub.f32 %v440, %v1288
        %v1349 = vsub.f32 %v441, %v1291
        %v1350 = vsub.f32 %v442, %v1293
        %v1351 = vsub.f32 %v443, %v1296
        %v1352 = vsub.f32 %v444, %v1298
        %v1353 = vsub.f32 %v445, %v1301
        %v1354 = vsub.f32 %v446, %v1303
        %v1355 = vsub.f32 %v447, %v1306
        %v1356 = vsub.f32 %v448, %v1308
        %v1357 = vsub.f32 %v449, %v1311
        %v1358 = vsub.f32 %v450, %v1313
        %v1359 = vsub.f32 %v451, %v1316
        %v1360 = vsub.f32 %v452, %v1318
        %v1361 = vsub.f32 %v453, %v1321
        %v1362 = vsub.f32 %v454, %v1323
        %v1363 = vsub.f32 %v455, %v1326
        %v1364 = vsub.f32 %v456, %v1328
        %v1365 = vsub.f32 %v457, %v1331
        %v1366 = vsub.f32 %v458, %v1333
        %v1368 = vperm.slane %v463, 0
        %v1370 = vmul.f32 %v1368, %v1335
        %v1371 = vmul.f32 %v1368, %v1336
        %v1372 = vmul.f32 %v1368, %v1337
        %v1373 = vmul.f32 %v1368, %v1338
        %v1374 = vmul.f32 %v1368, %v1339
        %v1375 = vmul.f32 %v1368, %v1340
        %v1376 = vmul.f32 %v1368, %v1341
        %v1377 = vmul.f32 %v1368, %v1342
        %v1378 = vmul.f32 %v1368, %v1343
        %v1379 = vmul.f32 %v1368, %v1344
        %v1380 = vmul.f32 %v1368, %v1345
        %v1381 = vmul.f32 %v1368, %v1346
        %v1382 = vmul.f32 %v1368, %v1347
        %v1383 = vmul.f32 %v1368, %v1348
        %v1384 = vmul.f32 %v1368, %v1349
        %v1385 = vmul.f32 %v1368, %v1350
        %v1386 = vmul.f32 %v1368, %v1351
        %v1387 = vmul.f32 %v1368, %v1352
        %v1388 = vmul.f32 %v1368, %v1353
        %v1389 = vmul.f32 %v1368, %v1354
        %v1390 = vmul.f32 %v1368, %v1355
        %v1391 = vmul.f32 %v1368, %v1356
        %v1392 = vmul.f32 %v1368, %v1357
        %v1393 = vmul.f32 %v1368, %v1358
        %v1394 = vmul.f32 %v1368, %v1359
        %v1395 = vmul.f32 %v1368, %v1360
        %v1396 = vmul.f32 %v1368, %v1361
        %v1397 = vmul.f32 %v1368, %v1362
        %v1398 = vmul.f32 %v1368, %v1363
        %v1399 = vmul.f32 %v1368, %v1364
        %v1400 = vmul.f32 %v1368, %v1365
        %v1401 = vmul.f32 %v1368, %v1366
        %v1402 = vsub.f32 0.0, %v1167
        %v1403 = vsub.f32 0.0, %v1169
        %v1404 = vsub.f32 0.0, %v1172
        %v1405 = vsub.f32 0.0, %v1174
        %v1406 = vsub.f32 0.0, %v1177
        %v1407 = vsub.f32 0.0, %v1179
        %v1408 = vsub.f32 0.0, %v1182
        %v1409 = vsub.f32 0.0, %v1184
        %v1410 = vsub.f32 0.0, %v1187
        %v1411 = vsub.f32 0.0, %v1189
        %v1412 = vsub.f32 0.0, %v1192
        %v1413 = vsub.f32 0.0, %v1194
        %v1414 = vsub.f32 0.0, %v1197
        %v1415 = vsub.f32 0.0, %v1199
        %v1416 = vsub.f32 0.0, %v1202
        %v1417 = vsub.f32 0.0, %v1204
        %v1418 = vsub.f32 0.0, %v1207
        %v1419 = vsub.f32 0.0, %v1209
        %v1420 = vsub.f32 0.0, %v1212
        %v1421 = vsub.f32 0.0, %v1214
        %v1422 = vsub.f32 0.0, %v1217
        %v1423 = vsub.f32 0.0, %v1219
        %v1424 = vsub.f32 0.0, %v1222
        %v1425 = vsub.f32 0.0, %v1224
        %v1426 = vsub.f32 0.0, %v1227
        %v1427 = vsub.f32 0.0, %v1229
        %v1428 = vsub.f32 0.0, %v1232
        %v1429 = vsub.f32 0.0, %v1234
        %v1430 = vsub.f32 0.0, %v1237
        %v1431 = vsub.f32 0.0, %v1239
        %v1432 = vsub.f32 0.0, %v1242
        %v1433 = vsub.f32 0.0, %v1244
        %v1434 = vmul.f32 %v1402, 1.442695
        %v1435 = vpow.pop %v1434
        %v1436 = vmul.f32 %v1403, 1.442695
        %v1437 = vpow.pop %v1436
        %v1438 = vmul.f32 %v1404, 1.442695
        %v1439 = vpow.pop %v1438
        %v1440 = vmul.f32 %v1405, 1.442695
        %v1441 = vpow.pop %v1440
        %v1442 = vmul.f32 %v1406, 1.442695
        %v1443 = vpow.pop %v1442
        %v1444 = vmul.f32 %v1407, 1.442695
        %v1445 = vpow.pop %v1444
        %v1446 = vmul.f32 %v1408, 1.442695
        %v1447 = vpow.pop %v1446
        %v1448 = vmul.f32 %v1409, 1.442695
        %v1449 = vpow.pop %v1448
        %v1450 = vmul.f32 %v1410, 1.442695
        %v1451 = vpow.pop %v1450
        %v1452 = vmul.f32 %v1411, 1.442695
        %v1453 = vpow.pop %v1452
        %v1454 = vmul.f32 %v1412, 1.442695
        %v1455 = vpow.pop %v1454
        %v1456 = vmul.f32 %v1413, 1.442695
        %v1457 = vpow.pop %v1456
        %v1458 = vmul.f32 %v1414, 1.442695
        %v1459 = vpow.pop %v1458
        %v1460 = vmul.f32 %v1415, 1.442695
        %v1461 = vpow.pop %v1460
        %v1462 = vmul.f32 %v1416, 1.442695
        %v1463 = vpow.pop %v1462
        %v1464 = vmul.f32 %v1417, 1.442695
        %v1465 = vpow.pop %v1464
        %v1466 = vmul.f32 %v1418, 1.442695
        %v1467 = vpow.pop %v1466
        %v1468 = vmul.f32 %v1419, 1.442695
        %v1469 = vpow.pop %v1468
        %v1470 = vmul.f32 %v1420, 1.442695
        %v1471 = vpow.pop %v1470
        %v1472 = vmul.f32 %v1421, 1.442695
        %v1473 = vpow.pop %v1472
        %v1474 = vmul.f32 %v1422, 1.442695
        %v1475 = vpow.pop %v1474
        %v1476 = vmul.f32 %v1423, 1.442695
        %v1477 = vpow.pop %v1476
        %v1478 = vmul.f32 %v1424, 1.442695
        %v1479 = vpow.pop %v1478
        %v1480 = vmul.f32 %v1425, 1.442695
        %v1481 = vpow.pop %v1480
        %v1482 = vmul.f32 %v1426, 1.442695
        %v1483 = vpow.pop %v1482
        %v1484 = vmul.f32 %v1427, 1.442695
        %v1485 = vpow.pop %v1484
        %v1486 = vmul.f32 %v1428, 1.442695
        %v1487 = vpow.pop %v1486
        %v1488 = vmul.f32 %v1429, 1.442695
        %v1489 = vpow.pop %v1488
        %v1490 = vmul.f32 %v1430, 1.442695
        %v1491 = vpow.pop %v1490
        %v1492 = vmul.f32 %v1431, 1.442695
        %v1493 = vpow.pop %v1492
        %v1494 = vmul.f32 %v1432, 1.442695
        %v1495 = vpow.pop %v1494
        %v1496 = vmul.f32 %v1433, 1.442695
        %v1497 = vpow.pop %v1496
        %v1498 = vmul.f32 %v1370, %v1435
        %v1499 = vmul.f32 %v1371, %v1437
        %v1500 = vmul.f32 %v1372, %v1439
        %v1501 = vmul.f32 %v1373, %v1441
        %v1502 = vmul.f32 %v1374, %v1443
        %v1503 = vmul.f32 %v1375, %v1445
        %v1504 = vmul.f32 %v1376, %v1447
        %v1505 = vmul.f32 %v1377, %v1449
        %v1506 = vmul.f32 %v1378, %v1451
        %v1507 = vmul.f32 %v1379, %v1453
        %v1508 = vmul.f32 %v1380, %v1455
        %v1509 = vmul.f32 %v1381, %v1457
        %v1510 = vmul.f32 %v1382, %v1459
        %v1511 = vmul.f32 %v1383, %v1461
        %v1512 = vmul.f32 %v1384, %v1463
        %v1513 = vmul.f32 %v1385, %v1465
        %v1514 = vmul.f32 %v1386, %v1467
        %v1515 = vmul.f32 %v1387, %v1469
        %v1516 = vmul.f32 %v1388, %v1471
        %v1517 = vmul.f32 %v1389, %v1473
        %v1518 = vmul.f32 %v1390, %v1475
        %v1519 = vmul.f32 %v1391, %v1477
        %v1520 = vmul.f32 %v1392, %v1479
        %v1521 = vmul.f32 %v1393, %v1481
        %v1522 = vmul.f32 %v1394, %v1483
        %v1523 = vmul.f32 %v1395, %v1485
        %v1524 = vmul.f32 %v1396, %v1487
        %v1525 = vmul.f32 %v1397, %v1489
        %v1526 = vmul.f32 %v1398, %v1491
        %v1527 = vmul.f32 %v1399, %v1493
        %v1528 = vmul.f32 %v1400, %v1495
        %v1529 = vmul.f32 %v1401, %v1497
        %v1530 = vadd.f32 %v467, %v1498
        %v1531 = vadd.f32 %v468, %v1499
        %v1532 = vadd.f32 %v469, %v1500
        %v1533 = vadd.f32 %v470, %v1501
        %v1534 = vadd.f32 %v471, %v1502
        %v1535 = vadd.f32 %v472, %v1503
        %v1536 = vadd.f32 %v473, %v1504
        %v1537 = vadd.f32 %v474, %v1505
        %v1538 = vadd.f32 %v475, %v1506
        %v1539 = vadd.f32 %v476, %v1507
        %v1540 = vadd.f32 %v477, %v1508
        %v1541 = vadd.f32 %v478, %v1509
        %v1542 = vadd.f32 %v479, %v1510
        %v1543 = vadd.f32 %v480, %v1511
        %v1544 = vadd.f32 %v481, %v1512
        %v1545 = vadd.f32 %v482, %v1513
        %v1546 = vadd.f32 %v483, %v1514
        %v1547 = vadd.f32 %v484, %v1515
        %v1548 = vadd.f32 %v485, %v1516
        %v1549 = vadd.f32 %v486, %v1517
        %v1550 = vadd.f32 %v487, %v1518
        %v1551 = vadd.f32 %v488, %v1519
        %v1552 = vadd.f32 %v489, %v1520
        %v1553 = vadd.f32 %v490, %v1521
        %v1554 = vadd.f32 %v491, %v1522
        %v1555 = vadd.f32 %v492, %v1523
        %v1556 = vadd.f32 %v493, %v1524
        %v1557 = vadd.f32 %v494, %v1525
        %v1558 = vadd.f32 %v495, %v1526
        %v1559 = vadd.f32 %v496, %v1527
        %v1560 = vadd.f32 %v497, %v1528
        %v1561 = vadd.f32 %v498, %v1529
        %v1562 = vmul.f32 %v1368, %v1167
        %v1563 = vmul.f32 %v1368, %v1169
        %v1564 = vmul.f32 %v1368, %v1172
        %v1565 = vmul.f32 %v1368, %v1174
        %v1566 = vmul.f32 %v1368, %v1177
        %v1567 = vmul.f32 %v1368, %v1179
        %v1568 = vmul.f32 %v1368, %v1182
        %v1569 = vmul.f32 %v1368, %v1184
        %v1570 = vmul.f32 %v1368, %v1187
        %v1571 = vmul.f32 %v1368, %v1189
        %v1572 = vmul.f32 %v1368, %v1192
        %v1573 = vmul.f32 %v1368, %v1194
        %v1574 = vmul.f32 %v1368, %v1197
        %v1575 = vmul.f32 %v1368, %v1199
        %v1576 = vmul.f32 %v1368, %v1202
        %v1577 = vmul.f32 %v1368, %v1204
        %v1578 = vmul.f32 %v1368, %v1207
        %v1579 = vmul.f32 %v1368, %v1209
        %v1580 = vmul.f32 %v1368, %v1212
        %v1581 = vmul.f32 %v1368, %v1214
        %v1582 = vmul.f32 %v1368, %v1217
        %v1583 = vmul.f32 %v1368, %v1219
        %v1584 = vmul.f32 %v1368, %v1222
        %v1585 = vmul.f32 %v1368, %v1224
        %v1586 = vmul.f32 %v1368, %v1227
        %v1587 = vmul.f32 %v1368, %v1229
        %v1588 = vmul.f32 %v1368, %v1232
        %v1589 = vmul.f32 %v1368, %v1234
        %v1590 = vmul.f32 %v1368, %v1237
        %v1591 = vmul.f32 %v1368, %v1239
        %v1592 = vmul.f32 %v1368, %v1242
        %v1593 = vmul.f32 %v1368, %v1244
        %v1594 = vsub.f32 0.0, %v1562
        %v1595 = vsub.f32 0.0, %v1563
        %v1596 = vsub.f32 0.0, %v1564
        %v1597 = vsub.f32 0.0, %v1565
        %v1598 = vsub.f32 0.0, %v1566
        %v1599 = vsub.f32 0.0, %v1567
        %v1600 = vsub.f32 0.0, %v1568
        %v1601 = vsub.f32 0.0, %v1569
        %v1602 = vsub.f32 0.0, %v1570
        %v1603 = vsub.f32 0.0, %v1571
        %v1604 = vsub.f32 0.0, %v1572
        %v1605 = vsub.f32 0.0, %v1573
        %v1606 = vsub.f32 0.0, %v1574
        %v1607 = vsub.f32 0.0, %v1575
        %v1608 = vsub.f32 0.0, %v1576
        %v1609 = vsub.f32 0.0, %v1577
        %v1610 = vsub.f32 0.0, %v1578
        %v1611 = vsub.f32 0.0, %v1579
        %v1612 = vsub.f32 0.0, %v1580
        %v1613 = vsub.f32 0.0, %v1581
        %v1614 = vsub.f32 0.0, %v1582
        %v1615 = vsub.f32 0.0, %v1583
        %v1616 = vsub.f32 0.0, %v1584
        %v1617 = vsub.f32 0.0, %v1585
        %v1618 = vsub.f32 0.0, %v1586
        %v1619 = vsub.f32 0.0, %v1587
        %v1620 = vsub.f32 0.0, %v1588
        %v1621 = vsub.f32 0.0, %v1589
        %v1622 = vsub.f32 0.0, %v1590
        %v1623 = vsub.f32 0.0, %v1591
        %v1624 = vsub.f32 0.0, %v1592
        %v1625 = vsub.f32 0.0, %v1593
        %s1626 = scalar_lea.vmem [#allocation5], 1
        %v1627 = vld [vmem:[%s1626] sm:$0x1]
        %v1628 = vsub.f32 1.0, %v1627
        %v1630 = vperm.slane %v1627, 0
        %v1632 = vmul.f32 %v1530, %v1630
        %v1633 = vmul.f32 %v1531, %v1630
        %v1634 = vmul.f32 %v1532, %v1630
        %v1635 = vmul.f32 %v1533, %v1630
        %v1636 = vmul.f32 %v1534, %v1630
        %v1637 = vmul.f32 %v1535, %v1630
        %v1638 = vmul.f32 %v1536, %v1630
        %v1639 = vmul.f32 %v1537, %v1630
        %v1640 = vmul.f32 %v1538, %v1630
        %v1641 = vmul.f32 %v1539, %v1630
        %v1642 = vmul.f32 %v1540, %v1630
        %v1643 = vmul.f32 %v1541, %v1630
        %v1644 = vmul.f32 %v1542, %v1630
        %v1645 = vmul.f32 %v1543, %v1630
        %v1646 = vmul.f32 %v1544, %v1630
        %v1647 = vmul.f32 %v1545, %v1630
        %v1648 = vmul.f32 %v1546, %v1630
        %v1649 = vmul.f32 %v1547, %v1630
        %v1650 = vmul.f32 %v1548, %v1630
        %v1651 = vmul.f32 %v1549, %v1630
        %v1652 = vmul.f32 %v1550, %v1630
        %v1653 = vmul.f32 %v1551, %v1630
        %v1654 = vmul.f32 %v1552, %v1630
        %v1655 = vmul.f32 %v1553, %v1630
        %v1656 = vmul.f32 %v1554, %v1630
        %v1657 = vmul.f32 %v1555, %v1630
        %v1658 = vmul.f32 %v1556, %v1630
        %v1659 = vmul.f32 %v1557, %v1630
        %v1660 = vmul.f32 %v1558, %v1630
        %v1661 = vmul.f32 %v1559, %v1630
        %v1662 = vmul.f32 %v1560, %v1630
        %v1663 = vmul.f32 %v1561, %v1630
        %v1664 = vpack.c.bf16 %v1633, %v1632
        %v1665 = vpack.c.bf16 %v1635, %v1634
        %v1666 = vpack.c.bf16 %v1637, %v1636
        %v1667 = vpack.c.bf16 %v1639, %v1638
        %v1668 = vpack.c.bf16 %v1641, %v1640
        %v1669 = vpack.c.bf16 %v1643, %v1642
        %v1670 = vpack.c.bf16 %v1645, %v1644
        %v1671 = vpack.c.bf16 %v1647, %v1646
        %v1672 = vpack.c.bf16 %v1649, %v1648
        %v1673 = vpack.c.bf16 %v1651, %v1650
        %v1674 = vpack.c.bf16 %v1653, %v1652
        %v1675 = vpack.c.bf16 %v1655, %v1654
        %v1676 = vpack.c.bf16 %v1657, %v1656
        %v1677 = vpack.c.bf16 %v1659, %v1658
        %v1678 = vpack.c.bf16 %v1661, %v1660
        %v1679 = vpack.c.bf16 %v1663, %v1662
        %s1680 = scalar_lea.vmem [#allocation7], 64
        %v1681 = vld [vmem:[%s1680] sm:$0xf]
        %v1682 = vld [vmem:[%s1680 + $0x4] sm:$0xf]
        %v1683 = vld [vmem:[%s1680 + $0x8] sm:$0xf]
        %v1684 = vld [vmem:[%s1680 + $0xc] sm:$0xf]
        %v1685 = vld [vmem:[%s1680 + $0x10] sm:$0xf]
        %v1686 = vld [vmem:[%s1680 + $0x14] sm:$0xf]
        %v1687 = vld [vmem:[%s1680 + $0x18] sm:$0xf]
        %v1688 = vld [vmem:[%s1680 + $0x1c] sm:$0xf]
        %v1689 = vld [vmem:[%s1680 + $0x20] sm:$0xf]
        %v1690 = vld [vmem:[%s1680 + $0x24] sm:$0xf]
        %v1691 = vld [vmem:[%s1680 + $0x28] sm:$0xf]
        %v1692 = vld [vmem:[%s1680 + $0x2c] sm:$0xf]
        %v1693 = vld [vmem:[%s1680 + $0x30] sm:$0xf]
        %v1694 = vld [vmem:[%s1680 + $0x34] sm:$0xf]
        %v1695 = vld [vmem:[%s1680 + $0x38] sm:$0xf]
        %v1696 = vld [vmem:[%s1680 + $0x3c] sm:$0xf]
        %s1697 = scalar_lea.vmem [#allocation8], 1
        %v1698 = vld [vmem:[%s1697] sm:$0x1]
        %v1700 = vperm.slane %v1698, 0
        %v1718 = vunpack.c.l.b16 %v1681
        %v1719 = vunpack.c.l.b16 %v1682
        %v1720 = vunpack.c.l.b16 %v1683
        %v1721 = vunpack.c.l.b16 %v1684
        %v1722 = vunpack.c.l.b16 %v1685
        %v1723 = vunpack.c.l.b16 %v1686
        %v1724 = vunpack.c.l.b16 %v1687
        %v1725 = vunpack.c.l.b16 %v1688
        %v1726 = vunpack.c.l.b16 %v1689
        %v1727 = vunpack.c.l.b16 %v1690
        %v1728 = vunpack.c.l.b16 %v1691
        %v1729 = vunpack.c.l.b16 %v1692
        %v1730 = vunpack.c.l.b16 %v1693
        %v1731 = vunpack.c.l.b16 %v1694
        %v1732 = vunpack.c.l.b16 %v1695
        %v1733 = vunpack.c.l.b16 %v1696
        %v1734 = vpack.c.b16 %v1719, %v1718
        %v1735 = vpack.c.b16 %v1721, %v1720
        %v1736 = vpack.c.b16 %v1723, %v1722
        %v1737 = vpack.c.b16 %v1725, %v1724
        %v1738 = vpack.c.b16 %v1727, %v1726
        %v1739 = vpack.c.b16 %v1729, %v1728
        %v1740 = vpack.c.b16 %v1731, %v1730
        %v1741 = vpack.c.b16 %v1733, %v1732
        %1750 = vmatpush.bf16.msra.mxu0 %v1741
        %1751 = vmatpush.bf16.msra.mxu0 %v1740
        %1752 = vmatpush.bf16.msra.mxu0 %v1739
        %1753 = vmatpush.bf16.msra.mxu0 %v1738
        %1754 = vmatpush.bf16.msra.mxu0 %v1737
        %1755 = vmatpush.bf16.msra.mxu0 %v1736
        %1756 = vmatpush.bf16.msra.mxu0 %v1735
        %1757 = vmatpush.bf16.msra.mxu0 %v1734
        %1758 = vmatmul.bf16.gmra.mxu0 %v1664
        %v1759 = vpop.f32.mrf.mxu0
        %v1760 = vadd.f32 %v1700, %v1759
        %v1761 = vpop.f32.mrf.mxu0
        %v1762 = vadd.f32 %v1700, %v1761
        %1763 = vmatmul.bf16.gmra.mxu0 %v1665
        %v1764 = vpop.f32.mrf.mxu0
        %v1765 = vadd.f32 %v1700, %v1764
        %v1766 = vpop.f32.mrf.mxu0
        %v1767 = vadd.f32 %v1700, %v1766
        %1768 = vmatmul.bf16.gmra.mxu0 %v1666
        %v1769 = vpop.f32.mrf.mxu0
        %v1770 = vadd.f32 %v1700, %v1769
        %v1771 = vpop.f32.mrf.mxu0
        %v1772 = vadd.f32 %v1700, %v1771
        %1773 = vmatmul.bf16.gmra.mxu0 %v1667
        %v1774 = vpop.f32.mrf.mxu0
        %v1775 = vadd.f32 %v1700, %v1774
        %v1776 = vpop.f32.mrf.mxu0
        %v1777 = vadd.f32 %v1700, %v1776
        %1778 = vmatmul.bf16.gmra.mxu0 %v1668
        %v1779 = vpop.f32.mrf.mxu0
        %v1780 = vadd.f32 %v1700, %v1779
        %v1781 = vpop.f32.mrf.mxu0
        %v1782 = vadd.f32 %v1700, %v1781
        %1783 = vmatmul.bf16.gmra.mxu0 %v1669
        %v1784 = vpop.f32.mrf.mxu0
        %v1785 = vadd.f32 %v1700, %v1784
        %v1786 = vpop.f32.mrf.mxu0
        %v1787 = vadd.f32 %v1700, %v1786
        %1788 = vmatmul.bf16.gmra.mxu0 %v1670
        %v1789 = vpop.f32.mrf.mxu0
        %v1790 = vadd.f32 %v1700, %v1789
        %v1791 = vpop.f32.mrf.mxu0
        %v1792 = vadd.f32 %v1700, %v1791
        %1793 = vmatmul.bf16.gmra.mxu0 %v1671
        %v1794 = vpop.f32.mrf.mxu0
        %v1795 = vadd.f32 %v1700, %v1794
        %v1796 = vpop.f32.mrf.mxu0
        %v1797 = vadd.f32 %v1700, %v1796
        %1798 = vmatmul.bf16.gmra.mxu0 %v1672
        %v1799 = vpop.f32.mrf.mxu0
        %v1800 = vadd.f32 %v1700, %v1799
        %v1801 = vpop.f32.mrf.mxu0
        %v1802 = vadd.f32 %v1700, %v1801
        %1803 = vmatmul.bf16.gmra.mxu0 %v1673
        %v1804 = vpop.f32.mrf.mxu0
        %v1805 = vadd.f32 %v1700, %v1804
        %v1806 = vpop.f32.mrf.mxu0
        %v1807 = vadd.f32 %v1700, %v1806
        %1808 = vmatmul.bf16.gmra.mxu0 %v1674
        %v1809 = vpop.f32.mrf.mxu0
        %v1810 = vadd.f32 %v1700, %v1809
        %v1811 = vpop.f32.mrf.mxu0
        %v1812 = vadd.f32 %v1700, %v1811
        %1813 = vmatmul.bf16.gmra.mxu0 %v1675
        %v1814 = vpop.f32.mrf.mxu0
        %v1815 = vadd.f32 %v1700, %v1814
        %v1816 = vpop.f32.mrf.mxu0
        %v1817 = vadd.f32 %v1700, %v1816
        %1818 = vmatmul.bf16.gmra.mxu0 %v1676
        %v1819 = vpop.f32.mrf.mxu0
        %v1820 = vadd.f32 %v1700, %v1819
        %v1821 = vpop.f32.mrf.mxu0
        %v1822 = vadd.f32 %v1700, %v1821
        %1823 = vmatmul.bf16.gmra.mxu0 %v1677
        %v1824 = vpop.f32.mrf.mxu0
        %v1825 = vadd.f32 %v1700, %v1824
        %v1826 = vpop.f32.mrf.mxu0
        %v1827 = vadd.f32 %v1700, %v1826
        %1828 = vmatmul.bf16.gmra.mxu0 %v1678
        %v1829 = vpop.f32.mrf.mxu0
        %v1830 = vadd.f32 %v1700, %v1829
        %v1831 = vpop.f32.mrf.mxu0
        %v1832 = vadd.f32 %v1700, %v1831
        %1833 = vmatmul.bf16.gmra.mxu0 %v1679
        %v1834 = vpop.f32.mrf.mxu0
        %v1835 = vadd.f32 %v1700, %v1834
        %v1836 = vpop.f32.mrf.mxu0
        %v1837 = vadd.f32 %v1700, %v1836
        %1838 = vdwg.mxu0
        %v1839 = vtanh.pop %v1760
        %v1840 = vtanh.pop %v1762
        %v1841 = vtanh.pop %v1765
        %v1842 = vtanh.pop %v1767
        %v1843 = vtanh.pop %v1770
        %v1844 = vtanh.pop %v1772
        %v1845 = vtanh.pop %v1775
        %v1846 = vtanh.pop %v1777
        %v1847 = vtanh.pop %v1780
        %v1848 = vtanh.pop %v1782
        %v1849 = vtanh.pop %v1785
        %v1850 = vtanh.pop %v1787
        %v1851 = vtanh.pop %v1790
        %v1852 = vtanh.pop %v1792
        %v1853 = vtanh.pop %v1795
        %v1854 = vtanh.pop %v1797
        %v1855 = vtanh.pop %v1800
        %v1856 = vtanh.pop %v1802
        %v1857 = vtanh.pop %v1805
        %v1858 = vtanh.pop %v1807
        %v1859 = vtanh.pop %v1810
        %v1860 = vtanh.pop %v1812
        %v1861 = vtanh.pop %v1815
        %v1862 = vtanh.pop %v1817
        %v1863 = vtanh.pop %v1820
        %v1864 = vtanh.pop %v1822
        %v1865 = vtanh.pop %v1825
        %v1866 = vtanh.pop %v1827
        %v1867 = vtanh.pop %v1830
        %v1868 = vtanh.pop %v1832
        %v1869 = vtanh.pop %v1835
        %v1870 = vtanh.pop %v1837
        %v1871 = vmax.f32 %v1760, 0.0
        %v1872 = vmax.f32 %v1762, 0.0
        %v1873 = vmax.f32 %v1765, 0.0
        %v1874 = vmax.f32 %v1767, 0.0
        %v1875 = vmax.f32 %v1770, 0.0
        %v1876 = vmax.f32 %v1772, 0.0
        %v1877 = vmax.f32 %v1775, 0.0
        %v1878 = vmax.f32 %v1777, 0.0
        %v1879 = vmax.f32 %v1780, 0.0
        %v1880 = vmax.f32 %v1782, 0.0
        %v1881 = vmax.f32 %v1785, 0.0
        %v1882 = vmax.f32 %v1787, 0.0
        %v1883 = vmax.f32 %v1790, 0.0
        %v1884 = vmax.f32 %v1792, 0.0
        %v1885 = vmax.f32 %v1795, 0.0
        %v1886 = vmax.f32 %v1797, 0.0
        %v1887 = vmax.f32 %v1800, 0.0
        %v1888 = vmax.f32 %v1802, 0.0
        %v1889 = vmax.f32 %v1805, 0.0
        %v1890 = vmax.f32 %v1807, 0.0
        %v1891 = vmax.f32 %v1810, 0.0
        %v1892 = vmax.f32 %v1812, 0.0
        %v1893 = vmax.f32 %v1815, 0.0
        %v1894 = vmax.f32 %v1817, 0.0
        %v1895 = vmax.f32 %v1820, 0.0
        %v1896 = vmax.f32 %v1822, 0.0
        %v1897 = vmax.f32 %v1825, 0.0
        %v1898 = vmax.f32 %v1827, 0.0
        %v1899 = vmax.f32 %v1830, 0.0
        %v1900 = vmax.f32 %v1832, 0.0
        %v1901 = vmax.f32 %v1835, 0.0
        %v1902 = vmax.f32 %v1837, 0.0
        %v1903 = vsel %vm737, %v1839, %v1871
        %v1904 = vsel %vm737, %v1840, %v1872
        %v1905 = vsel %vm737, %v1841, %v1873
        %v1906 = vsel %vm737, %v1842, %v1874
        %v1907 = vsel %vm737, %v1843, %v1875
        %v1908 = vsel %vm737, %v1844, %v1876
        %v1909 = vsel %vm737, %v1845, %v1877
        %v1910 = vsel %vm737, %v1846, %v1878
        %v1911 = vsel %vm737, %v1847, %v1879
        %v1912 = vsel %vm737, %v1848, %v1880
        %v1913 = vsel %vm737, %v1849, %v1881
        %v1914 = vsel %vm737, %v1850, %v1882
        %v1915 = vsel %vm737, %v1851, %v1883
        %v1916 = vsel %vm737, %v1852, %v1884
        %v1917 = vsel %vm737, %v1853, %v1885
        %v1918 = vsel %vm737, %v1854, %v1886
        %v1919 = vsel %vm737, %v1855, %v1887
        %v1920 = vsel %vm737, %v1856, %v1888
        %v1921 = vsel %vm737, %v1857, %v1889
        %v1922 = vsel %vm737, %v1858, %v1890
        %v1923 = vsel %vm737, %v1859, %v1891
        %v1924 = vsel %vm737, %v1860, %v1892
        %v1925 = vsel %vm737, %v1861, %v1893
        %v1926 = vsel %vm737, %v1862, %v1894
        %v1927 = vsel %vm737, %v1863, %v1895
        %v1928 = vsel %vm737, %v1864, %v1896
        %v1929 = vsel %vm737, %v1865, %v1897
        %v1930 = vsel %vm737, %v1866, %v1898
        %v1931 = vsel %vm737, %v1867, %v1899
        %v1932 = vsel %vm737, %v1868, %v1900
        %v1933 = vsel %vm737, %v1869, %v1901
        %v1934 = vsel %vm737, %v1870, %v1902
        %v1935 = vpack.c.bf16 %v1904, %v1903
        %v1936 = vpack.c.bf16 %v1906, %v1905
        %v1937 = vpack.c.bf16 %v1908, %v1907
        %v1938 = vpack.c.bf16 %v1910, %v1909
        %v1939 = vpack.c.bf16 %v1912, %v1911
        %v1940 = vpack.c.bf16 %v1914, %v1913
        %v1941 = vpack.c.bf16 %v1916, %v1915
        %v1942 = vpack.c.bf16 %v1918, %v1917
        %v1943 = vpack.c.bf16 %v1920, %v1919
        %v1944 = vpack.c.bf16 %v1922, %v1921
        %v1945 = vpack.c.bf16 %v1924, %v1923
        %v1946 = vpack.c.bf16 %v1926, %v1925
        %v1947 = vpack.c.bf16 %v1928, %v1927
        %v1948 = vpack.c.bf16 %v1930, %v1929
        %v1949 = vpack.c.bf16 %v1932, %v1931
        %v1950 = vpack.c.bf16 %v1934, %v1933
        %s1951 = scalar_lea.vmem [#allocation10], 64
        %v1952 = vld [vmem:[%s1951] sm:$0xf]
        %v1953 = vld [vmem:[%s1951 + $0x4] sm:$0xf]
        %v1954 = vld [vmem:[%s1951 + $0x8] sm:$0xf]
        %v1955 = vld [vmem:[%s1951 + $0xc] sm:$0xf]
        %v1956 = vld [vmem:[%s1951 + $0x10] sm:$0xf]
        %v1957 = vld [vmem:[%s1951 + $0x14] sm:$0xf]
        %v1958 = vld [vmem:[%s1951 + $0x18] sm:$0xf]
        %v1959 = vld [vmem:[%s1951 + $0x1c] sm:$0xf]
        %v1960 = vld [vmem:[%s1951 + $0x20] sm:$0xf]
        %v1961 = vld [vmem:[%s1951 + $0x24] sm:$0xf]
        %v1962 = vld [vmem:[%s1951 + $0x28] sm:$0xf]
        %v1963 = vld [vmem:[%s1951 + $0x2c] sm:$0xf]
        %v1964 = vld [vmem:[%s1951 + $0x30] sm:$0xf]
        %v1965 = vld [vmem:[%s1951 + $0x34] sm:$0xf]
        %v1966 = vld [vmem:[%s1951 + $0x38] sm:$0xf]
        %v1967 = vld [vmem:[%s1951 + $0x3c] sm:$0xf]
        %s1968 = scalar_lea.vmem %s5, 1
        %v1969 = vld [vmem:[%s1968] sm:$0x1]
        %v1971 = vperm.slane %v1969, 0
        %v1989 = vunpack.c.l.b16 %v1952
        %v1990 = vunpack.c.l.b16 %v1953
        %v1991 = vunpack.c.l.b16 %v1954
        %v1992 = vunpack.c.l.b16 %v1955
        %v1993 = vunpack.c.l.b16 %v1956
        %v1994 = vunpack.c.l.b16 %v1957
        %v1995 = vunpack.c.l.b16 %v1958
        %v1996 = vunpack.c.l.b16 %v1959
        %v1997 = vunpack.c.l.b16 %v1960
        %v1998 = vunpack.c.l.b16 %v1961
        %v1999 = vunpack.c.l.b16 %v1962
        %v2000 = vunpack.c.l.b16 %v1963
        %v2001 = vunpack.c.l.b16 %v1964
        %v2002 = vunpack.c.l.b16 %v1965
        %v2003 = vunpack.c.l.b16 %v1966
        %v2004 = vunpack.c.l.b16 %v1967
        %v2005 = vpack.c.b16 %v1990, %v1989
        %v2006 = vpack.c.b16 %v1992, %v1991
        %v2007 = vpack.c.b16 %v1994, %v1993
        %v2008 = vpack.c.b16 %v1996, %v1995
        %v2009 = vpack.c.b16 %v1998, %v1997
        %v2010 = vpack.c.b16 %v2000, %v1999
        %v2011 = vpack.c.b16 %v2002, %v2001
        %v2012 = vpack.c.b16 %v2004, %v2003
        %2021 = vmatpush.bf16.msra.mxu0 %v2012
        %2022 = vmatpush.bf16.msra.mxu0 %v2011
        %2023 = vmatpush.bf16.msra.mxu0 %v2010
        %2024 = vmatpush.bf16.msra.mxu0 %v2009
        %2025 = vmatpush.bf16.msra.mxu0 %v2008
        %2026 = vmatpush.bf16.msra.mxu0 %v2007
        %2027 = vmatpush.bf16.msra.mxu0 %v2006
        %2028 = vmatpush.bf16.msra.mxu0 %v2005
        %2029 = vmatmul.bf16.gmra.mxu0 %v1935
        %v2030 = vpop.f32.mrf.mxu0
        %v2031 = vadd.f32 %v1971, %v2030
        %v2032 = vpop.f32.mrf.mxu0
        %v2033 = vadd.f32 %v1971, %v2032
        %2034 = vmatmul.bf16.gmra.mxu0 %v1936
        %v2035 = vpop.f32.mrf.mxu0
        %v2036 = vadd.f32 %v1971, %v2035
        %v2037 = vpop.f32.mrf.mxu0
        %v2038 = vadd.f32 %v1971, %v2037
        %2039 = vmatmul.bf16.gmra.mxu0 %v1937
        %v2040 = vpop.f32.mrf.mxu0
        %v2041 = vadd.f32 %v1971, %v2040
        %v2042 = vpop.f32.mrf.mxu0
        %v2043 = vadd.f32 %v1971, %v2042
        %2044 = vmatmul.bf16.gmra.mxu0 %v1938
        %v2045 = vpop.f32.mrf.mxu0
        %v2046 = vadd.f32 %v1971, %v2045
        %v2047 = vpop.f32.mrf.mxu0
        %v2048 = vadd.f32 %v1971, %v2047
        %2049 = vmatmul.bf16.gmra.mxu0 %v1939
        %v2050 = vpop.f32.mrf.mxu0
        %v2051 = vadd.f32 %v1971, %v2050
        %v2052 = vpop.f32.mrf.mxu0
        %v2053 = vadd.f32 %v1971, %v2052
        %2054 = vmatmul.bf16.gmra.mxu0 %v1940
        %v2055 = vpop.f32.mrf.mxu0
        %v2056 = vadd.f32 %v1971, %v2055
        %v2057 = vpop.f32.mrf.mxu0
        %v2058 = vadd.f32 %v1971, %v2057
        %2059 = vmatmul.bf16.gmra.mxu0 %v1941
        %v2060 = vpop.f32.mrf.mxu0
        %v2061 = vadd.f32 %v1971, %v2060
        %v2062 = vpop.f32.mrf.mxu0
        %v2063 = vadd.f32 %v1971, %v2062
        %2064 = vmatmul.bf16.gmra.mxu0 %v1942
        %v2065 = vpop.f32.mrf.mxu0
        %v2066 = vadd.f32 %v1971, %v2065
        %v2067 = vpop.f32.mrf.mxu0
        %v2068 = vadd.f32 %v1971, %v2067
        %2069 = vmatmul.bf16.gmra.mxu0 %v1943
        %v2070 = vpop.f32.mrf.mxu0
        %v2071 = vadd.f32 %v1971, %v2070
        %v2072 = vpop.f32.mrf.mxu0
        %v2073 = vadd.f32 %v1971, %v2072
        %2074 = vmatmul.bf16.gmra.mxu0 %v1944
        %v2075 = vpop.f32.mrf.mxu0
        %v2076 = vadd.f32 %v1971, %v2075
        %v2077 = vpop.f32.mrf.mxu0
        %v2078 = vadd.f32 %v1971, %v2077
        %2079 = vmatmul.bf16.gmra.mxu0 %v1945
        %v2080 = vpop.f32.mrf.mxu0
        %v2081 = vadd.f32 %v1971, %v2080
        %v2082 = vpop.f32.mrf.mxu0
        %v2083 = vadd.f32 %v1971, %v2082
        %2084 = vmatmul.bf16.gmra.mxu0 %v1946
        %v2085 = vpop.f32.mrf.mxu0
        %v2086 = vadd.f32 %v1971, %v2085
        %v2087 = vpop.f32.mrf.mxu0
        %v2088 = vadd.f32 %v1971, %v2087
        %2089 = vmatmul.bf16.gmra.mxu0 %v1947
        %v2090 = vpop.f32.mrf.mxu0
        %v2091 = vadd.f32 %v1971, %v2090
        %v2092 = vpop.f32.mrf.mxu0
        %v2093 = vadd.f32 %v1971, %v2092
        %2094 = vmatmul.bf16.gmra.mxu0 %v1948
        %v2095 = vpop.f32.mrf.mxu0
        %v2096 = vadd.f32 %v1971, %v2095
        %v2097 = vpop.f32.mrf.mxu0
        %v2098 = vadd.f32 %v1971, %v2097
        %2099 = vmatmul.bf16.gmra.mxu0 %v1949
        %v2100 = vpop.f32.mrf.mxu0
        %v2101 = vadd.f32 %v1971, %v2100
        %v2102 = vpop.f32.mrf.mxu0
        %v2103 = vadd.f32 %v1971, %v2102
        %2104 = vmatmul.bf16.gmra.mxu0 %v1950
        %v2105 = vpop.f32.mrf.mxu0
        %v2106 = vadd.f32 %v1971, %v2105
        %v2107 = vpop.f32.mrf.mxu0
        %v2108 = vadd.f32 %v1971, %v2107
        %2109 = vdwg.mxu0
        %v2110 = vtanh.pop %v2031
        %v2111 = vtanh.pop %v2033
        %v2112 = vtanh.pop %v2036
        %v2113 = vtanh.pop %v2038
        %v2114 = vtanh.pop %v2041
        %v2115 = vtanh.pop %v2043
        %v2116 = vtanh.pop %v2046
        %v2117 = vtanh.pop %v2048
        %v2118 = vtanh.pop %v2051
        %v2119 = vtanh.pop %v2053
        %v2120 = vtanh.pop %v2056
        %v2121 = vtanh.pop %v2058
        %v2122 = vtanh.pop %v2061
        %v2123 = vtanh.pop %v2063
        %v2124 = vtanh.pop %v2066
        %v2125 = vtanh.pop %v2068
        %v2126 = vtanh.pop %v2071
        %v2127 = vtanh.pop %v2073
        %v2128 = vtanh.pop %v2076
        %v2129 = vtanh.pop %v2078
        %v2130 = vtanh.pop %v2081
        %v2131 = vtanh.pop %v2083
        %v2132 = vtanh.pop %v2086
        %v2133 = vtanh.pop %v2088
        %v2134 = vtanh.pop %v2091
        %v2135 = vtanh.pop %v2093
        %v2136 = vtanh.pop %v2096
        %v2137 = vtanh.pop %v2098
        %v2138 = vtanh.pop %v2101
        %v2139 = vtanh.pop %v2103
        %v2140 = vtanh.pop %v2106
        %v2141 = vtanh.pop %v2108
        %v2142 = vmax.f32 %v2031, 0.0
        %v2143 = vmax.f32 %v2033, 0.0
        %v2144 = vmax.f32 %v2036, 0.0
        %v2145 = vmax.f32 %v2038, 0.0
        %v2146 = vmax.f32 %v2041, 0.0
        %v2147 = vmax.f32 %v2043, 0.0
        %v2148 = vmax.f32 %v2046, 0.0
        %v2149 = vmax.f32 %v2048, 0.0
        %v2150 = vmax.f32 %v2051, 0.0
        %v2151 = vmax.f32 %v2053, 0.0
        %v2152 = vmax.f32 %v2056, 0.0
        %v2153 = vmax.f32 %v2058, 0.0
        %v2154 = vmax.f32 %v2061, 0.0
        %v2155 = vmax.f32 %v2063, 0.0
        %v2156 = vmax.f32 %v2066, 0.0
        %v2157 = vmax.f32 %v2068, 0.0
        %v2158 = vmax.f32 %v2071, 0.0
        %v2159 = vmax.f32 %v2073, 0.0
        %v2160 = vmax.f32 %v2076, 0.0
        %v2161 = vmax.f32 %v2078, 0.0
        %v2162 = vmax.f32 %v2081, 0.0
        %v2163 = vmax.f32 %v2083, 0.0
        %v2164 = vmax.f32 %v2086, 0.0
        %v2165 = vmax.f32 %v2088, 0.0
        %v2166 = vmax.f32 %v2091, 0.0
        %v2167 = vmax.f32 %v2093, 0.0
        %v2168 = vmax.f32 %v2096, 0.0
        %v2169 = vmax.f32 %v2098, 0.0
        %v2170 = vmax.f32 %v2101, 0.0
        %v2171 = vmax.f32 %v2103, 0.0
        %v2172 = vmax.f32 %v2106, 0.0
        %v2173 = vmax.f32 %v2108, 0.0
        %v2174 = vsel %vm737, %v2110, %v2142
        %v2175 = vsel %vm737, %v2111, %v2143
        %v2176 = vsel %vm737, %v2112, %v2144
        %v2177 = vsel %vm737, %v2113, %v2145
        %v2178 = vsel %vm737, %v2114, %v2146
        %v2179 = vsel %vm737, %v2115, %v2147
        %v2180 = vsel %vm737, %v2116, %v2148
        %v2181 = vsel %vm737, %v2117, %v2149
        %v2182 = vsel %vm737, %v2118, %v2150
        %v2183 = vsel %vm737, %v2119, %v2151
        %v2184 = vsel %vm737, %v2120, %v2152
        %v2185 = vsel %vm737, %v2121, %v2153
        %v2186 = vsel %vm737, %v2122, %v2154
        %v2187 = vsel %vm737, %v2123, %v2155
        %v2188 = vsel %vm737, %v2124, %v2156
        %v2189 = vsel %vm737, %v2125, %v2157
        %v2190 = vsel %vm737, %v2126, %v2158
        %v2191 = vsel %vm737, %v2127, %v2159
        %v2192 = vsel %vm737, %v2128, %v2160
        %v2193 = vsel %vm737, %v2129, %v2161
        %v2194 = vsel %vm737, %v2130, %v2162
        %v2195 = vsel %vm737, %v2131, %v2163
        %v2196 = vsel %vm737, %v2132, %v2164
        %v2197 = vsel %vm737, %v2133, %v2165
        %v2198 = vsel %vm737, %v2134, %v2166
        %v2199 = vsel %vm737, %v2135, %v2167
        %v2200 = vsel %vm737, %v2136, %v2168
        %v2201 = vsel %vm737, %v2137, %v2169
        %v2202 = vsel %vm737, %v2138, %v2170
        %v2203 = vsel %vm737, %v2139, %v2171
        %v2204 = vsel %vm737, %v2140, %v2172
        %v2205 = vsel %vm737, %v2141, %v2173
        %v2206 = vpack.c.bf16 %v2175, %v2174
        %v2207 = vpack.c.bf16 %v2177, %v2176
        %v2208 = vpack.c.bf16 %v2179, %v2178
        %v2209 = vpack.c.bf16 %v2181, %v2180
        %v2210 = vpack.c.bf16 %v2183, %v2182
        %v2211 = vpack.c.bf16 %v2185, %v2184
        %v2212 = vpack.c.bf16 %v2187, %v2186
        %v2213 = vpack.c.bf16 %v2189, %v2188
        %v2214 = vpack.c.bf16 %v2191, %v2190
        %v2215 = vpack.c.bf16 %v2193, %v2192
        %v2216 = vpack.c.bf16 %v2195, %v2194
        %v2217 = vpack.c.bf16 %v2197, %v2196
        %v2218 = vpack.c.bf16 %v2199, %v2198
        %v2219 = vpack.c.bf16 %v2201, %v2200
        %v2220 = vpack.c.bf16 %v2203, %v2202
        %v2221 = vpack.c.bf16 %v2205, %v2204
        %s2222 = scalar_lea.vmem [#allocation11], 128
        %v2223 = vld [vmem:[%s2222] sm:$0xff]
        %v2224 = vld [vmem:[%s2222 + $0x8] sm:$0xff]
        %v2225 = vld [vmem:[%s2222 + $0x10] sm:$0xff]
        %v2226 = vld [vmem:[%s2222 + $0x18] sm:$0xff]
        %v2227 = vld [vmem:[%s2222 + $0x20] sm:$0xff]
        %v2228 = vld [vmem:[%s2222 + $0x28] sm:$0xff]
        %v2229 = vld [vmem:[%s2222 + $0x30] sm:$0xff]
        %v2230 = vld [vmem:[%s2222 + $0x38] sm:$0xff]
        %v2231 = vld [vmem:[%s2222 + $0x40] sm:$0xff]
        %v2232 = vld [vmem:[%s2222 + $0x48] sm:$0xff]
        %v2233 = vld [vmem:[%s2222 + $0x50] sm:$0xff]
        %v2234 = vld [vmem:[%s2222 + $0x58] sm:$0xff]
        %v2235 = vld [vmem:[%s2222 + $0x60] sm:$0xff]
        %v2236 = vld [vmem:[%s2222 + $0x68] sm:$0xff]
        %v2237 = vld [vmem:[%s2222 + $0x70] sm:$0xff]
        %v2238 = vld [vmem:[%s2222 + $0x78] sm:$0xff]
        %s2239 = scalar_lea.vmem [#allocation13], 2
        %v2240 = vld [vmem:[%s2239] sm:$0x3]
        %v2242 = vperm.slane %v2240, 0
        %v2243 = vperm.slane %v2240, 1
        %v2262 = vunpack.c.l.b16 %v2223
        %v2263 = vunpack.c.h.b16 %v2223
        %v2264 = vunpack.c.l.b16 %v2224
        %v2265 = vunpack.c.h.b16 %v2224
        %v2266 = vunpack.c.l.b16 %v2225
        %v2267 = vunpack.c.h.b16 %v2225
        %v2268 = vunpack.c.l.b16 %v2226
        %v2269 = vunpack.c.h.b16 %v2226
        %v2270 = vunpack.c.l.b16 %v2227
        %v2271 = vunpack.c.h.b16 %v2227
        %v2272 = vunpack.c.l.b16 %v2228
        %v2273 = vunpack.c.h.b16 %v2228
        %v2274 = vunpack.c.l.b16 %v2229
        %v2275 = vunpack.c.h.b16 %v2229
        %v2276 = vunpack.c.l.b16 %v2230
        %v2277 = vunpack.c.h.b16 %v2230
        %v2278 = vunpack.c.l.b16 %v2231
        %v2279 = vunpack.c.h.b16 %v2231
        %v2280 = vunpack.c.l.b16 %v2232
        %v2281 = vunpack.c.h.b16 %v2232
        %v2282 = vunpack.c.l.b16 %v2233
        %v2283 = vunpack.c.h.b16 %v2233
        %v2284 = vunpack.c.l.b16 %v2234
        %v2285 = vunpack.c.h.b16 %v2234
        %v2286 = vunpack.c.l.b16 %v2235
        %v2287 = vunpack.c.h.b16 %v2235
        %v2288 = vunpack.c.l.b16 %v2236
        %v2289 = vunpack.c.h.b16 %v2236
        %v2290 = vunpack.c.l.b16 %v2237
        %v2291 = vunpack.c.h.b16 %v2237
        %v2292 = vunpack.c.l.b16 %v2238
        %v2293 = vunpack.c.h.b16 %v2238
        %v2294 = vpack.c.b16 %v2264, %v2262
        %v2295 = vpack.c.b16 %v2265, %v2263
        %v2296 = vpack.c.b16 %v2268, %v2266
        %v2297 = vpack.c.b16 %v2269, %v2267
        %v2298 = vpack.c.b16 %v2272, %v2270
        %v2299 = vpack.c.b16 %v2273, %v2271
        %v2300 = vpack.c.b16 %v2276, %v2274
        %v2301 = vpack.c.b16 %v2277, %v2275
        %v2302 = vpack.c.b16 %v2280, %v2278
        %v2303 = vpack.c.b16 %v2281, %v2279
        %v2304 = vpack.c.b16 %v2284, %v2282
        %v2305 = vpack.c.b16 %v2285, %v2283
        %v2306 = vpack.c.b16 %v2288, %v2286
        %v2307 = vpack.c.b16 %v2289, %v2287
        %v2308 = vpack.c.b16 %v2292, %v2290
        %v2309 = vpack.c.b16 %v2293, %v2291
        %2326 = vmatpush.bf16.msra.mxu0 %v2308
        %2327 = vmatpush.bf16.msra.mxu0 %v2306
        %2328 = vmatpush.bf16.msra.mxu0 %v2304
        %2329 = vmatpush.bf16.msra.mxu0 %v2302
        %2330 = vmatpush.bf16.msra.mxu0 %v2300
        %2331 = vmatpush.bf16.msra.mxu0 %v2298
        %2332 = vmatpush.bf16.msra.mxu0 %v2296
        %2333 = vmatpush.bf16.msra.mxu0 %v2294
        %2334 = vmatmul.bf16.gmra.mxu0 %v2206
        %v2335 = vpop.f32.mrf.mxu0
        %v2336 = vadd.f32 %v2242, %v2335
        %v2337 = vpop.f32.mrf.mxu0
        %v2338 = vadd.f32 %v2242, %v2337
        %2339 = vmatmul.bf16.gmra.mxu0 %v2207
        %v2340 = vpop.f32.mrf.mxu0
        %v2341 = vadd.f32 %v2242, %v2340
        %v2342 = vpop.f32.mrf.mxu0
        %v2343 = vadd.f32 %v2242, %v2342
        %2344 = vmatmul.bf16.gmra.mxu0 %v2208
        %v2345 = vpop.f32.mrf.mxu0
        %v2346 = vadd.f32 %v2242, %v2345
        %v2347 = vpop.f32.mrf.mxu0
        %v2348 = vadd.f32 %v2242, %v2347
        %2349 = vmatmul.bf16.gmra.mxu0 %v2209
        %v2350 = vpop.f32.mrf.mxu0
        %v2351 = vadd.f32 %v2242, %v2350
        %v2352 = vpop.f32.mrf.mxu0
        %v2353 = vadd.f32 %v2242, %v2352
        %2354 = vmatmul.bf16.gmra.mxu0 %v2210
        %v2355 = vpop.f32.mrf.mxu0
        %v2356 = vadd.f32 %v2242, %v2355
        %v2357 = vpop.f32.mrf.mxu0
        %v2358 = vadd.f32 %v2242, %v2357
        %2359 = vmatmul.bf16.gmra.mxu0 %v2211
        %v2360 = vpop.f32.mrf.mxu0
        %v2361 = vadd.f32 %v2242, %v2360
        %v2362 = vpop.f32.mrf.mxu0
        %v2363 = vadd.f32 %v2242, %v2362
        %2364 = vmatmul.bf16.gmra.mxu0 %v2212
        %v2365 = vpop.f32.mrf.mxu0
        %v2366 = vadd.f32 %v2242, %v2365
        %v2367 = vpop.f32.mrf.mxu0
        %v2368 = vadd.f32 %v2242, %v2367
        %2369 = vmatmul.bf16.gmra.mxu0 %v2213
        %v2370 = vpop.f32.mrf.mxu0
        %v2371 = vadd.f32 %v2242, %v2370
        %v2372 = vpop.f32.mrf.mxu0
        %v2373 = vadd.f32 %v2242, %v2372
        %2374 = vmatmul.bf16.gmra.mxu0 %v2214
        %v2375 = vpop.f32.mrf.mxu0
        %v2376 = vadd.f32 %v2242, %v2375
        %v2377 = vpop.f32.mrf.mxu0
        %v2378 = vadd.f32 %v2242, %v2377
        %2379 = vmatmul.bf16.gmra.mxu0 %v2215
        %v2380 = vpop.f32.mrf.mxu0
        %v2381 = vadd.f32 %v2242, %v2380
        %v2382 = vpop.f32.mrf.mxu0
        %v2383 = vadd.f32 %v2242, %v2382
        %2384 = vmatmul.bf16.gmra.mxu0 %v2216
        %v2385 = vpop.f32.mrf.mxu0
        %v2386 = vadd.f32 %v2242, %v2385
        %v2387 = vpop.f32.mrf.mxu0
        %v2388 = vadd.f32 %v2242, %v2387
        %2389 = vmatmul.bf16.gmra.mxu0 %v2217
        %v2390 = vpop.f32.mrf.mxu0
        %v2391 = vadd.f32 %v2242, %v2390
        %v2392 = vpop.f32.mrf.mxu0
        %v2393 = vadd.f32 %v2242, %v2392
        %2394 = vmatmul.bf16.gmra.mxu0 %v2218
        %v2395 = vpop.f32.mrf.mxu0
        %v2396 = vadd.f32 %v2242, %v2395
        %v2397 = vpop.f32.mrf.mxu0
        %v2398 = vadd.f32 %v2242, %v2397
        %2399 = vmatmul.bf16.gmra.mxu0 %v2219
        %v2400 = vpop.f32.mrf.mxu0
        %v2401 = vadd.f32 %v2242, %v2400
        %v2402 = vpop.f32.mrf.mxu0
        %v2403 = vadd.f32 %v2242, %v2402
        %2404 = vmatmul.bf16.gmra.mxu0 %v2220
        %v2405 = vpop.f32.mrf.mxu0
        %v2406 = vadd.f32 %v2242, %v2405
        %v2407 = vpop.f32.mrf.mxu0
        %v2408 = vadd.f32 %v2242, %v2407
        %2409 = vmatmul.bf16.gmra.mxu0 %v2221
        %v2410 = vpop.f32.mrf.mxu0
        %v2411 = vadd.f32 %v2242, %v2410
        %v2412 = vpop.f32.mrf.mxu0
        %v2413 = vadd.f32 %v2242, %v2412
        %2414 = vdwg.mxu0
        %2415 = vmatpush.bf16.msra.mxu0 %v2309
        %2416 = vmatpush.bf16.msra.mxu0 %v2307
        %2417 = vmatpush.bf16.msra.mxu0 %v2305
        %2418 = vmatpush.bf16.msra.mxu0 %v2303
        %2419 = vmatpush.bf16.msra.mxu0 %v2301
        %2420 = vmatpush.bf16.msra.mxu0 %v2299
        %2421 = vmatpush.bf16.msra.mxu0 %v2297
        %2422 = vmatpush.bf16.msra.mxu0 %v2295
        %2423 = vmatmul.bf16.gmra.mxu0 %v2206
        %v2424 = vpop.f32.mrf.mxu0
        %v2425 = vadd.f32 %v2243, %v2424
        %v2426 = vpop.f32.mrf.mxu0
        %v2427 = vadd.f32 %v2243, %v2426
        %2428 = vmatmul.bf16.gmra.mxu0 %v2207
        %v2429 = vpop.f32.mrf.mxu0
        %v2430 = vadd.f32 %v2243, %v2429
        %v2431 = vpop.f32.mrf.mxu0
        %v2432 = vadd.f32 %v2243, %v2431
        %2433 = vmatmul.bf16.gmra.mxu0 %v2208
        %v2434 = vpop.f32.mrf.mxu0
        %v2435 = vadd.f32 %v2243, %v2434
        %v2436 = vpop.f32.mrf.mxu0
        %v2437 = vadd.f32 %v2243, %v2436
        %2438 = vmatmul.bf16.gmra.mxu0 %v2209
        %v2439 = vpop.f32.mrf.mxu0
        %v2440 = vadd.f32 %v2243, %v2439
        %v2441 = vpop.f32.mrf.mxu0
        %v2442 = vadd.f32 %v2243, %v2441
        %2443 = vmatmul.bf16.gmra.mxu0 %v2210
        %v2444 = vpop.f32.mrf.mxu0
        %v2445 = vadd.f32 %v2243, %v2444
        %v2446 = vpop.f32.mrf.mxu0
        %v2447 = vadd.f32 %v2243, %v2446
        %2448 = vmatmul.bf16.gmra.mxu0 %v2211
        %v2449 = vpop.f32.mrf.mxu0
        %v2450 = vadd.f32 %v2243, %v2449
        %v2451 = vpop.f32.mrf.mxu0
        %v2452 = vadd.f32 %v2243, %v2451
        %2453 = vmatmul.bf16.gmra.mxu0 %v2212
        %v2454 = vpop.f32.mrf.mxu0
        %v2455 = vadd.f32 %v2243, %v2454
        %v2456 = vpop.f32.mrf.mxu0
        %v2457 = vadd.f32 %v2243, %v2456
        %2458 = vmatmul.bf16.gmra.mxu0 %v2213
        %v2459 = vpop.f32.mrf.mxu0
        %v2460 = vadd.f32 %v2243, %v2459
        %v2461 = vpop.f32.mrf.mxu0
        %v2462 = vadd.f32 %v2243, %v2461
        %2463 = vmatmul.bf16.gmra.mxu0 %v2214
        %v2464 = vpop.f32.mrf.mxu0
        %v2465 = vadd.f32 %v2243, %v2464
        %v2466 = vpop.f32.mrf.mxu0
        %v2467 = vadd.f32 %v2243, %v2466
        %2468 = vmatmul.bf16.gmra.mxu0 %v2215
        %v2469 = vpop.f32.mrf.mxu0
        %v2470 = vadd.f32 %v2243, %v2469
        %v2471 = vpop.f32.mrf.mxu0
        %v2472 = vadd.f32 %v2243, %v2471
        %2473 = vmatmul.bf16.gmra.mxu0 %v2216
        %v2474 = vpop.f32.mrf.mxu0
        %v2475 = vadd.f32 %v2243, %v2474
        %v2476 = vpop.f32.mrf.mxu0
        %v2477 = vadd.f32 %v2243, %v2476
        %2478 = vmatmul.bf16.gmra.mxu0 %v2217
        %v2479 = vpop.f32.mrf.mxu0
        %v2480 = vadd.f32 %v2243, %v2479
        %v2481 = vpop.f32.mrf.mxu0
        %v2482 = vadd.f32 %v2243, %v2481
        %2483 = vmatmul.bf16.gmra.mxu0 %v2218
        %v2484 = vpop.f32.mrf.mxu0
        %v2485 = vadd.f32 %v2243, %v2484
        %v2486 = vpop.f32.mrf.mxu0
        %v2487 = vadd.f32 %v2243, %v2486
        %2488 = vmatmul.bf16.gmra.mxu0 %v2219
        %v2489 = vpop.f32.mrf.mxu0
        %v2490 = vadd.f32 %v2243, %v2489
        %v2491 = vpop.f32.mrf.mxu0
        %v2492 = vadd.f32 %v2243, %v2491
        %2493 = vmatmul.bf16.gmra.mxu0 %v2220
        %v2494 = vpop.f32.mrf.mxu0
        %v2495 = vadd.f32 %v2243, %v2494
        %v2496 = vpop.f32.mrf.mxu0
        %v2497 = vadd.f32 %v2243, %v2496
        %2498 = vmatmul.bf16.gmra.mxu0 %v2221
        %v2499 = vpop.f32.mrf.mxu0
        %v2500 = vadd.f32 %v2243, %v2499
        %v2501 = vpop.f32.mrf.mxu0
        %v2502 = vadd.f32 %v2243, %v2501
        %2503 = vdwg.mxu0
        %v2504 = vsub.f32 %v1530, %v2425
        %v2505 = vsub.f32 %v1531, %v2427
        %v2506 = vsub.f32 %v1532, %v2430
        %v2507 = vsub.f32 %v1533, %v2432
        %v2508 = vsub.f32 %v1534, %v2435
        %v2509 = vsub.f32 %v1535, %v2437
        %v2510 = vsub.f32 %v1536, %v2440
        %v2511 = vsub.f32 %v1537, %v2442
        %v2512 = vsub.f32 %v1538, %v2445
        %v2513 = vsub.f32 %v1539, %v2447
        %v2514 = vsub.f32 %v1540, %v2450
        %v2515 = vsub.f32 %v1541, %v2452
        %v2516 = vsub.f32 %v1542, %v2455
        %v2517 = vsub.f32 %v1543, %v2457
        %v2518 = vsub.f32 %v1544, %v2460
        %v2519 = vsub.f32 %v1545, %v2462
        %v2520 = vsub.f32 %v1546, %v2465
        %v2521 = vsub.f32 %v1547, %v2467
        %v2522 = vsub.f32 %v1548, %v2470
        %v2523 = vsub.f32 %v1549, %v2472
        %v2524 = vsub.f32 %v1550, %v2475
        %v2525 = vsub.f32 %v1551, %v2477
        %v2526 = vsub.f32 %v1552, %v2480
        %v2527 = vsub.f32 %v1553, %v2482
        %v2528 = vsub.f32 %v1554, %v2485
        %v2529 = vsub.f32 %v1555, %v2487
        %v2530 = vsub.f32 %v1556, %v2490
        %v2531 = vsub.f32 %v1557, %v2492
        %v2532 = vsub.f32 %v1558, %v2495
        %v2533 = vsub.f32 %v1559, %v2497
        %v2534 = vsub.f32 %v1560, %v2500
        %v2535 = vsub.f32 %v1561, %v2502
        %v2537 = vperm.slane %v1628, 0
        %v2539 = vmul.f32 %v2537, %v2504
        %v2540 = vmul.f32 %v2537, %v2505
        %v2541 = vmul.f32 %v2537, %v2506
        %v2542 = vmul.f32 %v2537, %v2507
        %v2543 = vmul.f32 %v2537, %v2508
        %v2544 = vmul.f32 %v2537, %v2509
        %v2545 = vmul.f32 %v2537, %v2510
        %v2546 = vmul.f32 %v2537, %v2511
        %v2547 = vmul.f32 %v2537, %v2512
        %v2548 = vmul.f32 %v2537, %v2513
        %v2549 = vmul.f32 %v2537, %v2514
        %v2550 = vmul.f32 %v2537, %v2515
        %v2551 = vmul.f32 %v2537, %v2516
        %v2552 = vmul.f32 %v2537, %v2517
        %v2553 = vmul.f32 %v2537, %v2518
        %v2554 = vmul.f32 %v2537, %v2519
        %v2555 = vmul.f32 %v2537, %v2520
        %v2556 = vmul.f32 %v2537, %v2521
        %v2557 = vmul.f32 %v2537, %v2522
        %v2558 = vmul.f32 %v2537, %v2523
        %v2559 = vmul.f32 %v2537, %v2524
        %v2560 = vmul.f32 %v2537, %v2525
        %v2561 = vmul.f32 %v2537, %v2526
        %v2562 = vmul.f32 %v2537, %v2527
        %v2563 = vmul.f32 %v2537, %v2528
        %v2564 = vmul.f32 %v2537, %v2529
        %v2565 = vmul.f32 %v2537, %v2530
        %v2566 = vmul.f32 %v2537, %v2531
        %v2567 = vmul.f32 %v2537, %v2532
        %v2568 = vmul.f32 %v2537, %v2533
        %v2569 = vmul.f32 %v2537, %v2534
        %v2570 = vmul.f32 %v2537, %v2535
        %v2571 = vsub.f32 0.0, %v2336
        %v2572 = vsub.f32 0.0, %v2338
        %v2573 = vsub.f32 0.0, %v2341
        %v2574 = vsub.f32 0.0, %v2343
        %v2575 = vsub.f32 0.0, %v2346
        %v2576 = vsub.f32 0.0, %v2348
        %v2577 = vsub.f32 0.0, %v2351
        %v2578 = vsub.f32 0.0, %v2353
        %v2579 = vsub.f32 0.0, %v2356
        %v2580 = vsub.f32 0.0, %v2358
        %v2581 = vsub.f32 0.0, %v2361
        %v2582 = vsub.f32 0.0, %v2363
        %v2583 = vsub.f32 0.0, %v2366
        %v2584 = vsub.f32 0.0, %v2368
        %v2585 = vsub.f32 0.0, %v2371
        %v2586 = vsub.f32 0.0, %v2373
        %v2587 = vsub.f32 0.0, %v2376
        %v2588 = vsub.f32 0.0, %v2378
        %v2589 = vsub.f32 0.0, %v2381
        %v2590 = vsub.f32 0.0, %v2383
        %v2591 = vsub.f32 0.0, %v2386
        %v2592 = vsub.f32 0.0, %v2388
        %v2593 = vsub.f32 0.0, %v2391
        %v2594 = vsub.f32 0.0, %v2393
        %v2595 = vsub.f32 0.0, %v2396
        %v2596 = vsub.f32 0.0, %v2398
        %v2597 = vsub.f32 0.0, %v2401
        %v2598 = vsub.f32 0.0, %v2403
        %v2599 = vsub.f32 0.0, %v2406
        %v2600 = vsub.f32 0.0, %v2408
        %v2601 = vsub.f32 0.0, %v2411
        %v2602 = vsub.f32 0.0, %v2413
        %v2603 = vmul.f32 %v2571, 1.442695
        %v2604 = vpow.pop %v2603
        %v2605 = vmul.f32 %v2572, 1.442695
        %v2606 = vpow.pop %v2605
        %v2607 = vmul.f32 %v2573, 1.442695
        %v2608 = vpow.pop %v2607
        %v2609 = vmul.f32 %v2574, 1.442695
        %v2610 = vpow.pop %v2609
        %v2611 = vmul.f32 %v2575, 1.442695
        %v2612 = vpow.pop %v2611
        %v2613 = vmul.f32 %v2576, 1.442695
        %v2614 = vpow.pop %v2613
        %v2615 = vmul.f32 %v2577, 1.442695
        %v2616 = vpow.pop %v2615
        %v2617 = vmul.f32 %v2578, 1.442695
        %v2618 = vpow.pop %v2617
        %v2619 = vmul.f32 %v2579, 1.442695
        %v2620 = vpow.pop %v2619
        %v2621 = vmul.f32 %v2580, 1.442695
        %v2622 = vpow.pop %v2621
        %v2623 = vmul.f32 %v2581, 1.442695
        %v2624 = vpow.pop %v2623
        %v2625 = vmul.f32 %v2582, 1.442695
        %v2626 = vpow.pop %v2625
        %v2627 = vmul.f32 %v2583, 1.442695
        %v2628 = vpow.pop %v2627
        %v2629 = vmul.f32 %v2584, 1.442695
        %v2630 = vpow.pop %v2629
        %v2631 = vmul.f32 %v2585, 1.442695
        %v2632 = vpow.pop %v2631
        %v2633 = vmul.f32 %v2586, 1.442695
        %v2634 = vpow.pop %v2633
        %v2635 = vmul.f32 %v2587, 1.442695
        %v2636 = vpow.pop %v2635
        %v2637 = vmul.f32 %v2588, 1.442695
        %v2638 = vpow.pop %v2637
        %v2639 = vmul.f32 %v2589, 1.442695
        %v2640 = vpow.pop %v2639
        %v2641 = vmul.f32 %v2590, 1.442695
        %v2642 = vpow.pop %v2641
        %v2643 = vmul.f32 %v2591, 1.442695
        %v2644 = vpow.pop %v2643
        %v2645 = vmul.f32 %v2592, 1.442695
        %v2646 = vpow.pop %v2645
        %v2647 = vmul.f32 %v2593, 1.442695
        %v2648 = vpow.pop %v2647
        %v2649 = vmul.f32 %v2594, 1.442695
        %v2650 = vpow.pop %v2649
        %v2651 = vmul.f32 %v2595, 1.442695
        %v2652 = vpow.pop %v2651
        %v2653 = vmul.f32 %v2596, 1.442695
        %v2654 = vpow.pop %v2653
        %v2655 = vmul.f32 %v2597, 1.442695
        %v2656 = vpow.pop %v2655
        %v2657 = vmul.f32 %v2598, 1.442695
        %v2658 = vpow.pop %v2657
        %v2659 = vmul.f32 %v2599, 1.442695
        %v2660 = vpow.pop %v2659
        %v2661 = vmul.f32 %v2600, 1.442695
        %v2662 = vpow.pop %v2661
        %v2663 = vmul.f32 %v2601, 1.442695
        %v2664 = vpow.pop %v2663
        %v2665 = vmul.f32 %v2602, 1.442695
        %v2666 = vpow.pop %v2665
        %v2667 = vmul.f32 %v2539, %v2604
        %v2668 = vmul.f32 %v2540, %v2606
        %v2669 = vmul.f32 %v2541, %v2608
        %v2670 = vmul.f32 %v2542, %v2610
        %v2671 = vmul.f32 %v2543, %v2612
        %v2672 = vmul.f32 %v2544, %v2614
        %v2673 = vmul.f32 %v2545, %v2616
        %v2674 = vmul.f32 %v2546, %v2618
        %v2675 = vmul.f32 %v2547, %v2620
        %v2676 = vmul.f32 %v2548, %v2622
        %v2677 = vmul.f32 %v2549, %v2624
        %v2678 = vmul.f32 %v2550, %v2626
        %v2679 = vmul.f32 %v2551, %v2628
        %v2680 = vmul.f32 %v2552, %v2630
        %v2681 = vmul.f32 %v2553, %v2632
        %v2682 = vmul.f32 %v2554, %v2634
        %v2683 = vmul.f32 %v2555, %v2636
        %v2684 = vmul.f32 %v2556, %v2638
        %v2685 = vmul.f32 %v2557, %v2640
        %v2686 = vmul.f32 %v2558, %v2642
        %v2687 = vmul.f32 %v2559, %v2644
        %v2688 = vmul.f32 %v2560, %v2646
        %v2689 = vmul.f32 %v2561, %v2648
        %v2690 = vmul.f32 %v2562, %v2650
        %v2691 = vmul.f32 %v2563, %v2652
        %v2692 = vmul.f32 %v2564, %v2654
        %v2693 = vmul.f32 %v2565, %v2656
        %v2694 = vmul.f32 %v2566, %v2658
        %v2695 = vmul.f32 %v2567, %v2660
        %v2696 = vmul.f32 %v2568, %v2662
        %v2697 = vmul.f32 %v2569, %v2664
        %v2698 = vmul.f32 %v2570, %v2666
        %v2699 = vadd.f32 %v1632, %v2667
        %v2700 = vadd.f32 %v1633, %v2668
        %v2701 = vadd.f32 %v1634, %v2669
        %v2702 = vadd.f32 %v1635, %v2670
        %v2703 = vadd.f32 %v1636, %v2671
        %v2704 = vadd.f32 %v1637, %v2672
        %v2705 = vadd.f32 %v1638, %v2673
        %v2706 = vadd.f32 %v1639, %v2674
        %v2707 = vadd.f32 %v1640, %v2675
        %v2708 = vadd.f32 %v1641, %v2676
        %v2709 = vadd.f32 %v1642, %v2677
        %v2710 = vadd.f32 %v1643, %v2678
        %v2711 = vadd.f32 %v1644, %v2679
        %v2712 = vadd.f32 %v1645, %v2680
        %v2713 = vadd.f32 %v1646, %v2681
        %v2714 = vadd.f32 %v1647, %v2682
        %v2715 = vadd.f32 %v1648, %v2683
        %v2716 = vadd.f32 %v1649, %v2684
        %v2717 = vadd.f32 %v1650, %v2685
        %v2718 = vadd.f32 %v1651, %v2686
        %v2719 = vadd.f32 %v1652, %v2687
        %v2720 = vadd.f32 %v1653, %v2688
        %v2721 = vadd.f32 %v1654, %v2689
        %v2722 = vadd.f32 %v1655, %v2690
        %v2723 = vadd.f32 %v1656, %v2691
        %v2724 = vadd.f32 %v1657, %v2692
        %v2725 = vadd.f32 %v1658, %v2693
        %v2726 = vadd.f32 %v1659, %v2694
        %v2727 = vadd.f32 %v1660, %v2695
        %v2728 = vadd.f32 %v1661, %v2696
        %v2729 = vadd.f32 %v1662, %v2697
        %v2730 = vadd.f32 %v1663, %v2698
        %v2731 = vmul.f32 %v2537, %v2336
        %v2732 = vmul.f32 %v2537, %v2338
        %v2733 = vmul.f32 %v2537, %v2341
        %v2734 = vmul.f32 %v2537, %v2343
        %v2735 = vmul.f32 %v2537, %v2346
        %v2736 = vmul.f32 %v2537, %v2348
        %v2737 = vmul.f32 %v2537, %v2351
        %v2738 = vmul.f32 %v2537, %v2353
        %v2739 = vmul.f32 %v2537, %v2356
        %v2740 = vmul.f32 %v2537, %v2358
        %v2741 = vmul.f32 %v2537, %v2361
        %v2742 = vmul.f32 %v2537, %v2363
        %v2743 = vmul.f32 %v2537, %v2366
        %v2744 = vmul.f32 %v2537, %v2368
        %v2745 = vmul.f32 %v2537, %v2371
        %v2746 = vmul.f32 %v2537, %v2373
        %v2747 = vmul.f32 %v2537, %v2376
        %v2748 = vmul.f32 %v2537, %v2378
        %v2749 = vmul.f32 %v2537, %v2381
        %v2750 = vmul.f32 %v2537, %v2383
        %v2751 = vmul.f32 %v2537, %v2386
        %v2752 = vmul.f32 %v2537, %v2388
        %v2753 = vmul.f32 %v2537, %v2391
        %v2754 = vmul.f32 %v2537, %v2393
        %v2755 = vmul.f32 %v2537, %v2396
        %v2756 = vmul.f32 %v2537, %v2398
        %v2757 = vmul.f32 %v2537, %v2401
        %v2758 = vmul.f32 %v2537, %v2403
        %v2759 = vmul.f32 %v2537, %v2406
        %v2760 = vmul.f32 %v2537, %v2408
        %v2761 = vmul.f32 %v2537, %v2411
        %v2762 = vmul.f32 %v2537, %v2413
        %v2763 = vsub.f32 %v1594, %v2731
        %v2764 = vsub.f32 %v1595, %v2732
        %v2765 = vsub.f32 %v1596, %v2733
        %v2766 = vsub.f32 %v1597, %v2734
        %v2767 = vsub.f32 %v1598, %v2735
        %v2768 = vsub.f32 %v1599, %v2736
        %v2769 = vsub.f32 %v1600, %v2737
        %v2770 = vsub.f32 %v1601, %v2738
        %v2771 = vsub.f32 %v1602, %v2739
        %v2772 = vsub.f32 %v1603, %v2740
        %v2773 = vsub.f32 %v1604, %v2741
        %v2774 = vsub.f32 %v1605, %v2742
        %v2775 = vsub.f32 %v1606, %v2743
        %v2776 = vsub.f32 %v1607, %v2744
        %v2777 = vsub.f32 %v1608, %v2745
        %v2778 = vsub.f32 %v1609, %v2746
        %v2779 = vsub.f32 %v1610, %v2747
        %v2780 = vsub.f32 %v1611, %v2748
        %v2781 = vsub.f32 %v1612, %v2749
        %v2782 = vsub.f32 %v1613, %v2750
        %v2783 = vsub.f32 %v1614, %v2751
        %v2784 = vsub.f32 %v1615, %v2752
        %v2785 = vsub.f32 %v1616, %v2753
        %v2786 = vsub.f32 %v1617, %v2754
        %v2787 = vsub.f32 %v1618, %v2755
        %v2788 = vsub.f32 %v1619, %v2756
        %v2789 = vsub.f32 %v1620, %v2757
        %v2790 = vsub.f32 %v1621, %v2758
        %v2791 = vsub.f32 %v1622, %v2759
        %v2792 = vsub.f32 %v1623, %v2760
        %v2793 = vsub.f32 %v1624, %v2761
        %v2794 = vsub.f32 %v1625, %v2762
        %s2795 = scalar_lea.vmem [#allocation5], 2
        %v2796 = vld [vmem:[%s2795] sm:$0x1]
        %v2797 = vsub.f32 1.0, %v2796
        %v2799 = vperm.slane %v2796, 0
        %v2801 = vmul.f32 %v2699, %v2799
        %v2802 = vmul.f32 %v2700, %v2799
        %v2803 = vmul.f32 %v2701, %v2799
        %v2804 = vmul.f32 %v2702, %v2799
        %v2805 = vmul.f32 %v2703, %v2799
        %v2806 = vmul.f32 %v2704, %v2799
        %v2807 = vmul.f32 %v2705, %v2799
        %v2808 = vmul.f32 %v2706, %v2799
        %v2809 = vmul.f32 %v2707, %v2799
        %v2810 = vmul.f32 %v2708, %v2799
        %v2811 = vmul.f32 %v2709, %v2799
        %v2812 = vmul.f32 %v2710, %v2799
        %v2813 = vmul.f32 %v2711, %v2799
        %v2814 = vmul.f32 %v2712, %v2799
        %v2815 = vmul.f32 %v2713, %v2799
        %v2816 = vmul.f32 %v2714, %v2799
        %v2817 = vmul.f32 %v2715, %v2799
        %v2818 = vmul.f32 %v2716, %v2799
        %v2819 = vmul.f32 %v2717, %v2799
        %v2820 = vmul.f32 %v2718, %v2799
        %v2821 = vmul.f32 %v2719, %v2799
        %v2822 = vmul.f32 %v2720, %v2799
        %v2823 = vmul.f32 %v2721, %v2799
        %v2824 = vmul.f32 %v2722, %v2799
        %v2825 = vmul.f32 %v2723, %v2799
        %v2826 = vmul.f32 %v2724, %v2799
        %v2827 = vmul.f32 %v2725, %v2799
        %v2828 = vmul.f32 %v2726, %v2799
        %v2829 = vmul.f32 %v2727, %v2799
        %v2830 = vmul.f32 %v2728, %v2799
        %v2831 = vmul.f32 %v2729, %v2799
        %v2832 = vmul.f32 %v2730, %v2799
        %v2833 = vpack.c.bf16 %v2802, %v2801
        %v2834 = vpack.c.bf16 %v2804, %v2803
        %v2835 = vpack.c.bf16 %v2806, %v2805
        %v2836 = vpack.c.bf16 %v2808, %v2807
        %v2837 = vpack.c.bf16 %v2810, %v2809
        %v2838 = vpack.c.bf16 %v2812, %v2811
        %v2839 = vpack.c.bf16 %v2814, %v2813
        %v2840 = vpack.c.bf16 %v2816, %v2815
        %v2841 = vpack.c.bf16 %v2818, %v2817
        %v2842 = vpack.c.bf16 %v2820, %v2819
        %v2843 = vpack.c.bf16 %v2822, %v2821
        %v2844 = vpack.c.bf16 %v2824, %v2823
        %v2845 = vpack.c.bf16 %v2826, %v2825
        %v2846 = vpack.c.bf16 %v2828, %v2827
        %v2847 = vpack.c.bf16 %v2830, %v2829
        %v2848 = vpack.c.bf16 %v2832, %v2831
        %s2849 = scalar_lea.vmem [#allocation7], 128
        %v2850 = vld [vmem:[%s2849] sm:$0xf]
        %v2851 = vld [vmem:[%s2849 + $0x4] sm:$0xf]
        %v2852 = vld [vmem:[%s2849 + $0x8] sm:$0xf]
        %v2853 = vld [vmem:[%s2849 + $0xc] sm:$0xf]
        %v2854 = vld [vmem:[%s2849 + $0x10] sm:$0xf]
        %v2855 = vld [vmem:[%s2849 + $0x14] sm:$0xf]
        %v2856 = vld [vmem:[%s2849 + $0x18] sm:$0xf]
        %v2857 = vld [vmem:[%s2849 + $0x1c] sm:$0xf]
        %v2858 = vld [vmem:[%s2849 + $0x20] sm:$0xf]
        %v2859 = vld [vmem:[%s2849 + $0x24] sm:$0xf]
        %v2860 = vld [vmem:[%s2849 + $0x28] sm:$0xf]
        %v2861 = vld [vmem:[%s2849 + $0x2c] sm:$0xf]
        %v2862 = vld [vmem:[%s2849 + $0x30] sm:$0xf]
        %v2863 = vld [vmem:[%s2849 + $0x34] sm:$0xf]
        %v2864 = vld [vmem:[%s2849 + $0x38] sm:$0xf]
        %v2865 = vld [vmem:[%s2849 + $0x3c] sm:$0xf]
        %s2866 = scalar_lea.vmem [#allocation8], 2
        %v2867 = vld [vmem:[%s2866] sm:$0x1]
        %v2869 = vperm.slane %v2867, 0
        %v2887 = vunpack.c.l.b16 %v2850
        %v2888 = vunpack.c.l.b16 %v2851
        %v2889 = vunpack.c.l.b16 %v2852
        %v2890 = vunpack.c.l.b16 %v2853
        %v2891 = vunpack.c.l.b16 %v2854
        %v2892 = vunpack.c.l.b16 %v2855
        %v2893 = vunpack.c.l.b16 %v2856
        %v2894 = vunpack.c.l.b16 %v2857
        %v2895 = vunpack.c.l.b16 %v2858
        %v2896 = vunpack.c.l.b16 %v2859
        %v2897 = vunpack.c.l.b16 %v2860
        %v2898 = vunpack.c.l.b16 %v2861
        %v2899 = vunpack.c.l.b16 %v2862
        %v2900 = vunpack.c.l.b16 %v2863
        %v2901 = vunpack.c.l.b16 %v2864
        %v2902 = vunpack.c.l.b16 %v2865
        %v2903 = vpack.c.b16 %v2888, %v2887
        %v2904 = vpack.c.b16 %v2890, %v2889
        %v2905 = vpack.c.b16 %v2892, %v2891
        %v2906 = vpack.c.b16 %v2894, %v2893
        %v2907 = vpack.c.b16 %v2896, %v2895
        %v2908 = vpack.c.b16 %v2898, %v2897
        %v2909 = vpack.c.b16 %v2900, %v2899
        %v2910 = vpack.c.b16 %v2902, %v2901
        %2919 = vmatpush.bf16.msra.mxu0 %v2910
        %2920 = vmatpush.bf16.msra.mxu0 %v2909
        %2921 = vmatpush.bf16.msra.mxu0 %v2908
        %2922 = vmatpush.bf16.msra.mxu0 %v2907
        %2923 = vmatpush.bf16.msra.mxu0 %v2906
        %2924 = vmatpush.bf16.msra.mxu0 %v2905
        %2925 = vmatpush.bf16.msra.mxu0 %v2904
        %2926 = vmatpush.bf16.msra.mxu0 %v2903
        %2927 = vmatmul.bf16.gmra.mxu0 %v2833
        %v2928 = vpop.f32.mrf.mxu0
        %v2929 = vadd.f32 %v2869, %v2928
        %v2930 = vpop.f32.mrf.mxu0
        %v2931 = vadd.f32 %v2869, %v2930
        %2932 = vmatmul.bf16.gmra.mxu0 %v2834
        %v2933 = vpop.f32.mrf.mxu0
        %v2934 = vadd.f32 %v2869, %v2933
        %v2935 = vpop.f32.mrf.mxu0
        %v2936 = vadd.f32 %v2869, %v2935
        %2937 = vmatmul.bf16.gmra.mxu0 %v2835
        %v2938 = vpop.f32.mrf.mxu0
        %v2939 = vadd.f32 %v2869, %v2938
        %v2940 = vpop.f32.mrf.mxu0
        %v2941 = vadd.f32 %v2869, %v2940
        %2942 = vmatmul.bf16.gmra.mxu0 %v2836
        %v2943 = vpop.f32.mrf.mxu0
        %v2944 = vadd.f32 %v2869, %v2943
        %v2945 = vpop.f32.mrf.mxu0
        %v2946 = vadd.f32 %v2869, %v2945
        %2947 = vmatmul.bf16.gmra.mxu0 %v2837
        %v2948 = vpop.f32.mrf.mxu0
        %v2949 = vadd.f32 %v2869, %v2948
        %v2950 = vpop.f32.mrf.mxu0
        %v2951 = vadd.f32 %v2869, %v2950
        %2952 = vmatmul.bf16.gmra.mxu0 %v2838
        %v2953 = vpop.f32.mrf.mxu0
        %v2954 = vadd.f32 %v2869, %v2953
        %v2955 = vpop.f32.mrf.mxu0
        %v2956 = vadd.f32 %v2869, %v2955
        %2957 = vmatmul.bf16.gmra.mxu0 %v2839
        %v2958 = vpop.f32.mrf.mxu0
        %v2959 = vadd.f32 %v2869, %v2958
        %v2960 = vpop.f32.mrf.mxu0
        %v2961 = vadd.f32 %v2869, %v2960
        %2962 = vmatmul.bf16.gmra.mxu0 %v2840
        %v2963 = vpop.f32.mrf.mxu0
        %v2964 = vadd.f32 %v2869, %v2963
        %v2965 = vpop.f32.mrf.mxu0
        %v2966 = vadd.f32 %v2869, %v2965
        %2967 = vmatmul.bf16.gmra.mxu0 %v2841
        %v2968 = vpop.f32.mrf.mxu0
        %v2969 = vadd.f32 %v2869, %v2968
        %v2970 = vpop.f32.mrf.mxu0
        %v2971 = vadd.f32 %v2869, %v2970
        %2972 = vmatmul.bf16.gmra.mxu0 %v2842
        %v2973 = vpop.f32.mrf.mxu0
        %v2974 = vadd.f32 %v2869, %v2973
        %v2975 = vpop.f32.mrf.mxu0
        %v2976 = vadd.f32 %v2869, %v2975
        %2977 = vmatmul.bf16.gmra.mxu0 %v2843
        %v2978 = vpop.f32.mrf.mxu0
        %v2979 = vadd.f32 %v2869, %v2978
        %v2980 = vpop.f32.mrf.mxu0
        %v2981 = vadd.f32 %v2869, %v2980
        %2982 = vmatmul.bf16.gmra.mxu0 %v2844
        %v2983 = vpop.f32.mrf.mxu0
        %v2984 = vadd.f32 %v2869, %v2983
        %v2985 = vpop.f32.mrf.mxu0
        %v2986 = vadd.f32 %v2869, %v2985
        %2987 = vmatmul.bf16.gmra.mxu0 %v2845
        %v2988 = vpop.f32.mrf.mxu0
        %v2989 = vadd.f32 %v2869, %v2988
        %v2990 = vpop.f32.mrf.mxu0
        %v2991 = vadd.f32 %v2869, %v2990
        %2992 = vmatmul.bf16.gmra.mxu0 %v2846
        %v2993 = vpop.f32.mrf.mxu0
        %v2994 = vadd.f32 %v2869, %v2993
        %v2995 = vpop.f32.mrf.mxu0
        %v2996 = vadd.f32 %v2869, %v2995
        %2997 = vmatmul.bf16.gmra.mxu0 %v2847
        %v2998 = vpop.f32.mrf.mxu0
        %v2999 = vadd.f32 %v2869, %v2998
        %v3000 = vpop.f32.mrf.mxu0
        %v3001 = vadd.f32 %v2869, %v3000
        %3002 = vmatmul.bf16.gmra.mxu0 %v2848
        %v3003 = vpop.f32.mrf.mxu0
        %v3004 = vadd.f32 %v2869, %v3003
        %v3005 = vpop.f32.mrf.mxu0
        %v3006 = vadd.f32 %v2869, %v3005
        %3007 = vdwg.mxu0
        %v3008 = vtanh.pop %v2929
        %v3009 = vtanh.pop %v2931
        %v3010 = vtanh.pop %v2934
        %v3011 = vtanh.pop %v2936
        %v3012 = vtanh.pop %v2939
        %v3013 = vtanh.pop %v2941
        %v3014 = vtanh.pop %v2944
        %v3015 = vtanh.pop %v2946
        %v3016 = vtanh.pop %v2949
        %v3017 = vtanh.pop %v2951
        %v3018 = vtanh.pop %v2954
        %v3019 = vtanh.pop %v2956
        %v3020 = vtanh.pop %v2959
        %v3021 = vtanh.pop %v2961
        %v3022 = vtanh.pop %v2964
        %v3023 = vtanh.pop %v2966
        %v3024 = vtanh.pop %v2969
        %v3025 = vtanh.pop %v2971
        %v3026 = vtanh.pop %v2974
        %v3027 = vtanh.pop %v2976
        %v3028 = vtanh.pop %v2979
        %v3029 = vtanh.pop %v2981
        %v3030 = vtanh.pop %v2984
        %v3031 = vtanh.pop %v2986
        %v3032 = vtanh.pop %v2989
        %v3033 = vtanh.pop %v2991
        %v3034 = vtanh.pop %v2994
        %v3035 = vtanh.pop %v2996
        %v3036 = vtanh.pop %v2999
        %v3037 = vtanh.pop %v3001
        %v3038 = vtanh.pop %v3004
        %v3039 = vtanh.pop %v3006
        %v3040 = vmax.f32 %v2929, 0.0
        %v3041 = vmax.f32 %v2931, 0.0
        %v3042 = vmax.f32 %v2934, 0.0
        %v3043 = vmax.f32 %v2936, 0.0
        %v3044 = vmax.f32 %v2939, 0.0
        %v3045 = vmax.f32 %v2941, 0.0
        %v3046 = vmax.f32 %v2944, 0.0
        %v3047 = vmax.f32 %v2946, 0.0
        %v3048 = vmax.f32 %v2949, 0.0
        %v3049 = vmax.f32 %v2951, 0.0
        %v3050 = vmax.f32 %v2954, 0.0
        %v3051 = vmax.f32 %v2956, 0.0
        %v3052 = vmax.f32 %v2959, 0.0
        %v3053 = vmax.f32 %v2961, 0.0
        %v3054 = vmax.f32 %v2964, 0.0
        %v3055 = vmax.f32 %v2966, 0.0
        %v3056 = vmax.f32 %v2969, 0.0
        %v3057 = vmax.f32 %v2971, 0.0
        %v3058 = vmax.f32 %v2974, 0.0
        %v3059 = vmax.f32 %v2976, 0.0
        %v3060 = vmax.f32 %v2979, 0.0
        %v3061 = vmax.f32 %v2981, 0.0
        %v3062 = vmax.f32 %v2984, 0.0
        %v3063 = vmax.f32 %v2986, 0.0
        %v3064 = vmax.f32 %v2989, 0.0
        %v3065 = vmax.f32 %v2991, 0.0
        %v3066 = vmax.f32 %v2994, 0.0
        %v3067 = vmax.f32 %v2996, 0.0
        %v3068 = vmax.f32 %v2999, 0.0
        %v3069 = vmax.f32 %v3001, 0.0
        %v3070 = vmax.f32 %v3004, 0.0
        %v3071 = vmax.f32 %v3006, 0.0
        %v3072 = vsel %vm737, %v3008, %v3040
        %v3073 = vsel %vm737, %v3009, %v3041
        %v3074 = vsel %vm737, %v3010, %v3042
        %v3075 = vsel %vm737, %v3011, %v3043
        %v3076 = vsel %vm737, %v3012, %v3044
        %v3077 = vsel %vm737, %v3013, %v3045
        %v3078 = vsel %vm737, %v3014, %v3046
        %v3079 = vsel %vm737, %v3015, %v3047
        %v3080 = vsel %vm737, %v3016, %v3048
        %v3081 = vsel %vm737, %v3017, %v3049
        %v3082 = vsel %vm737, %v3018, %v3050
        %v3083 = vsel %vm737, %v3019, %v3051
        %v3084 = vsel %vm737, %v3020, %v3052
        %v3085 = vsel %vm737, %v3021, %v3053
        %v3086 = vsel %vm737, %v3022, %v3054
        %v3087 = vsel %vm737, %v3023, %v3055
        %v3088 = vsel %vm737, %v3024, %v3056
        %v3089 = vsel %vm737, %v3025, %v3057
        %v3090 = vsel %vm737, %v3026, %v3058
        %v3091 = vsel %vm737, %v3027, %v3059
        %v3092 = vsel %vm737, %v3028, %v3060
        %v3093 = vsel %vm737, %v3029, %v3061
        %v3094 = vsel %vm737, %v3030, %v3062
        %v3095 = vsel %vm737, %v3031, %v3063
        %v3096 = vsel %vm737, %v3032, %v3064
        %v3097 = vsel %vm737, %v3033, %v3065
        %v3098 = vsel %vm737, %v3034, %v3066
        %v3099 = vsel %vm737, %v3035, %v3067
        %v3100 = vsel %vm737, %v3036, %v3068
        %v3101 = vsel %vm737, %v3037, %v3069
        %v3102 = vsel %vm737, %v3038, %v3070
        %v3103 = vsel %vm737, %v3039, %v3071
        %v3104 = vpack.c.bf16 %v3073, %v3072
        %v3105 = vpack.c.bf16 %v3075, %v3074
        %v3106 = vpack.c.bf16 %v3077, %v3076
        %v3107 = vpack.c.bf16 %v3079, %v3078
        %v3108 = vpack.c.bf16 %v3081, %v3080
        %v3109 = vpack.c.bf16 %v3083, %v3082
        %v3110 = vpack.c.bf16 %v3085, %v3084
        %v3111 = vpack.c.bf16 %v3087, %v3086
        %v3112 = vpack.c.bf16 %v3089, %v3088
        %v3113 = vpack.c.bf16 %v3091, %v3090
        %v3114 = vpack.c.bf16 %v3093, %v3092
        %v3115 = vpack.c.bf16 %v3095, %v3094
        %v3116 = vpack.c.bf16 %v3097, %v3096
        %v3117 = vpack.c.bf16 %v3099, %v3098
        %v3118 = vpack.c.bf16 %v3101, %v3100
        %v3119 = vpack.c.bf16 %v3103, %v3102
        %s3120 = scalar_lea.vmem [#allocation10], 128
        %v3121 = vld [vmem:[%s3120] sm:$0xf]
        %v3122 = vld [vmem:[%s3120 + $0x4] sm:$0xf]
        %v3123 = vld [vmem:[%s3120 + $0x8] sm:$0xf]
        %v3124 = vld [vmem:[%s3120 + $0xc] sm:$0xf]
        %v3125 = vld [vmem:[%s3120 + $0x10] sm:$0xf]
        %v3126 = vld [vmem:[%s3120 + $0x14] sm:$0xf]
        %v3127 = vld [vmem:[%s3120 + $0x18] sm:$0xf]
        %v3128 = vld [vmem:[%s3120 + $0x1c] sm:$0xf]
        %v3129 = vld [vmem:[%s3120 + $0x20] sm:$0xf]
        %v3130 = vld [vmem:[%s3120 + $0x24] sm:$0xf]
        %v3131 = vld [vmem:[%s3120 + $0x28] sm:$0xf]
        %v3132 = vld [vmem:[%s3120 + $0x2c] sm:$0xf]
        %v3133 = vld [vmem:[%s3120 + $0x30] sm:$0xf]
        %v3134 = vld [vmem:[%s3120 + $0x34] sm:$0xf]
        %v3135 = vld [vmem:[%s3120 + $0x38] sm:$0xf]
        %v3136 = vld [vmem:[%s3120 + $0x3c] sm:$0xf]
        %s3137 = scalar_lea.vmem %s5, 2
        %v3138 = vld [vmem:[%s3137] sm:$0x1]
        %v3140 = vperm.slane %v3138, 0
        %v3158 = vunpack.c.l.b16 %v3121
        %v3159 = vunpack.c.l.b16 %v3122
        %v3160 = vunpack.c.l.b16 %v3123
        %v3161 = vunpack.c.l.b16 %v3124
        %v3162 = vunpack.c.l.b16 %v3125
        %v3163 = vunpack.c.l.b16 %v3126
        %v3164 = vunpack.c.l.b16 %v3127
        %v3165 = vunpack.c.l.b16 %v3128
        %v3166 = vunpack.c.l.b16 %v3129
        %v3167 = vunpack.c.l.b16 %v3130
        %v3168 = vunpack.c.l.b16 %v3131
        %v3169 = vunpack.c.l.b16 %v3132
        %v3170 = vunpack.c.l.b16 %v3133
        %v3171 = vunpack.c.l.b16 %v3134
        %v3172 = vunpack.c.l.b16 %v3135
        %v3173 = vunpack.c.l.b16 %v3136
        %v3174 = vpack.c.b16 %v3159, %v3158
        %v3175 = vpack.c.b16 %v3161, %v3160
        %v3176 = vpack.c.b16 %v3163, %v3162
        %v3177 = vpack.c.b16 %v3165, %v3164
        %v3178 = vpack.c.b16 %v3167, %v3166
        %v3179 = vpack.c.b16 %v3169, %v3168
        %v3180 = vpack.c.b16 %v3171, %v3170
        %v3181 = vpack.c.b16 %v3173, %v3172
        %3190 = vmatpush.bf16.msra.mxu0 %v3181
        %3191 = vmatpush.bf16.msra.mxu0 %v3180
        %3192 = vmatpush.bf16.msra.mxu0 %v3179
        %3193 = vmatpush.bf16.msra.mxu0 %v3178
        %3194 = vmatpush.bf16.msra.mxu0 %v3177
        %3195 = vmatpush.bf16.msra.mxu0 %v3176
        %3196 = vmatpush.bf16.msra.mxu0 %v3175
        %3197 = vmatpush.bf16.msra.mxu0 %v3174
        %3198 = vmatmul.bf16.gmra.mxu0 %v3104
        %v3199 = vpop.f32.mrf.mxu0
        %v3200 = vadd.f32 %v3140, %v3199
        %v3201 = vpop.f32.mrf.mxu0
        %v3202 = vadd.f32 %v3140, %v3201
        %3203 = vmatmul.bf16.gmra.mxu0 %v3105
        %v3204 = vpop.f32.mrf.mxu0
        %v3205 = vadd.f32 %v3140, %v3204
        %v3206 = vpop.f32.mrf.mxu0
        %v3207 = vadd.f32 %v3140, %v3206
        %3208 = vmatmul.bf16.gmra.mxu0 %v3106
        %v3209 = vpop.f32.mrf.mxu0
        %v3210 = vadd.f32 %v3140, %v3209
        %v3211 = vpop.f32.mrf.mxu0
        %v3212 = vadd.f32 %v3140, %v3211
        %3213 = vmatmul.bf16.gmra.mxu0 %v3107
        %v3214 = vpop.f32.mrf.mxu0
        %v3215 = vadd.f32 %v3140, %v3214
        %v3216 = vpop.f32.mrf.mxu0
        %v3217 = vadd.f32 %v3140, %v3216
        %3218 = vmatmul.bf16.gmra.mxu0 %v3108
        %v3219 = vpop.f32.mrf.mxu0
        %v3220 = vadd.f32 %v3140, %v3219
        %v3221 = vpop.f32.mrf.mxu0
        %v3222 = vadd.f32 %v3140, %v3221
        %3223 = vmatmul.bf16.gmra.mxu0 %v3109
        %v3224 = vpop.f32.mrf.mxu0
        %v3225 = vadd.f32 %v3140, %v3224
        %v3226 = vpop.f32.mrf.mxu0
        %v3227 = vadd.f32 %v3140, %v3226
        %3228 = vmatmul.bf16.gmra.mxu0 %v3110
        %v3229 = vpop.f32.mrf.mxu0
        %v3230 = vadd.f32 %v3140, %v3229
        %v3231 = vpop.f32.mrf.mxu0
        %v3232 = vadd.f32 %v3140, %v3231
        %3233 = vmatmul.bf16.gmra.mxu0 %v3111
        %v3234 = vpop.f32.mrf.mxu0
        %v3235 = vadd.f32 %v3140, %v3234
        %v3236 = vpop.f32.mrf.mxu0
        %v3237 = vadd.f32 %v3140, %v3236
        %3238 = vmatmul.bf16.gmra.mxu0 %v3112
        %v3239 = vpop.f32.mrf.mxu0
        %v3240 = vadd.f32 %v3140, %v3239
        %v3241 = vpop.f32.mrf.mxu0
        %v3242 = vadd.f32 %v3140, %v3241
        %3243 = vmatmul.bf16.gmra.mxu0 %v3113
        %v3244 = vpop.f32.mrf.mxu0
        %v3245 = vadd.f32 %v3140, %v3244
        %v3246 = vpop.f32.mrf.mxu0
        %v3247 = vadd.f32 %v3140, %v3246
        %3248 = vmatmul.bf16.gmra.mxu0 %v3114
        %v3249 = vpop.f32.mrf.mxu0
        %v3250 = vadd.f32 %v3140, %v3249
        %v3251 = vpop.f32.mrf.mxu0
        %v3252 = vadd.f32 %v3140, %v3251
        %3253 = vmatmul.bf16.gmra.mxu0 %v3115
        %v3254 = vpop.f32.mrf.mxu0
        %v3255 = vadd.f32 %v3140, %v3254
        %v3256 = vpop.f32.mrf.mxu0
        %v3257 = vadd.f32 %v3140, %v3256
        %3258 = vmatmul.bf16.gmra.mxu0 %v3116
        %v3259 = vpop.f32.mrf.mxu0
        %v3260 = vadd.f32 %v3140, %v3259
        %v3261 = vpop.f32.mrf.mxu0
        %v3262 = vadd.f32 %v3140, %v3261
        %3263 = vmatmul.bf16.gmra.mxu0 %v3117
        %v3264 = vpop.f32.mrf.mxu0
        %v3265 = vadd.f32 %v3140, %v3264
        %v3266 = vpop.f32.mrf.mxu0
        %v3267 = vadd.f32 %v3140, %v3266
        %3268 = vmatmul.bf16.gmra.mxu0 %v3118
        %v3269 = vpop.f32.mrf.mxu0
        %v3270 = vadd.f32 %v3140, %v3269
        %v3271 = vpop.f32.mrf.mxu0
        %v3272 = vadd.f32 %v3140, %v3271
        %3273 = vmatmul.bf16.gmra.mxu0 %v3119
        %v3274 = vpop.f32.mrf.mxu0
        %v3275 = vadd.f32 %v3140, %v3274
        %v3276 = vpop.f32.mrf.mxu0
        %v3277 = vadd.f32 %v3140, %v3276
        %3278 = vdwg.mxu0
        %v3279 = vtanh.pop %v3200
        %v3280 = vtanh.pop %v3202
        %v3281 = vtanh.pop %v3205
        %v3282 = vtanh.pop %v3207
        %v3283 = vtanh.pop %v3210
        %v3284 = vtanh.pop %v3212
        %v3285 = vtanh.pop %v3215
        %v3286 = vtanh.pop %v3217
        %v3287 = vtanh.pop %v3220
        %v3288 = vtanh.pop %v3222
        %v3289 = vtanh.pop %v3225
        %v3290 = vtanh.pop %v3227
        %v3291 = vtanh.pop %v3230
        %v3292 = vtanh.pop %v3232
        %v3293 = vtanh.pop %v3235
        %v3294 = vtanh.pop %v3237
        %v3295 = vtanh.pop %v3240
        %v3296 = vtanh.pop %v3242
        %v3297 = vtanh.pop %v3245
        %v3298 = vtanh.pop %v3247
        %v3299 = vtanh.pop %v3250
        %v3300 = vtanh.pop %v3252
        %v3301 = vtanh.pop %v3255
        %v3302 = vtanh.pop %v3257
        %v3303 = vtanh.pop %v3260
        %v3304 = vtanh.pop %v3262
        %v3305 = vtanh.pop %v3265
        %v3306 = vtanh.pop %v3267
        %v3307 = vtanh.pop %v3270
        %v3308 = vtanh.pop %v3272
        %v3309 = vtanh.pop %v3275
        %v3310 = vtanh.pop %v3277
        %v3311 = vmax.f32 %v3200, 0.0
        %v3312 = vmax.f32 %v3202, 0.0
        %v3313 = vmax.f32 %v3205, 0.0
        %v3314 = vmax.f32 %v3207, 0.0
        %v3315 = vmax.f32 %v3210, 0.0
        %v3316 = vmax.f32 %v3212, 0.0
        %v3317 = vmax.f32 %v3215, 0.0
        %v3318 = vmax.f32 %v3217, 0.0
        %v3319 = vmax.f32 %v3220, 0.0
        %v3320 = vmax.f32 %v3222, 0.0
        %v3321 = vmax.f32 %v3225, 0.0
        %v3322 = vmax.f32 %v3227, 0.0
        %v3323 = vmax.f32 %v3230, 0.0
        %v3324 = vmax.f32 %v3232, 0.0
        %v3325 = vmax.f32 %v3235, 0.0
        %v3326 = vmax.f32 %v3237, 0.0
        %v3327 = vmax.f32 %v3240, 0.0
        %v3328 = vmax.f32 %v3242, 0.0
        %v3329 = vmax.f32 %v3245, 0.0
        %v3330 = vmax.f32 %v3247, 0.0
        %v3331 = vmax.f32 %v3250, 0.0
        %v3332 = vmax.f32 %v3252, 0.0
        %v3333 = vmax.f32 %v3255, 0.0
        %v3334 = vmax.f32 %v3257, 0.0
        %v3335 = vmax.f32 %v3260, 0.0
        %v3336 = vmax.f32 %v3262, 0.0
        %v3337 = vmax.f32 %v3265, 0.0
        %v3338 = vmax.f32 %v3267, 0.0
        %v3339 = vmax.f32 %v3270, 0.0
        %v3340 = vmax.f32 %v3272, 0.0
        %v3341 = vmax.f32 %v3275, 0.0
        %v3342 = vmax.f32 %v3277, 0.0
        %v3343 = vsel %vm737, %v3279, %v3311
        %v3344 = vsel %vm737, %v3280, %v3312
        %v3345 = vsel %vm737, %v3281, %v3313
        %v3346 = vsel %vm737, %v3282, %v3314
        %v3347 = vsel %vm737, %v3283, %v3315
        %v3348 = vsel %vm737, %v3284, %v3316
        %v3349 = vsel %vm737, %v3285, %v3317
        %v3350 = vsel %vm737, %v3286, %v3318
        %v3351 = vsel %vm737, %v3287, %v3319
        %v3352 = vsel %vm737, %v3288, %v3320
        %v3353 = vsel %vm737, %v3289, %v3321
        %v3354 = vsel %vm737, %v3290, %v3322
        %v3355 = vsel %vm737, %v3291, %v3323
        %v3356 = vsel %vm737, %v3292, %v3324
        %v3357 = vsel %vm737, %v3293, %v3325
        %v3358 = vsel %vm737, %v3294, %v3326
        %v3359 = vsel %vm737, %v3295, %v3327
        %v3360 = vsel %vm737, %v3296, %v3328
        %v3361 = vsel %vm737, %v3297, %v3329
        %v3362 = vsel %vm737, %v3298, %v3330
        %v3363 = vsel %vm737, %v3299, %v3331
        %v3364 = vsel %vm737, %v3300, %v3332
        %v3365 = vsel %vm737, %v3301, %v3333
        %v3366 = vsel %vm737, %v3302, %v3334
        %v3367 = vsel %vm737, %v3303, %v3335
        %v3368 = vsel %vm737, %v3304, %v3336
        %v3369 = vsel %vm737, %v3305, %v3337
        %v3370 = vsel %vm737, %v3306, %v3338
        %v3371 = vsel %vm737, %v3307, %v3339
        %v3372 = vsel %vm737, %v3308, %v3340
        %v3373 = vsel %vm737, %v3309, %v3341
        %v3374 = vsel %vm737, %v3310, %v3342
        %v3375 = vpack.c.bf16 %v3344, %v3343
        %v3376 = vpack.c.bf16 %v3346, %v3345
        %v3377 = vpack.c.bf16 %v3348, %v3347
        %v3378 = vpack.c.bf16 %v3350, %v3349
        %v3379 = vpack.c.bf16 %v3352, %v3351
        %v3380 = vpack.c.bf16 %v3354, %v3353
        %v3381 = vpack.c.bf16 %v3356, %v3355
        %v3382 = vpack.c.bf16 %v3358, %v3357
        %v3383 = vpack.c.bf16 %v3360, %v3359
        %v3384 = vpack.c.bf16 %v3362, %v3361
        %v3385 = vpack.c.bf16 %v3364, %v3363
        %v3386 = vpack.c.bf16 %v3366, %v3365
        %v3387 = vpack.c.bf16 %v3368, %v3367
        %v3388 = vpack.c.bf16 %v3370, %v3369
        %v3389 = vpack.c.bf16 %v3372, %v3371
        %v3390 = vpack.c.bf16 %v3374, %v3373
        %s3391 = scalar_lea.vmem [#allocation11], 256
        %v3392 = vld [vmem:[%s3391] sm:$0xff]
        %v3393 = vld [vmem:[%s3391 + $0x8] sm:$0xff]
        %v3394 = vld [vmem:[%s3391 + $0x10] sm:$0xff]
        %v3395 = vld [vmem:[%s3391 + $0x18] sm:$0xff]
        %v3396 = vld [vmem:[%s3391 + $0x20] sm:$0xff]
        %v3397 = vld [vmem:[%s3391 + $0x28] sm:$0xff]
        %v3398 = vld [vmem:[%s3391 + $0x30] sm:$0xff]
        %v3399 = vld [vmem:[%s3391 + $0x38] sm:$0xff]
        %v3400 = vld [vmem:[%s3391 + $0x40] sm:$0xff]
        %v3401 = vld [vmem:[%s3391 + $0x48] sm:$0xff]
        %v3402 = vld [vmem:[%s3391 + $0x50] sm:$0xff]
        %v3403 = vld [vmem:[%s3391 + $0x58] sm:$0xff]
        %v3404 = vld [vmem:[%s3391 + $0x60] sm:$0xff]
        %v3405 = vld [vmem:[%s3391 + $0x68] sm:$0xff]
        %v3406 = vld [vmem:[%s3391 + $0x70] sm:$0xff]
        %v3407 = vld [vmem:[%s3391 + $0x78] sm:$0xff]
        %s3408 = scalar_lea.vmem [#allocation13], 4
        %v3409 = vld [vmem:[%s3408] sm:$0x3]
        %v3411 = vperm.slane %v3409, 0
        %v3412 = vperm.slane %v3409, 1
        %v3431 = vunpack.c.l.b16 %v3392
        %v3432 = vunpack.c.h.b16 %v3392
        %v3433 = vunpack.c.l.b16 %v3393
        %v3434 = vunpack.c.h.b16 %v3393
        %v3435 = vunpack.c.l.b16 %v3394
        %v3436 = vunpack.c.h.b16 %v3394
        %v3437 = vunpack.c.l.b16 %v3395
        %v3438 = vunpack.c.h.b16 %v3395
        %v3439 = vunpack.c.l.b16 %v3396
        %v3440 = vunpack.c.h.b16 %v3396
        %v3441 = vunpack.c.l.b16 %v3397
        %v3442 = vunpack.c.h.b16 %v3397
        %v3443 = vunpack.c.l.b16 %v3398
        %v3444 = vunpack.c.h.b16 %v3398
        %v3445 = vunpack.c.l.b16 %v3399
        %v3446 = vunpack.c.h.b16 %v3399
        %v3447 = vunpack.c.l.b16 %v3400
        %v3448 = vunpack.c.h.b16 %v3400
        %v3449 = vunpack.c.l.b16 %v3401
        %v3450 = vunpack.c.h.b16 %v3401
        %v3451 = vunpack.c.l.b16 %v3402
        %v3452 = vunpack.c.h.b16 %v3402
        %v3453 = vunpack.c.l.b16 %v3403
        %v3454 = vunpack.c.h.b16 %v3403
        %v3455 = vunpack.c.l.b16 %v3404
        %v3456 = vunpack.c.h.b16 %v3404
        %v3457 = vunpack.c.l.b16 %v3405
        %v3458 = vunpack.c.h.b16 %v3405
        %v3459 = vunpack.c.l.b16 %v3406
        %v3460 = vunpack.c.h.b16 %v3406
        %v3461 = vunpack.c.l.b16 %v3407
        %v3462 = vunpack.c.h.b16 %v3407
        %v3463 = vpack.c.b16 %v3433, %v3431
        %v3464 = vpack.c.b16 %v3434, %v3432
        %v3465 = vpack.c.b16 %v3437, %v3435
        %v3466 = vpack.c.b16 %v3438, %v3436
        %v3467 = vpack.c.b16 %v3441, %v3439
        %v3468 = vpack.c.b16 %v3442, %v3440
        %v3469 = vpack.c.b16 %v3445, %v3443
        %v3470 = vpack.c.b16 %v3446, %v3444
        %v3471 = vpack.c.b16 %v3449, %v3447
        %v3472 = vpack.c.b16 %v3450, %v3448
        %v3473 = vpack.c.b16 %v3453, %v3451
        %v3474 = vpack.c.b16 %v3454, %v3452
        %v3475 = vpack.c.b16 %v3457, %v3455
        %v3476 = vpack.c.b16 %v3458, %v3456
        %v3477 = vpack.c.b16 %v3461, %v3459
        %v3478 = vpack.c.b16 %v3462, %v3460
        %3495 = vmatpush.bf16.msra.mxu0 %v3477
        %3496 = vmatpush.bf16.msra.mxu0 %v3475
        %3497 = vmatpush.bf16.msra.mxu0 %v3473
        %3498 = vmatpush.bf16.msra.mxu0 %v3471
        %3499 = vmatpush.bf16.msra.mxu0 %v3469
        %3500 = vmatpush.bf16.msra.mxu0 %v3467
        %3501 = vmatpush.bf16.msra.mxu0 %v3465
        %3502 = vmatpush.bf16.msra.mxu0 %v3463
        %3503 = vmatmul.bf16.gmra.mxu0 %v3375
        %v3504 = vpop.f32.mrf.mxu0
        %v3505 = vadd.f32 %v3411, %v3504
        %v3506 = vpop.f32.mrf.mxu0
        %v3507 = vadd.f32 %v3411, %v3506
        %3508 = vmatmul.bf16.gmra.mxu0 %v3376
        %v3509 = vpop.f32.mrf.mxu0
        %v3510 = vadd.f32 %v3411, %v3509
        %v3511 = vpop.f32.mrf.mxu0
        %v3512 = vadd.f32 %v3411, %v3511
        %3513 = vmatmul.bf16.gmra.mxu0 %v3377
        %v3514 = vpop.f32.mrf.mxu0
        %v3515 = vadd.f32 %v3411, %v3514
        %v3516 = vpop.f32.mrf.mxu0
        %v3517 = vadd.f32 %v3411, %v3516
        %3518 = vmatmul.bf16.gmra.mxu0 %v3378
        %v3519 = vpop.f32.mrf.mxu0
        %v3520 = vadd.f32 %v3411, %v3519
        %v3521 = vpop.f32.mrf.mxu0
        %v3522 = vadd.f32 %v3411, %v3521
        %3523 = vmatmul.bf16.gmra.mxu0 %v3379
        %v3524 = vpop.f32.mrf.mxu0
        %v3525 = vadd.f32 %v3411, %v3524
        %v3526 = vpop.f32.mrf.mxu0
        %v3527 = vadd.f32 %v3411, %v3526
        %3528 = vmatmul.bf16.gmra.mxu0 %v3380
        %v3529 = vpop.f32.mrf.mxu0
        %v3530 = vadd.f32 %v3411, %v3529
        %v3531 = vpop.f32.mrf.mxu0
        %v3532 = vadd.f32 %v3411, %v3531
        %3533 = vmatmul.bf16.gmra.mxu0 %v3381
        %v3534 = vpop.f32.mrf.mxu0
        %v3535 = vadd.f32 %v3411, %v3534
        %v3536 = vpop.f32.mrf.mxu0
        %v3537 = vadd.f32 %v3411, %v3536
        %3538 = vmatmul.bf16.gmra.mxu0 %v3382
        %v3539 = vpop.f32.mrf.mxu0
        %v3540 = vadd.f32 %v3411, %v3539
        %v3541 = vpop.f32.mrf.mxu0
        %v3542 = vadd.f32 %v3411, %v3541
        %3543 = vmatmul.bf16.gmra.mxu0 %v3383
        %v3544 = vpop.f32.mrf.mxu0
        %v3545 = vadd.f32 %v3411, %v3544
        %v3546 = vpop.f32.mrf.mxu0
        %v3547 = vadd.f32 %v3411, %v3546
        %3548 = vmatmul.bf16.gmra.mxu0 %v3384
        %v3549 = vpop.f32.mrf.mxu0
        %v3550 = vadd.f32 %v3411, %v3549
        %v3551 = vpop.f32.mrf.mxu0
        %v3552 = vadd.f32 %v3411, %v3551
        %3553 = vmatmul.bf16.gmra.mxu0 %v3385
        %v3554 = vpop.f32.mrf.mxu0
        %v3555 = vadd.f32 %v3411, %v3554
        %v3556 = vpop.f32.mrf.mxu0
        %v3557 = vadd.f32 %v3411, %v3556
        %3558 = vmatmul.bf16.gmra.mxu0 %v3386
        %v3559 = vpop.f32.mrf.mxu0
        %v3560 = vadd.f32 %v3411, %v3559
        %v3561 = vpop.f32.mrf.mxu0
        %v3562 = vadd.f32 %v3411, %v3561
        %3563 = vmatmul.bf16.gmra.mxu0 %v3387
        %v3564 = vpop.f32.mrf.mxu0
        %v3565 = vadd.f32 %v3411, %v3564
        %v3566 = vpop.f32.mrf.mxu0
        %v3567 = vadd.f32 %v3411, %v3566
        %3568 = vmatmul.bf16.gmra.mxu0 %v3388
        %v3569 = vpop.f32.mrf.mxu0
        %v3570 = vadd.f32 %v3411, %v3569
        %v3571 = vpop.f32.mrf.mxu0
        %v3572 = vadd.f32 %v3411, %v3571
        %3573 = vmatmul.bf16.gmra.mxu0 %v3389
        %v3574 = vpop.f32.mrf.mxu0
        %v3575 = vadd.f32 %v3411, %v3574
        %v3576 = vpop.f32.mrf.mxu0
        %v3577 = vadd.f32 %v3411, %v3576
        %3578 = vmatmul.bf16.gmra.mxu0 %v3390
        %v3579 = vpop.f32.mrf.mxu0
        %v3580 = vadd.f32 %v3411, %v3579
        %v3581 = vpop.f32.mrf.mxu0
        %v3582 = vadd.f32 %v3411, %v3581
        %3583 = vdwg.mxu0
        %3584 = vmatpush.bf16.msra.mxu0 %v3478
        %3585 = vmatpush.bf16.msra.mxu0 %v3476
        %3586 = vmatpush.bf16.msra.mxu0 %v3474
        %3587 = vmatpush.bf16.msra.mxu0 %v3472
        %3588 = vmatpush.bf16.msra.mxu0 %v3470
        %3589 = vmatpush.bf16.msra.mxu0 %v3468
        %3590 = vmatpush.bf16.msra.mxu0 %v3466
        %3591 = vmatpush.bf16.msra.mxu0 %v3464
        %3592 = vmatmul.bf16.gmra.mxu0 %v3375
        %v3593 = vpop.f32.mrf.mxu0
        %v3594 = vadd.f32 %v3412, %v3593
        %v3595 = vpop.f32.mrf.mxu0
        %v3596 = vadd.f32 %v3412, %v3595
        %3597 = vmatmul.bf16.gmra.mxu0 %v3376
        %v3598 = vpop.f32.mrf.mxu0
        %v3599 = vadd.f32 %v3412, %v3598
        %v3600 = vpop.f32.mrf.mxu0
        %v3601 = vadd.f32 %v3412, %v3600
        %3602 = vmatmul.bf16.gmra.mxu0 %v3377
        %v3603 = vpop.f32.mrf.mxu0
        %v3604 = vadd.f32 %v3412, %v3603
        %v3605 = vpop.f32.mrf.mxu0
        %v3606 = vadd.f32 %v3412, %v3605
        %3607 = vmatmul.bf16.gmra.mxu0 %v3378
        %v3608 = vpop.f32.mrf.mxu0
        %v3609 = vadd.f32 %v3412, %v3608
        %v3610 = vpop.f32.mrf.mxu0
        %v3611 = vadd.f32 %v3412, %v3610
        %3612 = vmatmul.bf16.gmra.mxu0 %v3379
        %v3613 = vpop.f32.mrf.mxu0
        %v3614 = vadd.f32 %v3412, %v3613
        %v3615 = vpop.f32.mrf.mxu0
        %v3616 = vadd.f32 %v3412, %v3615
        %3617 = vmatmul.bf16.gmra.mxu0 %v3380
        %v3618 = vpop.f32.mrf.mxu0
        %v3619 = vadd.f32 %v3412, %v3618
        %v3620 = vpop.f32.mrf.mxu0
        %v3621 = vadd.f32 %v3412, %v3620
        %3622 = vmatmul.bf16.gmra.mxu0 %v3381
        %v3623 = vpop.f32.mrf.mxu0
        %v3624 = vadd.f32 %v3412, %v3623
        %v3625 = vpop.f32.mrf.mxu0
        %v3626 = vadd.f32 %v3412, %v3625
        %3627 = vmatmul.bf16.gmra.mxu0 %v3382
        %v3628 = vpop.f32.mrf.mxu0
        %v3629 = vadd.f32 %v3412, %v3628
        %v3630 = vpop.f32.mrf.mxu0
        %v3631 = vadd.f32 %v3412, %v3630
        %3632 = vmatmul.bf16.gmra.mxu0 %v3383
        %v3633 = vpop.f32.mrf.mxu0
        %v3634 = vadd.f32 %v3412, %v3633
        %v3635 = vpop.f32.mrf.mxu0
        %v3636 = vadd.f32 %v3412, %v3635
        %3637 = vmatmul.bf16.gmra.mxu0 %v3384
        %v3638 = vpop.f32.mrf.mxu0
        %v3639 = vadd.f32 %v3412, %v3638
        %v3640 = vpop.f32.mrf.mxu0
        %v3641 = vadd.f32 %v3412, %v3640
        %3642 = vmatmul.bf16.gmra.mxu0 %v3385
        %v3643 = vpop.f32.mrf.mxu0
        %v3644 = vadd.f32 %v3412, %v3643
        %v3645 = vpop.f32.mrf.mxu0
        %v3646 = vadd.f32 %v3412, %v3645
        %3647 = vmatmul.bf16.gmra.mxu0 %v3386
        %v3648 = vpop.f32.mrf.mxu0
        %v3649 = vadd.f32 %v3412, %v3648
        %v3650 = vpop.f32.mrf.mxu0
        %v3651 = vadd.f32 %v3412, %v3650
        %3652 = vmatmul.bf16.gmra.mxu0 %v3387
        %v3653 = vpop.f32.mrf.mxu0
        %v3654 = vadd.f32 %v3412, %v3653
        %v3655 = vpop.f32.mrf.mxu0
        %v3656 = vadd.f32 %v3412, %v3655
        %3657 = vmatmul.bf16.gmra.mxu0 %v3388
        %v3658 = vpop.f32.mrf.mxu0
        %v3659 = vadd.f32 %v3412, %v3658
        %v3660 = vpop.f32.mrf.mxu0
        %v3661 = vadd.f32 %v3412, %v3660
        %3662 = vmatmul.bf16.gmra.mxu0 %v3389
        %v3663 = vpop.f32.mrf.mxu0
        %v3664 = vadd.f32 %v3412, %v3663
        %v3665 = vpop.f32.mrf.mxu0
        %v3666 = vadd.f32 %v3412, %v3665
        %3667 = vmatmul.bf16.gmra.mxu0 %v3390
        %v3668 = vpop.f32.mrf.mxu0
        %v3669 = vadd.f32 %v3412, %v3668
        %v3670 = vpop.f32.mrf.mxu0
        %v3671 = vadd.f32 %v3412, %v3670
        %3672 = vdwg.mxu0
        %v3673 = vsub.f32 %v2699, %v3594
        %v3674 = vsub.f32 %v2700, %v3596
        %v3675 = vsub.f32 %v2701, %v3599
        %v3676 = vsub.f32 %v2702, %v3601
        %v3677 = vsub.f32 %v2703, %v3604
        %v3678 = vsub.f32 %v2704, %v3606
        %v3679 = vsub.f32 %v2705, %v3609
        %v3680 = vsub.f32 %v2706, %v3611
        %v3681 = vsub.f32 %v2707, %v3614
        %v3682 = vsub.f32 %v2708, %v3616
        %v3683 = vsub.f32 %v2709, %v3619
        %v3684 = vsub.f32 %v2710, %v3621
        %v3685 = vsub.f32 %v2711, %v3624
        %v3686 = vsub.f32 %v2712, %v3626
        %v3687 = vsub.f32 %v2713, %v3629
        %v3688 = vsub.f32 %v2714, %v3631
        %v3689 = vsub.f32 %v2715, %v3634
        %v3690 = vsub.f32 %v2716, %v3636
        %v3691 = vsub.f32 %v2717, %v3639
        %v3692 = vsub.f32 %v2718, %v3641
        %v3693 = vsub.f32 %v2719, %v3644
        %v3694 = vsub.f32 %v2720, %v3646
        %v3695 = vsub.f32 %v2721, %v3649
        %v3696 = vsub.f32 %v2722, %v3651
        %v3697 = vsub.f32 %v2723, %v3654
        %v3698 = vsub.f32 %v2724, %v3656
        %v3699 = vsub.f32 %v2725, %v3659
        %v3700 = vsub.f32 %v2726, %v3661
        %v3701 = vsub.f32 %v2727, %v3664
        %v3702 = vsub.f32 %v2728, %v3666
        %v3703 = vsub.f32 %v2729, %v3669
        %v3704 = vsub.f32 %v2730, %v3671
        %v3706 = vperm.slane %v2797, 0
        %v3708 = vmul.f32 %v3706, %v3673
        %v3709 = vmul.f32 %v3706, %v3674
        %v3710 = vmul.f32 %v3706, %v3675
        %v3711 = vmul.f32 %v3706, %v3676
        %v3712 = vmul.f32 %v3706, %v3677
        %v3713 = vmul.f32 %v3706, %v3678
        %v3714 = vmul.f32 %v3706, %v3679
        %v3715 = vmul.f32 %v3706, %v3680
        %v3716 = vmul.f32 %v3706, %v3681
        %v3717 = vmul.f32 %v3706, %v3682
        %v3718 = vmul.f32 %v3706, %v3683
        %v3719 = vmul.f32 %v3706, %v3684
        %v3720 = vmul.f32 %v3706, %v3685
        %v3721 = vmul.f32 %v3706, %v3686
        %v3722 = vmul.f32 %v3706, %v3687
        %v3723 = vmul.f32 %v3706, %v3688
        %v3724 = vmul.f32 %v3706, %v3689
        %v3725 = vmul.f32 %v3706, %v3690
        %v3726 = vmul.f32 %v3706, %v3691
        %v3727 = vmul.f32 %v3706, %v3692
        %v3728 = vmul.f32 %v3706, %v3693
        %v3729 = vmul.f32 %v3706, %v3694
        %v3730 = vmul.f32 %v3706, %v3695
        %v3731 = vmul.f32 %v3706, %v3696
        %v3732 = vmul.f32 %v3706, %v3697
        %v3733 = vmul.f32 %v3706, %v3698
        %v3734 = vmul.f32 %v3706, %v3699
        %v3735 = vmul.f32 %v3706, %v3700
        %v3736 = vmul.f32 %v3706, %v3701
        %v3737 = vmul.f32 %v3706, %v3702
        %v3738 = vmul.f32 %v3706, %v3703
        %v3739 = vmul.f32 %v3706, %v3704
        %v3740 = vsub.f32 0.0, %v3505
        %v3741 = vsub.f32 0.0, %v3507
        %v3742 = vsub.f32 0.0, %v3510
        %v3743 = vsub.f32 0.0, %v3512
        %v3744 = vsub.f32 0.0, %v3515
        %v3745 = vsub.f32 0.0, %v3517
        %v3746 = vsub.f32 0.0, %v3520
        %v3747 = vsub.f32 0.0, %v3522
        %v3748 = vsub.f32 0.0, %v3525
        %v3749 = vsub.f32 0.0, %v3527
        %v3750 = vsub.f32 0.0, %v3530
        %v3751 = vsub.f32 0.0, %v3532
        %v3752 = vsub.f32 0.0, %v3535
        %v3753 = vsub.f32 0.0, %v3537
        %v3754 = vsub.f32 0.0, %v3540
        %v3755 = vsub.f32 0.0, %v3542
        %v3756 = vsub.f32 0.0, %v3545
        %v3757 = vsub.f32 0.0, %v3547
        %v3758 = vsub.f32 0.0, %v3550
        %v3759 = vsub.f32 0.0, %v3552
        %v3760 = vsub.f32 0.0, %v3555
        %v3761 = vsub.f32 0.0, %v3557
        %v3762 = vsub.f32 0.0, %v3560
        %v3763 = vsub.f32 0.0, %v3562
        %v3764 = vsub.f32 0.0, %v3565
        %v3765 = vsub.f32 0.0, %v3567
        %v3766 = vsub.f32 0.0, %v3570
        %v3767 = vsub.f32 0.0, %v3572
        %v3768 = vsub.f32 0.0, %v3575
        %v3769 = vsub.f32 0.0, %v3577
        %v3770 = vsub.f32 0.0, %v3580
        %v3771 = vsub.f32 0.0, %v3582
        %v3772 = vmul.f32 %v3740, 1.442695
        %v3773 = vpow.pop %v3772
        %v3774 = vmul.f32 %v3741, 1.442695
        %v3775 = vpow.pop %v3774
        %v3776 = vmul.f32 %v3742, 1.442695
        %v3777 = vpow.pop %v3776
        %v3778 = vmul.f32 %v3743, 1.442695
        %v3779 = vpow.pop %v3778
        %v3780 = vmul.f32 %v3744, 1.442695
        %v3781 = vpow.pop %v3780
        %v3782 = vmul.f32 %v3745, 1.442695
        %v3783 = vpow.pop %v3782
        %v3784 = vmul.f32 %v3746, 1.442695
        %v3785 = vpow.pop %v3784
        %v3786 = vmul.f32 %v3747, 1.442695
        %v3787 = vpow.pop %v3786
        %v3788 = vmul.f32 %v3748, 1.442695
        %v3789 = vpow.pop %v3788
        %v3790 = vmul.f32 %v3749, 1.442695
        %v3791 = vpow.pop %v3790
        %v3792 = vmul.f32 %v3750, 1.442695
        %v3793 = vpow.pop %v3792
        %v3794 = vmul.f32 %v3751, 1.442695
        %v3795 = vpow.pop %v3794
        %v3796 = vmul.f32 %v3752, 1.442695
        %v3797 = vpow.pop %v3796
        %v3798 = vmul.f32 %v3753, 1.442695
        %v3799 = vpow.pop %v3798
        %v3800 = vmul.f32 %v3754, 1.442695
        %v3801 = vpow.pop %v3800
        %v3802 = vmul.f32 %v3755, 1.442695
        %v3803 = vpow.pop %v3802
        %v3804 = vmul.f32 %v3756, 1.442695
        %v3805 = vpow.pop %v3804
        %v3806 = vmul.f32 %v3757, 1.442695
        %v3807 = vpow.pop %v3806
        %v3808 = vmul.f32 %v3758, 1.442695
        %v3809 = vpow.pop %v3808
        %v3810 = vmul.f32 %v3759, 1.442695
        %v3811 = vpow.pop %v3810
        %v3812 = vmul.f32 %v3760, 1.442695
        %v3813 = vpow.pop %v3812
        %v3814 = vmul.f32 %v3761, 1.442695
        %v3815 = vpow.pop %v3814
        %v3816 = vmul.f32 %v3762, 1.442695
        %v3817 = vpow.pop %v3816
        %v3818 = vmul.f32 %v3763, 1.442695
        %v3819 = vpow.pop %v3818
        %v3820 = vmul.f32 %v3764, 1.442695
        %v3821 = vpow.pop %v3820
        %v3822 = vmul.f32 %v3765, 1.442695
        %v3823 = vpow.pop %v3822
        %v3824 = vmul.f32 %v3766, 1.442695
        %v3825 = vpow.pop %v3824
        %v3826 = vmul.f32 %v3767, 1.442695
        %v3827 = vpow.pop %v3826
        %v3828 = vmul.f32 %v3768, 1.442695
        %v3829 = vpow.pop %v3828
        %v3830 = vmul.f32 %v3769, 1.442695
        %v3831 = vpow.pop %v3830
        %v3832 = vmul.f32 %v3770, 1.442695
        %v3833 = vpow.pop %v3832
        %v3834 = vmul.f32 %v3771, 1.442695
        %v3835 = vpow.pop %v3834
        %v3836 = vmul.f32 %v3708, %v3773
        %v3837 = vmul.f32 %v3709, %v3775
        %v3838 = vmul.f32 %v3710, %v3777
        %v3839 = vmul.f32 %v3711, %v3779
        %v3840 = vmul.f32 %v3712, %v3781
        %v3841 = vmul.f32 %v3713, %v3783
        %v3842 = vmul.f32 %v3714, %v3785
        %v3843 = vmul.f32 %v3715, %v3787
        %v3844 = vmul.f32 %v3716, %v3789
        %v3845 = vmul.f32 %v3717, %v3791
        %v3846 = vmul.f32 %v3718, %v3793
        %v3847 = vmul.f32 %v3719, %v3795
        %v3848 = vmul.f32 %v3720, %v3797
        %v3849 = vmul.f32 %v3721, %v3799
        %v3850 = vmul.f32 %v3722, %v3801
        %v3851 = vmul.f32 %v3723, %v3803
        %v3852 = vmul.f32 %v3724, %v3805
        %v3853 = vmul.f32 %v3725, %v3807
        %v3854 = vmul.f32 %v3726, %v3809
        %v3855 = vmul.f32 %v3727, %v3811
        %v3856 = vmul.f32 %v3728, %v3813
        %v3857 = vmul.f32 %v3729, %v3815
        %v3858 = vmul.f32 %v3730, %v3817
        %v3859 = vmul.f32 %v3731, %v3819
        %v3860 = vmul.f32 %v3732, %v3821
        %v3861 = vmul.f32 %v3733, %v3823
        %v3862 = vmul.f32 %v3734, %v3825
        %v3863 = vmul.f32 %v3735, %v3827
        %v3864 = vmul.f32 %v3736, %v3829
        %v3865 = vmul.f32 %v3737, %v3831
        %v3866 = vmul.f32 %v3738, %v3833
        %v3867 = vmul.f32 %v3739, %v3835
        %v3868 = vadd.f32 %v2801, %v3836
        %v3869 = vadd.f32 %v2802, %v3837
        %v3870 = vadd.f32 %v2803, %v3838
        %v3871 = vadd.f32 %v2804, %v3839
        %v3872 = vadd.f32 %v2805, %v3840
        %v3873 = vadd.f32 %v2806, %v3841
        %v3874 = vadd.f32 %v2807, %v3842
        %v3875 = vadd.f32 %v2808, %v3843
        %v3876 = vadd.f32 %v2809, %v3844
        %v3877 = vadd.f32 %v2810, %v3845
        %v3878 = vadd.f32 %v2811, %v3846
        %v3879 = vadd.f32 %v2812, %v3847
        %v3880 = vadd.f32 %v2813, %v3848
        %v3881 = vadd.f32 %v2814, %v3849
        %v3882 = vadd.f32 %v2815, %v3850
        %v3883 = vadd.f32 %v2816, %v3851
        %v3884 = vadd.f32 %v2817, %v3852
        %v3885 = vadd.f32 %v2818, %v3853
        %v3886 = vadd.f32 %v2819, %v3854
        %v3887 = vadd.f32 %v2820, %v3855
        %v3888 = vadd.f32 %v2821, %v3856
        %v3889 = vadd.f32 %v2822, %v3857
        %v3890 = vadd.f32 %v2823, %v3858
        %v3891 = vadd.f32 %v2824, %v3859
        %v3892 = vadd.f32 %v2825, %v3860
        %v3893 = vadd.f32 %v2826, %v3861
        %v3894 = vadd.f32 %v2827, %v3862
        %v3895 = vadd.f32 %v2828, %v3863
        %v3896 = vadd.f32 %v2829, %v3864
        %v3897 = vadd.f32 %v2830, %v3865
        %v3898 = vadd.f32 %v2831, %v3866
        %v3899 = vadd.f32 %v2832, %v3867
        %v3900 = vmul.f32 %v3706, %v3505
        %v3901 = vmul.f32 %v3706, %v3507
        %v3902 = vmul.f32 %v3706, %v3510
        %v3903 = vmul.f32 %v3706, %v3512
        %v3904 = vmul.f32 %v3706, %v3515
        %v3905 = vmul.f32 %v3706, %v3517
        %v3906 = vmul.f32 %v3706, %v3520
        %v3907 = vmul.f32 %v3706, %v3522
        %v3908 = vmul.f32 %v3706, %v3525
        %v3909 = vmul.f32 %v3706, %v3527
        %v3910 = vmul.f32 %v3706, %v3530
        %v3911 = vmul.f32 %v3706, %v3532
        %v3912 = vmul.f32 %v3706, %v3535
        %v3913 = vmul.f32 %v3706, %v3537
        %v3914 = vmul.f32 %v3706, %v3540
        %v3915 = vmul.f32 %v3706, %v3542
        %v3916 = vmul.f32 %v3706, %v3545
        %v3917 = vmul.f32 %v3706, %v3547
        %v3918 = vmul.f32 %v3706, %v3550
        %v3919 = vmul.f32 %v3706, %v3552
        %v3920 = vmul.f32 %v3706, %v3555
        %v3921 = vmul.f32 %v3706, %v3557
        %v3922 = vmul.f32 %v3706, %v3560
        %v3923 = vmul.f32 %v3706, %v3562
        %v3924 = vmul.f32 %v3706, %v3565
        %v3925 = vmul.f32 %v3706, %v3567
        %v3926 = vmul.f32 %v3706, %v3570
        %v3927 = vmul.f32 %v3706, %v3572
        %v3928 = vmul.f32 %v3706, %v3575
        %v3929 = vmul.f32 %v3706, %v3577
        %v3930 = vmul.f32 %v3706, %v3580
        %v3931 = vmul.f32 %v3706, %v3582
        %v3932 = vsub.f32 %v2763, %v3900
        %v3933 = vsub.f32 %v2764, %v3901
        %v3934 = vsub.f32 %v2765, %v3902
        %v3935 = vsub.f32 %v2766, %v3903
        %v3936 = vsub.f32 %v2767, %v3904
        %v3937 = vsub.f32 %v2768, %v3905
        %v3938 = vsub.f32 %v2769, %v3906
        %v3939 = vsub.f32 %v2770, %v3907
        %v3940 = vsub.f32 %v2771, %v3908
        %v3941 = vsub.f32 %v2772, %v3909
        %v3942 = vsub.f32 %v2773, %v3910
        %v3943 = vsub.f32 %v2774, %v3911
        %v3944 = vsub.f32 %v2775, %v3912
        %v3945 = vsub.f32 %v2776, %v3913
        %v3946 = vsub.f32 %v2777, %v3914
        %v3947 = vsub.f32 %v2778, %v3915
        %v3948 = vsub.f32 %v2779, %v3916
        %v3949 = vsub.f32 %v2780, %v3917
        %v3950 = vsub.f32 %v2781, %v3918
        %v3951 = vsub.f32 %v2782, %v3919
        %v3952 = vsub.f32 %v2783, %v3920
        %v3953 = vsub.f32 %v2784, %v3921
        %v3954 = vsub.f32 %v2785, %v3922
        %v3955 = vsub.f32 %v2786, %v3923
        %v3956 = vsub.f32 %v2787, %v3924
        %v3957 = vsub.f32 %v2788, %v3925
        %v3958 = vsub.f32 %v2789, %v3926
        %v3959 = vsub.f32 %v2790, %v3927
        %v3960 = vsub.f32 %v2791, %v3928
        %v3961 = vsub.f32 %v2792, %v3929
        %v3962 = vsub.f32 %v2793, %v3930
        %v3963 = vsub.f32 %v2794, %v3931
        %s3964 = scalar_lea.vmem [#allocation5], 3
        %v3965 = vld [vmem:[%s3964] sm:$0x1]
        %v3966 = vsub.f32 1.0, %v3965
        %v3968 = vperm.slane %v3965, 0
        %v3970 = vmul.f32 %v3868, %v3968
        %v3971 = vmul.f32 %v3869, %v3968
        %v3972 = vmul.f32 %v3870, %v3968
        %v3973 = vmul.f32 %v3871, %v3968
        %v3974 = vmul.f32 %v3872, %v3968
        %v3975 = vmul.f32 %v3873, %v3968
        %v3976 = vmul.f32 %v3874, %v3968
        %v3977 = vmul.f32 %v3875, %v3968
        %v3978 = vmul.f32 %v3876, %v3968
        %v3979 = vmul.f32 %v3877, %v3968
        %v3980 = vmul.f32 %v3878, %v3968
        %v3981 = vmul.f32 %v3879, %v3968
        %v3982 = vmul.f32 %v3880, %v3968
        %v3983 = vmul.f32 %v3881, %v3968
        %v3984 = vmul.f32 %v3882, %v3968
        %v3985 = vmul.f32 %v3883, %v3968
        %v3986 = vmul.f32 %v3884, %v3968
        %v3987 = vmul.f32 %v3885, %v3968
        %v3988 = vmul.f32 %v3886, %v3968
        %v3989 = vmul.f32 %v3887, %v3968
        %v3990 = vmul.f32 %v3888, %v3968
        %v3991 = vmul.f32 %v3889, %v3968
        %v3992 = vmul.f32 %v3890, %v3968
        %v3993 = vmul.f32 %v3891, %v3968
        %v3994 = vmul.f32 %v3892, %v3968
        %v3995 = vmul.f32 %v3893, %v3968
        %v3996 = vmul.f32 %v3894, %v3968
        %v3997 = vmul.f32 %v3895, %v3968
        %v3998 = vmul.f32 %v3896, %v3968
        %v3999 = vmul.f32 %v3897, %v3968
        %v4000 = vmul.f32 %v3898, %v3968
        %v4001 = vmul.f32 %v3899, %v3968
        %v4002 = vpack.c.bf16 %v3971, %v3970
        %v4003 = vpack.c.bf16 %v3973, %v3972
        %v4004 = vpack.c.bf16 %v3975, %v3974
        %v4005 = vpack.c.bf16 %v3977, %v3976
        %v4006 = vpack.c.bf16 %v3979, %v3978
        %v4007 = vpack.c.bf16 %v3981, %v3980
        %v4008 = vpack.c.bf16 %v3983, %v3982
        %v4009 = vpack.c.bf16 %v3985, %v3984
        %v4010 = vpack.c.bf16 %v3987, %v3986
        %v4011 = vpack.c.bf16 %v3989, %v3988
        %v4012 = vpack.c.bf16 %v3991, %v3990
        %v4013 = vpack.c.bf16 %v3993, %v3992
        %v4014 = vpack.c.bf16 %v3995, %v3994
        %v4015 = vpack.c.bf16 %v3997, %v3996
        %v4016 = vpack.c.bf16 %v3999, %v3998
        %v4017 = vpack.c.bf16 %v4001, %v4000
        %s4018 = scalar_lea.vmem [#allocation7], 192
        %v4019 = vld [vmem:[%s4018] sm:$0xf]
        %v4020 = vld [vmem:[%s4018 + $0x4] sm:$0xf]
        %v4021 = vld [vmem:[%s4018 + $0x8] sm:$0xf]
        %v4022 = vld [vmem:[%s4018 + $0xc] sm:$0xf]
        %v4023 = vld [vmem:[%s4018 + $0x10] sm:$0xf]
        %v4024 = vld [vmem:[%s4018 + $0x14] sm:$0xf]
        %v4025 = vld [vmem:[%s4018 + $0x18] sm:$0xf]
        %v4026 = vld [vmem:[%s4018 + $0x1c] sm:$0xf]
        %v4027 = vld [vmem:[%s4018 + $0x20] sm:$0xf]
        %v4028 = vld [vmem:[%s4018 + $0x24] sm:$0xf]
        %v4029 = vld [vmem:[%s4018 + $0x28] sm:$0xf]
        %v4030 = vld [vmem:[%s4018 + $0x2c] sm:$0xf]
        %v4031 = vld [vmem:[%s4018 + $0x30] sm:$0xf]
        %v4032 = vld [vmem:[%s4018 + $0x34] sm:$0xf]
        %v4033 = vld [vmem:[%s4018 + $0x38] sm:$0xf]
        %v4034 = vld [vmem:[%s4018 + $0x3c] sm:$0xf]
        %s4035 = scalar_lea.vmem [#allocation8], 3
        %v4036 = vld [vmem:[%s4035] sm:$0x1]
        %v4038 = vperm.slane %v4036, 0
        %v4056 = vunpack.c.l.b16 %v4019
        %v4057 = vunpack.c.l.b16 %v4020
        %v4058 = vunpack.c.l.b16 %v4021
        %v4059 = vunpack.c.l.b16 %v4022
        %v4060 = vunpack.c.l.b16 %v4023
        %v4061 = vunpack.c.l.b16 %v4024
        %v4062 = vunpack.c.l.b16 %v4025
        %v4063 = vunpack.c.l.b16 %v4026
        %v4064 = vunpack.c.l.b16 %v4027
        %v4065 = vunpack.c.l.b16 %v4028
        %v4066 = vunpack.c.l.b16 %v4029
        %v4067 = vunpack.c.l.b16 %v4030
        %v4068 = vunpack.c.l.b16 %v4031
        %v4069 = vunpack.c.l.b16 %v4032
        %v4070 = vunpack.c.l.b16 %v4033
        %v4071 = vunpack.c.l.b16 %v4034
        %v4072 = vpack.c.b16 %v4057, %v4056
        %v4073 = vpack.c.b16 %v4059, %v4058
        %v4074 = vpack.c.b16 %v4061, %v4060
        %v4075 = vpack.c.b16 %v4063, %v4062
        %v4076 = vpack.c.b16 %v4065, %v4064
        %v4077 = vpack.c.b16 %v4067, %v4066
        %v4078 = vpack.c.b16 %v4069, %v4068
        %v4079 = vpack.c.b16 %v4071, %v4070
        %4088 = vmatpush.bf16.msra.mxu0 %v4079
        %4089 = vmatpush.bf16.msra.mxu0 %v4078
        %4090 = vmatpush.bf16.msra.mxu0 %v4077
        %4091 = vmatpush.bf16.msra.mxu0 %v4076
        %4092 = vmatpush.bf16.msra.mxu0 %v4075
        %4093 = vmatpush.bf16.msra.mxu0 %v4074
        %4094 = vmatpush.bf16.msra.mxu0 %v4073
        %4095 = vmatpush.bf16.msra.mxu0 %v4072
        %4096 = vmatmul.bf16.gmra.mxu0 %v4002
        %v4097 = vpop.f32.mrf.mxu0
        %v4098 = vadd.f32 %v4038, %v4097
        %v4099 = vpop.f32.mrf.mxu0
        %v4100 = vadd.f32 %v4038, %v4099
        %4101 = vmatmul.bf16.gmra.mxu0 %v4003
        %v4102 = vpop.f32.mrf.mxu0
        %v4103 = vadd.f32 %v4038, %v4102
        %v4104 = vpop.f32.mrf.mxu0
        %v4105 = vadd.f32 %v4038, %v4104
        %4106 = vmatmul.bf16.gmra.mxu0 %v4004
        %v4107 = vpop.f32.mrf.mxu0
        %v4108 = vadd.f32 %v4038, %v4107
        %v4109 = vpop.f32.mrf.mxu0
        %v4110 = vadd.f32 %v4038, %v4109
        %4111 = vmatmul.bf16.gmra.mxu0 %v4005
        %v4112 = vpop.f32.mrf.mxu0
        %v4113 = vadd.f32 %v4038, %v4112
        %v4114 = vpop.f32.mrf.mxu0
        %v4115 = vadd.f32 %v4038, %v4114
        %4116 = vmatmul.bf16.gmra.mxu0 %v4006
        %v4117 = vpop.f32.mrf.mxu0
        %v4118 = vadd.f32 %v4038, %v4117
        %v4119 = vpop.f32.mrf.mxu0
        %v4120 = vadd.f32 %v4038, %v4119
        %4121 = vmatmul.bf16.gmra.mxu0 %v4007
        %v4122 = vpop.f32.mrf.mxu0
        %v4123 = vadd.f32 %v4038, %v4122
        %v4124 = vpop.f32.mrf.mxu0
        %v4125 = vadd.f32 %v4038, %v4124
        %4126 = vmatmul.bf16.gmra.mxu0 %v4008
        %v4127 = vpop.f32.mrf.mxu0
        %v4128 = vadd.f32 %v4038, %v4127
        %v4129 = vpop.f32.mrf.mxu0
        %v4130 = vadd.f32 %v4038, %v4129
        %4131 = vmatmul.bf16.gmra.mxu0 %v4009
        %v4132 = vpop.f32.mrf.mxu0
        %v4133 = vadd.f32 %v4038, %v4132
        %v4134 = vpop.f32.mrf.mxu0
        %v4135 = vadd.f32 %v4038, %v4134
        %4136 = vmatmul.bf16.gmra.mxu0 %v4010
        %v4137 = vpop.f32.mrf.mxu0
        %v4138 = vadd.f32 %v4038, %v4137
        %v4139 = vpop.f32.mrf.mxu0
        %v4140 = vadd.f32 %v4038, %v4139
        %4141 = vmatmul.bf16.gmra.mxu0 %v4011
        %v4142 = vpop.f32.mrf.mxu0
        %v4143 = vadd.f32 %v4038, %v4142
        %v4144 = vpop.f32.mrf.mxu0
        %v4145 = vadd.f32 %v4038, %v4144
        %4146 = vmatmul.bf16.gmra.mxu0 %v4012
        %v4147 = vpop.f32.mrf.mxu0
        %v4148 = vadd.f32 %v4038, %v4147
        %v4149 = vpop.f32.mrf.mxu0
        %v4150 = vadd.f32 %v4038, %v4149
        %4151 = vmatmul.bf16.gmra.mxu0 %v4013
        %v4152 = vpop.f32.mrf.mxu0
        %v4153 = vadd.f32 %v4038, %v4152
        %v4154 = vpop.f32.mrf.mxu0
        %v4155 = vadd.f32 %v4038, %v4154
        %4156 = vmatmul.bf16.gmra.mxu0 %v4014
        %v4157 = vpop.f32.mrf.mxu0
        %v4158 = vadd.f32 %v4038, %v4157
        %v4159 = vpop.f32.mrf.mxu0
        %v4160 = vadd.f32 %v4038, %v4159
        %4161 = vmatmul.bf16.gmra.mxu0 %v4015
        %v4162 = vpop.f32.mrf.mxu0
        %v4163 = vadd.f32 %v4038, %v4162
        %v4164 = vpop.f32.mrf.mxu0
        %v4165 = vadd.f32 %v4038, %v4164
        %4166 = vmatmul.bf16.gmra.mxu0 %v4016
        %v4167 = vpop.f32.mrf.mxu0
        %v4168 = vadd.f32 %v4038, %v4167
        %v4169 = vpop.f32.mrf.mxu0
        %v4170 = vadd.f32 %v4038, %v4169
        %4171 = vmatmul.bf16.gmra.mxu0 %v4017
        %v4172 = vpop.f32.mrf.mxu0
        %v4173 = vadd.f32 %v4038, %v4172
        %v4174 = vpop.f32.mrf.mxu0
        %v4175 = vadd.f32 %v4038, %v4174
        %4176 = vdwg.mxu0
        %v4177 = vtanh.pop %v4098
        %v4178 = vtanh.pop %v4100
        %v4179 = vtanh.pop %v4103
        %v4180 = vtanh.pop %v4105
        %v4181 = vtanh.pop %v4108
        %v4182 = vtanh.pop %v4110
        %v4183 = vtanh.pop %v4113
        %v4184 = vtanh.pop %v4115
        %v4185 = vtanh.pop %v4118
        %v4186 = vtanh.pop %v4120
        %v4187 = vtanh.pop %v4123
        %v4188 = vtanh.pop %v4125
        %v4189 = vtanh.pop %v4128
        %v4190 = vtanh.pop %v4130
        %v4191 = vtanh.pop %v4133
        %v4192 = vtanh.pop %v4135
        %v4193 = vtanh.pop %v4138
        %v4194 = vtanh.pop %v4140
        %v4195 = vtanh.pop %v4143
        %v4196 = vtanh.pop %v4145
        %v4197 = vtanh.pop %v4148
        %v4198 = vtanh.pop %v4150
        %v4199 = vtanh.pop %v4153
        %v4200 = vtanh.pop %v4155
        %v4201 = vtanh.pop %v4158
        %v4202 = vtanh.pop %v4160
        %v4203 = vtanh.pop %v4163
        %v4204 = vtanh.pop %v4165
        %v4205 = vtanh.pop %v4168
        %v4206 = vtanh.pop %v4170
        %v4207 = vtanh.pop %v4173
        %v4208 = vtanh.pop %v4175
        %v4209 = vmax.f32 %v4098, 0.0
        %v4210 = vmax.f32 %v4100, 0.0
        %v4211 = vmax.f32 %v4103, 0.0
        %v4212 = vmax.f32 %v4105, 0.0
        %v4213 = vmax.f32 %v4108, 0.0
        %v4214 = vmax.f32 %v4110, 0.0
        %v4215 = vmax.f32 %v4113, 0.0
        %v4216 = vmax.f32 %v4115, 0.0
        %v4217 = vmax.f32 %v4118, 0.0
        %v4218 = vmax.f32 %v4120, 0.0
        %v4219 = vmax.f32 %v4123, 0.0
        %v4220 = vmax.f32 %v4125, 0.0
        %v4221 = vmax.f32 %v4128, 0.0
        %v4222 = vmax.f32 %v4130, 0.0
        %v4223 = vmax.f32 %v4133, 0.0
        %v4224 = vmax.f32 %v4135, 0.0
        %v4225 = vmax.f32 %v4138, 0.0
        %v4226 = vmax.f32 %v4140, 0.0
        %v4227 = vmax.f32 %v4143, 0.0
        %v4228 = vmax.f32 %v4145, 0.0
        %v4229 = vmax.f32 %v4148, 0.0
        %v4230 = vmax.f32 %v4150, 0.0
        %v4231 = vmax.f32 %v4153, 0.0
        %v4232 = vmax.f32 %v4155, 0.0
        %v4233 = vmax.f32 %v4158, 0.0
        %v4234 = vmax.f32 %v4160, 0.0
        %v4235 = vmax.f32 %v4163, 0.0
        %v4236 = vmax.f32 %v4165, 0.0
        %v4237 = vmax.f32 %v4168, 0.0
        %v4238 = vmax.f32 %v4170, 0.0
        %v4239 = vmax.f32 %v4173, 0.0
        %v4240 = vmax.f32 %v4175, 0.0
        %v4241 = vsel %vm737, %v4177, %v4209
        %v4242 = vsel %vm737, %v4178, %v4210
        %v4243 = vsel %vm737, %v4179, %v4211
        %v4244 = vsel %vm737, %v4180, %v4212
        %v4245 = vsel %vm737, %v4181, %v4213
        %v4246 = vsel %vm737, %v4182, %v4214
        %v4247 = vsel %vm737, %v4183, %v4215
        %v4248 = vsel %vm737, %v4184, %v4216
        %v4249 = vsel %vm737, %v4185, %v4217
        %v4250 = vsel %vm737, %v4186, %v4218
        %v4251 = vsel %vm737, %v4187, %v4219
        %v4252 = vsel %vm737, %v4188, %v4220
        %v4253 = vsel %vm737, %v4189, %v4221
        %v4254 = vsel %vm737, %v4190, %v4222
        %v4255 = vsel %vm737, %v4191, %v4223
        %v4256 = vsel %vm737, %v4192, %v4224
        %v4257 = vsel %vm737, %v4193, %v4225
        %v4258 = vsel %vm737, %v4194, %v4226
        %v4259 = vsel %vm737, %v4195, %v4227
        %v4260 = vsel %vm737, %v4196, %v4228
        %v4261 = vsel %vm737, %v4197, %v4229
        %v4262 = vsel %vm737, %v4198, %v4230
        %v4263 = vsel %vm737, %v4199, %v4231
        %v4264 = vsel %vm737, %v4200, %v4232
        %v4265 = vsel %vm737, %v4201, %v4233
        %v4266 = vsel %vm737, %v4202, %v4234
        %v4267 = vsel %vm737, %v4203, %v4235
        %v4268 = vsel %vm737, %v4204, %v4236
        %v4269 = vsel %vm737, %v4205, %v4237
        %v4270 = vsel %vm737, %v4206, %v4238
        %v4271 = vsel %vm737, %v4207, %v4239
        %v4272 = vsel %vm737, %v4208, %v4240
        %v4273 = vpack.c.bf16 %v4242, %v4241
        %v4274 = vpack.c.bf16 %v4244, %v4243
        %v4275 = vpack.c.bf16 %v4246, %v4245
        %v4276 = vpack.c.bf16 %v4248, %v4247
        %v4277 = vpack.c.bf16 %v4250, %v4249
        %v4278 = vpack.c.bf16 %v4252, %v4251
        %v4279 = vpack.c.bf16 %v4254, %v4253
        %v4280 = vpack.c.bf16 %v4256, %v4255
        %v4281 = vpack.c.bf16 %v4258, %v4257
        %v4282 = vpack.c.bf16 %v4260, %v4259
        %v4283 = vpack.c.bf16 %v4262, %v4261
        %v4284 = vpack.c.bf16 %v4264, %v4263
        %v4285 = vpack.c.bf16 %v4266, %v4265
        %v4286 = vpack.c.bf16 %v4268, %v4267
        %v4287 = vpack.c.bf16 %v4270, %v4269
        %v4288 = vpack.c.bf16 %v4272, %v4271
        %s4289 = scalar_lea.vmem [#allocation10], 192
        %v4290 = vld [vmem:[%s4289] sm:$0xf]
        %v4291 = vld [vmem:[%s4289 + $0x4] sm:$0xf]
        %v4292 = vld [vmem:[%s4289 + $0x8] sm:$0xf]
        %v4293 = vld [vmem:[%s4289 + $0xc] sm:$0xf]
        %v4294 = vld [vmem:[%s4289 + $0x10] sm:$0xf]
        %v4295 = vld [vmem:[%s4289 + $0x14] sm:$0xf]
        %v4296 = vld [vmem:[%s4289 + $0x18] sm:$0xf]
        %v4297 = vld [vmem:[%s4289 + $0x1c] sm:$0xf]
        %v4298 = vld [vmem:[%s4289 + $0x20] sm:$0xf]
        %v4299 = vld [vmem:[%s4289 + $0x24] sm:$0xf]
        %v4300 = vld [vmem:[%s4289 + $0x28] sm:$0xf]
        %v4301 = vld [vmem:[%s4289 + $0x2c] sm:$0xf]
        %v4302 = vld [vmem:[%s4289 + $0x30] sm:$0xf]
        %v4303 = vld [vmem:[%s4289 + $0x34] sm:$0xf]
        %v4304 = vld [vmem:[%s4289 + $0x38] sm:$0xf]
        %v4305 = vld [vmem:[%s4289 + $0x3c] sm:$0xf]
        %s4306 = scalar_lea.vmem %s5, 3
        %v4307 = vld [vmem:[%s4306] sm:$0x1]
        %v4309 = vperm.slane %v4307, 0
        %v4327 = vunpack.c.l.b16 %v4290
        %v4328 = vunpack.c.l.b16 %v4291
        %v4329 = vunpack.c.l.b16 %v4292
        %v4330 = vunpack.c.l.b16 %v4293
        %v4331 = vunpack.c.l.b16 %v4294
        %v4332 = vunpack.c.l.b16 %v4295
        %v4333 = vunpack.c.l.b16 %v4296
        %v4334 = vunpack.c.l.b16 %v4297
        %v4335 = vunpack.c.l.b16 %v4298
        %v4336 = vunpack.c.l.b16 %v4299
        %v4337 = vunpack.c.l.b16 %v4300
        %v4338 = vunpack.c.l.b16 %v4301
        %v4339 = vunpack.c.l.b16 %v4302
        %v4340 = vunpack.c.l.b16 %v4303
        %v4341 = vunpack.c.l.b16 %v4304
        %v4342 = vunpack.c.l.b16 %v4305
        %v4343 = vpack.c.b16 %v4328, %v4327
        %v4344 = vpack.c.b16 %v4330, %v4329
        %v4345 = vpack.c.b16 %v4332, %v4331
        %v4346 = vpack.c.b16 %v4334, %v4333
        %v4347 = vpack.c.b16 %v4336, %v4335
        %v4348 = vpack.c.b16 %v4338, %v4337
        %v4349 = vpack.c.b16 %v4340, %v4339
        %v4350 = vpack.c.b16 %v4342, %v4341
        %4359 = vmatpush.bf16.msra.mxu0 %v4350
        %4360 = vmatpush.bf16.msra.mxu0 %v4349
        %4361 = vmatpush.bf16.msra.mxu0 %v4348
        %4362 = vmatpush.bf16.msra.mxu0 %v4347
        %4363 = vmatpush.bf16.msra.mxu0 %v4346
        %4364 = vmatpush.bf16.msra.mxu0 %v4345
        %4365 = vmatpush.bf16.msra.mxu0 %v4344
        %4366 = vmatpush.bf16.msra.mxu0 %v4343
        %4367 = vmatmul.bf16.gmra.mxu0 %v4273
        %v4368 = vpop.f32.mrf.mxu0
        %v4369 = vadd.f32 %v4309, %v4368
        %v4370 = vpop.f32.mrf.mxu0
        %v4371 = vadd.f32 %v4309, %v4370
        %4372 = vmatmul.bf16.gmra.mxu0 %v4274
        %v4373 = vpop.f32.mrf.mxu0
        %v4374 = vadd.f32 %v4309, %v4373
        %v4375 = vpop.f32.mrf.mxu0
        %v4376 = vadd.f32 %v4309, %v4375
        %4377 = vmatmul.bf16.gmra.mxu0 %v4275
        %v4378 = vpop.f32.mrf.mxu0
        %v4379 = vadd.f32 %v4309, %v4378
        %v4380 = vpop.f32.mrf.mxu0
        %v4381 = vadd.f32 %v4309, %v4380
        %4382 = vmatmul.bf16.gmra.mxu0 %v4276
        %v4383 = vpop.f32.mrf.mxu0
        %v4384 = vadd.f32 %v4309, %v4383
        %v4385 = vpop.f32.mrf.mxu0
        %v4386 = vadd.f32 %v4309, %v4385
        %4387 = vmatmul.bf16.gmra.mxu0 %v4277
        %v4388 = vpop.f32.mrf.mxu0
        %v4389 = vadd.f32 %v4309, %v4388
        %v4390 = vpop.f32.mrf.mxu0
        %v4391 = vadd.f32 %v4309, %v4390
        %4392 = vmatmul.bf16.gmra.mxu0 %v4278
        %v4393 = vpop.f32.mrf.mxu0
        %v4394 = vadd.f32 %v4309, %v4393
        %v4395 = vpop.f32.mrf.mxu0
        %v4396 = vadd.f32 %v4309, %v4395
        %4397 = vmatmul.bf16.gmra.mxu0 %v4279
        %v4398 = vpop.f32.mrf.mxu0
        %v4399 = vadd.f32 %v4309, %v4398
        %v4400 = vpop.f32.mrf.mxu0
        %v4401 = vadd.f32 %v4309, %v4400
        %4402 = vmatmul.bf16.gmra.mxu0 %v4280
        %v4403 = vpop.f32.mrf.mxu0
        %v4404 = vadd.f32 %v4309, %v4403
        %v4405 = vpop.f32.mrf.mxu0
        %v4406 = vadd.f32 %v4309, %v4405
        %4407 = vmatmul.bf16.gmra.mxu0 %v4281
        %v4408 = vpop.f32.mrf.mxu0
        %v4409 = vadd.f32 %v4309, %v4408
        %v4410 = vpop.f32.mrf.mxu0
        %v4411 = vadd.f32 %v4309, %v4410
        %4412 = vmatmul.bf16.gmra.mxu0 %v4282
        %v4413 = vpop.f32.mrf.mxu0
        %v4414 = vadd.f32 %v4309, %v4413
        %v4415 = vpop.f32.mrf.mxu0
        %v4416 = vadd.f32 %v4309, %v4415
        %4417 = vmatmul.bf16.gmra.mxu0 %v4283
        %v4418 = vpop.f32.mrf.mxu0
        %v4419 = vadd.f32 %v4309, %v4418
        %v4420 = vpop.f32.mrf.mxu0
        %v4421 = vadd.f32 %v4309, %v4420
        %4422 = vmatmul.bf16.gmra.mxu0 %v4284
        %v4423 = vpop.f32.mrf.mxu0
        %v4424 = vadd.f32 %v4309, %v4423
        %v4425 = vpop.f32.mrf.mxu0
        %v4426 = vadd.f32 %v4309, %v4425
        %4427 = vmatmul.bf16.gmra.mxu0 %v4285
        %v4428 = vpop.f32.mrf.mxu0
        %v4429 = vadd.f32 %v4309, %v4428
        %v4430 = vpop.f32.mrf.mxu0
        %v4431 = vadd.f32 %v4309, %v4430
        %4432 = vmatmul.bf16.gmra.mxu0 %v4286
        %v4433 = vpop.f32.mrf.mxu0
        %v4434 = vadd.f32 %v4309, %v4433
        %v4435 = vpop.f32.mrf.mxu0
        %v4436 = vadd.f32 %v4309, %v4435
        %4437 = vmatmul.bf16.gmra.mxu0 %v4287
        %v4438 = vpop.f32.mrf.mxu0
        %v4439 = vadd.f32 %v4309, %v4438
        %v4440 = vpop.f32.mrf.mxu0
        %v4441 = vadd.f32 %v4309, %v4440
        %4442 = vmatmul.bf16.gmra.mxu0 %v4288
        %v4443 = vpop.f32.mrf.mxu0
        %v4444 = vadd.f32 %v4309, %v4443
        %v4445 = vpop.f32.mrf.mxu0
        %v4446 = vadd.f32 %v4309, %v4445
        %4447 = vdwg.mxu0
        %v4448 = vtanh.pop %v4369
        %v4449 = vtanh.pop %v4371
        %v4450 = vtanh.pop %v4374
        %v4451 = vtanh.pop %v4376
        %v4452 = vtanh.pop %v4379
        %v4453 = vtanh.pop %v4381
        %v4454 = vtanh.pop %v4384
        %v4455 = vtanh.pop %v4386
        %v4456 = vtanh.pop %v4389
        %v4457 = vtanh.pop %v4391
        %v4458 = vtanh.pop %v4394
        %v4459 = vtanh.pop %v4396
        %v4460 = vtanh.pop %v4399
        %v4461 = vtanh.pop %v4401
        %v4462 = vtanh.pop %v4404
        %v4463 = vtanh.pop %v4406
        %v4464 = vtanh.pop %v4409
        %v4465 = vtanh.pop %v4411
        %v4466 = vtanh.pop %v4414
        %v4467 = vtanh.pop %v4416
        %v4468 = vtanh.pop %v4419
        %v4469 = vtanh.pop %v4421
        %v4470 = vtanh.pop %v4424
        %v4471 = vtanh.pop %v4426
        %v4472 = vtanh.pop %v4429
        %v4473 = vtanh.pop %v4431
        %v4474 = vtanh.pop %v4434
        %v4475 = vtanh.pop %v4436
        %v4476 = vtanh.pop %v4439
        %v4477 = vtanh.pop %v4441
        %v4478 = vtanh.pop %v4444
        %v4479 = vtanh.pop %v4446
        %v4480 = vmax.f32 %v4369, 0.0
        %v4481 = vmax.f32 %v4371, 0.0
        %v4482 = vmax.f32 %v4374, 0.0
        %v4483 = vmax.f32 %v4376, 0.0
        %v4484 = vmax.f32 %v4379, 0.0
        %v4485 = vmax.f32 %v4381, 0.0
        %v4486 = vmax.f32 %v4384, 0.0
        %v4487 = vmax.f32 %v4386, 0.0
        %v4488 = vmax.f32 %v4389, 0.0
        %v4489 = vmax.f32 %v4391, 0.0
        %v4490 = vmax.f32 %v4394, 0.0
        %v4491 = vmax.f32 %v4396, 0.0
        %v4492 = vmax.f32 %v4399, 0.0
        %v4493 = vmax.f32 %v4401, 0.0
        %v4494 = vmax.f32 %v4404, 0.0
        %v4495 = vmax.f32 %v4406, 0.0
        %v4496 = vmax.f32 %v4409, 0.0
        %v4497 = vmax.f32 %v4411, 0.0
        %v4498 = vmax.f32 %v4414, 0.0
        %v4499 = vmax.f32 %v4416, 0.0
        %v4500 = vmax.f32 %v4419, 0.0
        %v4501 = vmax.f32 %v4421, 0.0
        %v4502 = vmax.f32 %v4424, 0.0
        %v4503 = vmax.f32 %v4426, 0.0
        %v4504 = vmax.f32 %v4429, 0.0
        %v4505 = vmax.f32 %v4431, 0.0
        %v4506 = vmax.f32 %v4434, 0.0
        %v4507 = vmax.f32 %v4436, 0.0
        %v4508 = vmax.f32 %v4439, 0.0
        %v4509 = vmax.f32 %v4441, 0.0
        %v4510 = vmax.f32 %v4444, 0.0
        %v4511 = vmax.f32 %v4446, 0.0
        %v4512 = vsel %vm737, %v4448, %v4480
        %v4513 = vsel %vm737, %v4449, %v4481
        %v4514 = vsel %vm737, %v4450, %v4482
        %v4515 = vsel %vm737, %v4451, %v4483
        %v4516 = vsel %vm737, %v4452, %v4484
        %v4517 = vsel %vm737, %v4453, %v4485
        %v4518 = vsel %vm737, %v4454, %v4486
        %v4519 = vsel %vm737, %v4455, %v4487
        %v4520 = vsel %vm737, %v4456, %v4488
        %v4521 = vsel %vm737, %v4457, %v4489
        %v4522 = vsel %vm737, %v4458, %v4490
        %v4523 = vsel %vm737, %v4459, %v4491
        %v4524 = vsel %vm737, %v4460, %v4492
        %v4525 = vsel %vm737, %v4461, %v4493
        %v4526 = vsel %vm737, %v4462, %v4494
        %v4527 = vsel %vm737, %v4463, %v4495
        %v4528 = vsel %vm737, %v4464, %v4496
        %v4529 = vsel %vm737, %v4465, %v4497
        %v4530 = vsel %vm737, %v4466, %v4498
        %v4531 = vsel %vm737, %v4467, %v4499
        %v4532 = vsel %vm737, %v4468, %v4500
        %v4533 = vsel %vm737, %v4469, %v4501
        %v4534 = vsel %vm737, %v4470, %v4502
        %v4535 = vsel %vm737, %v4471, %v4503
        %v4536 = vsel %vm737, %v4472, %v4504
        %v4537 = vsel %vm737, %v4473, %v4505
        %v4538 = vsel %vm737, %v4474, %v4506
        %v4539 = vsel %vm737, %v4475, %v4507
        %v4540 = vsel %vm737, %v4476, %v4508
        %v4541 = vsel %vm737, %v4477, %v4509
        %v4542 = vsel %vm737, %v4478, %v4510
        %v4543 = vsel %vm737, %v4479, %v4511
        %v4544 = vpack.c.bf16 %v4513, %v4512
        %v4545 = vpack.c.bf16 %v4515, %v4514
        %v4546 = vpack.c.bf16 %v4517, %v4516
        %v4547 = vpack.c.bf16 %v4519, %v4518
        %v4548 = vpack.c.bf16 %v4521, %v4520
        %v4549 = vpack.c.bf16 %v4523, %v4522
        %v4550 = vpack.c.bf16 %v4525, %v4524
        %v4551 = vpack.c.bf16 %v4527, %v4526
        %v4552 = vpack.c.bf16 %v4529, %v4528
        %v4553 = vpack.c.bf16 %v4531, %v4530
        %v4554 = vpack.c.bf16 %v4533, %v4532
        %v4555 = vpack.c.bf16 %v4535, %v4534
        %v4556 = vpack.c.bf16 %v4537, %v4536
        %v4557 = vpack.c.bf16 %v4539, %v4538
        %v4558 = vpack.c.bf16 %v4541, %v4540
        %v4559 = vpack.c.bf16 %v4543, %v4542
        %s4560 = scalar_lea.vmem [#allocation11], 384
        %v4561 = vld [vmem:[%s4560] sm:$0xff]
        %v4562 = vld [vmem:[%s4560 + $0x8] sm:$0xff]
        %v4563 = vld [vmem:[%s4560 + $0x10] sm:$0xff]
        %v4564 = vld [vmem:[%s4560 + $0x18] sm:$0xff]
        %v4565 = vld [vmem:[%s4560 + $0x20] sm:$0xff]
        %v4566 = vld [vmem:[%s4560 + $0x28] sm:$0xff]
        %v4567 = vld [vmem:[%s4560 + $0x30] sm:$0xff]
        %v4568 = vld [vmem:[%s4560 + $0x38] sm:$0xff]
        %v4569 = vld [vmem:[%s4560 + $0x40] sm:$0xff]
        %v4570 = vld [vmem:[%s4560 + $0x48] sm:$0xff]
        %v4571 = vld [vmem:[%s4560 + $0x50] sm:$0xff]
        %v4572 = vld [vmem:[%s4560 + $0x58] sm:$0xff]
        %v4573 = vld [vmem:[%s4560 + $0x60] sm:$0xff]
        %v4574 = vld [vmem:[%s4560 + $0x68] sm:$0xff]
        %v4575 = vld [vmem:[%s4560 + $0x70] sm:$0xff]
        %v4576 = vld [vmem:[%s4560 + $0x78] sm:$0xff]
        %s4577 = scalar_lea.vmem [#allocation13], 6
        %v4578 = vld [vmem:[%s4577] sm:$0x3]
        %v4580 = vperm.slane %v4578, 0
        %v4581 = vperm.slane %v4578, 1
        %v4600 = vunpack.c.l.b16 %v4561
        %v4601 = vunpack.c.h.b16 %v4561
        %v4602 = vunpack.c.l.b16 %v4562
        %v4603 = vunpack.c.h.b16 %v4562
        %v4604 = vunpack.c.l.b16 %v4563
        %v4605 = vunpack.c.h.b16 %v4563
        %v4606 = vunpack.c.l.b16 %v4564
        %v4607 = vunpack.c.h.b16 %v4564
        %v4608 = vunpack.c.l.b16 %v4565
        %v4609 = vunpack.c.h.b16 %v4565
        %v4610 = vunpack.c.l.b16 %v4566
        %v4611 = vunpack.c.h.b16 %v4566
        %v4612 = vunpack.c.l.b16 %v4567
        %v4613 = vunpack.c.h.b16 %v4567
        %v4614 = vunpack.c.l.b16 %v4568
        %v4615 = vunpack.c.h.b16 %v4568
        %v4616 = vunpack.c.l.b16 %v4569
        %v4617 = vunpack.c.h.b16 %v4569
        %v4618 = vunpack.c.l.b16 %v4570
        %v4619 = vunpack.c.h.b16 %v4570
        %v4620 = vunpack.c.l.b16 %v4571
        %v4621 = vunpack.c.h.b16 %v4571
        %v4622 = vunpack.c.l.b16 %v4572
        %v4623 = vunpack.c.h.b16 %v4572
        %v4624 = vunpack.c.l.b16 %v4573
        %v4625 = vunpack.c.h.b16 %v4573
        %v4626 = vunpack.c.l.b16 %v4574
        %v4627 = vunpack.c.h.b16 %v4574
        %v4628 = vunpack.c.l.b16 %v4575
        %v4629 = vunpack.c.h.b16 %v4575
        %v4630 = vunpack.c.l.b16 %v4576
        %v4631 = vunpack.c.h.b16 %v4576
        %v4632 = vpack.c.b16 %v4602, %v4600
        %v4633 = vpack.c.b16 %v4603, %v4601
        %v4634 = vpack.c.b16 %v4606, %v4604
        %v4635 = vpack.c.b16 %v4607, %v4605
        %v4636 = vpack.c.b16 %v4610, %v4608
        %v4637 = vpack.c.b16 %v4611, %v4609
        %v4638 = vpack.c.b16 %v4614, %v4612
        %v4639 = vpack.c.b16 %v4615, %v4613
        %v4640 = vpack.c.b16 %v4618, %v4616
        %v4641 = vpack.c.b16 %v4619, %v4617
        %v4642 = vpack.c.b16 %v4622, %v4620
        %v4643 = vpack.c.b16 %v4623, %v4621
        %v4644 = vpack.c.b16 %v4626, %v4624
        %v4645 = vpack.c.b16 %v4627, %v4625
        %v4646 = vpack.c.b16 %v4630, %v4628
        %v4647 = vpack.c.b16 %v4631, %v4629
        %4664 = vmatpush.bf16.msra.mxu0 %v4646
        %4665 = vmatpush.bf16.msra.mxu0 %v4644
        %4666 = vmatpush.bf16.msra.mxu0 %v4642
        %4667 = vmatpush.bf16.msra.mxu0 %v4640
        %4668 = vmatpush.bf16.msra.mxu0 %v4638
        %4669 = vmatpush.bf16.msra.mxu0 %v4636
        %4670 = vmatpush.bf16.msra.mxu0 %v4634
        %4671 = vmatpush.bf16.msra.mxu0 %v4632
        %4672 = vmatmul.bf16.gmra.mxu0 %v4544
        %v4673 = vpop.f32.mrf.mxu0
        %v4674 = vadd.f32 %v4580, %v4673
        %v4675 = vpop.f32.mrf.mxu0
        %v4676 = vadd.f32 %v4580, %v4675
        %4677 = vmatmul.bf16.gmra.mxu0 %v4545
        %v4678 = vpop.f32.mrf.mxu0
        %v4679 = vadd.f32 %v4580, %v4678
        %v4680 = vpop.f32.mrf.mxu0
        %v4681 = vadd.f32 %v4580, %v4680
        %4682 = vmatmul.bf16.gmra.mxu0 %v4546
        %v4683 = vpop.f32.mrf.mxu0
        %v4684 = vadd.f32 %v4580, %v4683
        %v4685 = vpop.f32.mrf.mxu0
        %v4686 = vadd.f32 %v4580, %v4685
        %4687 = vmatmul.bf16.gmra.mxu0 %v4547
        %v4688 = vpop.f32.mrf.mxu0
        %v4689 = vadd.f32 %v4580, %v4688
        %v4690 = vpop.f32.mrf.mxu0
        %v4691 = vadd.f32 %v4580, %v4690
        %4692 = vmatmul.bf16.gmra.mxu0 %v4548
        %v4693 = vpop.f32.mrf.mxu0
        %v4694 = vadd.f32 %v4580, %v4693
        %v4695 = vpop.f32.mrf.mxu0
        %v4696 = vadd.f32 %v4580, %v4695
        %4697 = vmatmul.bf16.gmra.mxu0 %v4549
        %v4698 = vpop.f32.mrf.mxu0
        %v4699 = vadd.f32 %v4580, %v4698
        %v4700 = vpop.f32.mrf.mxu0
        %v4701 = vadd.f32 %v4580, %v4700
        %4702 = vmatmul.bf16.gmra.mxu0 %v4550
        %v4703 = vpop.f32.mrf.mxu0
        %v4704 = vadd.f32 %v4580, %v4703
        %v4705 = vpop.f32.mrf.mxu0
        %v4706 = vadd.f32 %v4580, %v4705
        %4707 = vmatmul.bf16.gmra.mxu0 %v4551
        %v4708 = vpop.f32.mrf.mxu0
        %v4709 = vadd.f32 %v4580, %v4708
        %v4710 = vpop.f32.mrf.mxu0
        %v4711 = vadd.f32 %v4580, %v4710
        %4712 = vmatmul.bf16.gmra.mxu0 %v4552
        %v4713 = vpop.f32.mrf.mxu0
        %v4714 = vadd.f32 %v4580, %v4713
        %v4715 = vpop.f32.mrf.mxu0
        %v4716 = vadd.f32 %v4580, %v4715
        %4717 = vmatmul.bf16.gmra.mxu0 %v4553
        %v4718 = vpop.f32.mrf.mxu0
        %v4719 = vadd.f32 %v4580, %v4718
        %v4720 = vpop.f32.mrf.mxu0
        %v4721 = vadd.f32 %v4580, %v4720
        %4722 = vmatmul.bf16.gmra.mxu0 %v4554
        %v4723 = vpop.f32.mrf.mxu0
        %v4724 = vadd.f32 %v4580, %v4723
        %v4725 = vpop.f32.mrf.mxu0
        %v4726 = vadd.f32 %v4580, %v4725
        %4727 = vmatmul.bf16.gmra.mxu0 %v4555
        %v4728 = vpop.f32.mrf.mxu0
        %v4729 = vadd.f32 %v4580, %v4728
        %v4730 = vpop.f32.mrf.mxu0
        %v4731 = vadd.f32 %v4580, %v4730
        %4732 = vmatmul.bf16.gmra.mxu0 %v4556
        %v4733 = vpop.f32.mrf.mxu0
        %v4734 = vadd.f32 %v4580, %v4733
        %v4735 = vpop.f32.mrf.mxu0
        %v4736 = vadd.f32 %v4580, %v4735
        %4737 = vmatmul.bf16.gmra.mxu0 %v4557
        %v4738 = vpop.f32.mrf.mxu0
        %v4739 = vadd.f32 %v4580, %v4738
        %v4740 = vpop.f32.mrf.mxu0
        %v4741 = vadd.f32 %v4580, %v4740
        %4742 = vmatmul.bf16.gmra.mxu0 %v4558
        %v4743 = vpop.f32.mrf.mxu0
        %v4744 = vadd.f32 %v4580, %v4743
        %v4745 = vpop.f32.mrf.mxu0
        %v4746 = vadd.f32 %v4580, %v4745
        %4747 = vmatmul.bf16.gmra.mxu0 %v4559
        %v4748 = vpop.f32.mrf.mxu0
        %v4749 = vadd.f32 %v4580, %v4748
        %v4750 = vpop.f32.mrf.mxu0
        %v4751 = vadd.f32 %v4580, %v4750
        %4752 = vdwg.mxu0
        %4753 = vmatpush.bf16.msra.mxu0 %v4647
        %4754 = vmatpush.bf16.msra.mxu0 %v4645
        %4755 = vmatpush.bf16.msra.mxu0 %v4643
        %4756 = vmatpush.bf16.msra.mxu0 %v4641
        %4757 = vmatpush.bf16.msra.mxu0 %v4639
        %4758 = vmatpush.bf16.msra.mxu0 %v4637
        %4759 = vmatpush.bf16.msra.mxu0 %v4635
        %4760 = vmatpush.bf16.msra.mxu0 %v4633
        %4761 = vmatmul.bf16.gmra.mxu0 %v4544
        %v4762 = vpop.f32.mrf.mxu0
        %v4763 = vadd.f32 %v4581, %v4762
        %v4764 = vpop.f32.mrf.mxu0
        %v4765 = vadd.f32 %v4581, %v4764
        %4766 = vmatmul.bf16.gmra.mxu0 %v4545
        %v4767 = vpop.f32.mrf.mxu0
        %v4768 = vadd.f32 %v4581, %v4767
        %v4769 = vpop.f32.mrf.mxu0
        %v4770 = vadd.f32 %v4581, %v4769
        %4771 = vmatmul.bf16.gmra.mxu0 %v4546
        %v4772 = vpop.f32.mrf.mxu0
        %v4773 = vadd.f32 %v4581, %v4772
        %v4774 = vpop.f32.mrf.mxu0
        %v4775 = vadd.f32 %v4581, %v4774
        %4776 = vmatmul.bf16.gmra.mxu0 %v4547
        %v4777 = vpop.f32.mrf.mxu0
        %v4778 = vadd.f32 %v4581, %v4777
        %v4779 = vpop.f32.mrf.mxu0
        %v4780 = vadd.f32 %v4581, %v4779
        %4781 = vmatmul.bf16.gmra.mxu0 %v4548
        %v4782 = vpop.f32.mrf.mxu0
        %v4783 = vadd.f32 %v4581, %v4782
        %v4784 = vpop.f32.mrf.mxu0
        %v4785 = vadd.f32 %v4581, %v4784
        %4786 = vmatmul.bf16.gmra.mxu0 %v4549
        %v4787 = vpop.f32.mrf.mxu0
        %v4788 = vadd.f32 %v4581, %v4787
        %v4789 = vpop.f32.mrf.mxu0
        %v4790 = vadd.f32 %v4581, %v4789
        %4791 = vmatmul.bf16.gmra.mxu0 %v4550
        %v4792 = vpop.f32.mrf.mxu0
        %v4793 = vadd.f32 %v4581, %v4792
        %v4794 = vpop.f32.mrf.mxu0
        %v4795 = vadd.f32 %v4581, %v4794
        %4796 = vmatmul.bf16.gmra.mxu0 %v4551
        %v4797 = vpop.f32.mrf.mxu0
        %v4798 = vadd.f32 %v4581, %v4797
        %v4799 = vpop.f32.mrf.mxu0
        %v4800 = vadd.f32 %v4581, %v4799
        %4801 = vmatmul.bf16.gmra.mxu0 %v4552
        %v4802 = vpop.f32.mrf.mxu0
        %v4803 = vadd.f32 %v4581, %v4802
        %v4804 = vpop.f32.mrf.mxu0
        %v4805 = vadd.f32 %v4581, %v4804
        %4806 = vmatmul.bf16.gmra.mxu0 %v4553
        %v4807 = vpop.f32.mrf.mxu0
        %v4808 = vadd.f32 %v4581, %v4807
        %v4809 = vpop.f32.mrf.mxu0
        %v4810 = vadd.f32 %v4581, %v4809
        %4811 = vmatmul.bf16.gmra.mxu0 %v4554
        %v4812 = vpop.f32.mrf.mxu0
        %v4813 = vadd.f32 %v4581, %v4812
        %v4814 = vpop.f32.mrf.mxu0
        %v4815 = vadd.f32 %v4581, %v4814
        %4816 = vmatmul.bf16.gmra.mxu0 %v4555
        %v4817 = vpop.f32.mrf.mxu0
        %v4818 = vadd.f32 %v4581, %v4817
        %v4819 = vpop.f32.mrf.mxu0
        %v4820 = vadd.f32 %v4581, %v4819
        %4821 = vmatmul.bf16.gmra.mxu0 %v4556
        %v4822 = vpop.f32.mrf.mxu0
        %v4823 = vadd.f32 %v4581, %v4822
        %v4824 = vpop.f32.mrf.mxu0
        %v4825 = vadd.f32 %v4581, %v4824
        %4826 = vmatmul.bf16.gmra.mxu0 %v4557
        %v4827 = vpop.f32.mrf.mxu0
        %v4828 = vadd.f32 %v4581, %v4827
        %v4829 = vpop.f32.mrf.mxu0
        %v4830 = vadd.f32 %v4581, %v4829
        %4831 = vmatmul.bf16.gmra.mxu0 %v4558
        %v4832 = vpop.f32.mrf.mxu0
        %v4833 = vadd.f32 %v4581, %v4832
        %v4834 = vpop.f32.mrf.mxu0
        %v4835 = vadd.f32 %v4581, %v4834
        %4836 = vmatmul.bf16.gmra.mxu0 %v4559
        %v4837 = vpop.f32.mrf.mxu0
        %v4838 = vadd.f32 %v4581, %v4837
        %v4839 = vpop.f32.mrf.mxu0
        %v4840 = vadd.f32 %v4581, %v4839
        %4841 = vdwg.mxu0
        %v4842 = vsub.f32 %v3868, %v4763
        %v4843 = vsub.f32 %v3869, %v4765
        %v4844 = vsub.f32 %v3870, %v4768
        %v4845 = vsub.f32 %v3871, %v4770
        %v4846 = vsub.f32 %v3872, %v4773
        %v4847 = vsub.f32 %v3873, %v4775
        %v4848 = vsub.f32 %v3874, %v4778
        %v4849 = vsub.f32 %v3875, %v4780
        %v4850 = vsub.f32 %v3876, %v4783
        %v4851 = vsub.f32 %v3877, %v4785
        %v4852 = vsub.f32 %v3878, %v4788
        %v4853 = vsub.f32 %v3879, %v4790
        %v4854 = vsub.f32 %v3880, %v4793
        %v4855 = vsub.f32 %v3881, %v4795
        %v4856 = vsub.f32 %v3882, %v4798
        %v4857 = vsub.f32 %v3883, %v4800
        %v4858 = vsub.f32 %v3884, %v4803
        %v4859 = vsub.f32 %v3885, %v4805
        %v4860 = vsub.f32 %v3886, %v4808
        %v4861 = vsub.f32 %v3887, %v4810
        %v4862 = vsub.f32 %v3888, %v4813
        %v4863 = vsub.f32 %v3889, %v4815
        %v4864 = vsub.f32 %v3890, %v4818
        %v4865 = vsub.f32 %v3891, %v4820
        %v4866 = vsub.f32 %v3892, %v4823
        %v4867 = vsub.f32 %v3893, %v4825
        %v4868 = vsub.f32 %v3894, %v4828
        %v4869 = vsub.f32 %v3895, %v4830
        %v4870 = vsub.f32 %v3896, %v4833
        %v4871 = vsub.f32 %v3897, %v4835
        %v4872 = vsub.f32 %v3898, %v4838
        %v4873 = vsub.f32 %v3899, %v4840
        %v4875 = vperm.slane %v3966, 0
        %v4877 = vmul.f32 %v4875, %v4842
        %v4878 = vmul.f32 %v4875, %v4843
        %v4879 = vmul.f32 %v4875, %v4844
        %v4880 = vmul.f32 %v4875, %v4845
        %v4881 = vmul.f32 %v4875, %v4846
        %v4882 = vmul.f32 %v4875, %v4847
        %v4883 = vmul.f32 %v4875, %v4848
        %v4884 = vmul.f32 %v4875, %v4849
        %v4885 = vmul.f32 %v4875, %v4850
        %v4886 = vmul.f32 %v4875, %v4851
        %v4887 = vmul.f32 %v4875, %v4852
        %v4888 = vmul.f32 %v4875, %v4853
        %v4889 = vmul.f32 %v4875, %v4854
        %v4890 = vmul.f32 %v4875, %v4855
        %v4891 = vmul.f32 %v4875, %v4856
        %v4892 = vmul.f32 %v4875, %v4857
        %v4893 = vmul.f32 %v4875, %v4858
        %v4894 = vmul.f32 %v4875, %v4859
        %v4895 = vmul.f32 %v4875, %v4860
        %v4896 = vmul.f32 %v4875, %v4861
        %v4897 = vmul.f32 %v4875, %v4862
        %v4898 = vmul.f32 %v4875, %v4863
        %v4899 = vmul.f32 %v4875, %v4864
        %v4900 = vmul.f32 %v4875, %v4865
        %v4901 = vmul.f32 %v4875, %v4866
        %v4902 = vmul.f32 %v4875, %v4867
        %v4903 = vmul.f32 %v4875, %v4868
        %v4904 = vmul.f32 %v4875, %v4869
        %v4905 = vmul.f32 %v4875, %v4870
        %v4906 = vmul.f32 %v4875, %v4871
        %v4907 = vmul.f32 %v4875, %v4872
        %v4908 = vmul.f32 %v4875, %v4873
        %v4909 = vsub.f32 0.0, %v4674
        %v4910 = vsub.f32 0.0, %v4676
        %v4911 = vsub.f32 0.0, %v4679
        %v4912 = vsub.f32 0.0, %v4681
        %v4913 = vsub.f32 0.0, %v4684
        %v4914 = vsub.f32 0.0, %v4686
        %v4915 = vsub.f32 0.0, %v4689
        %v4916 = vsub.f32 0.0, %v4691
        %v4917 = vsub.f32 0.0, %v4694
        %v4918 = vsub.f32 0.0, %v4696
        %v4919 = vsub.f32 0.0, %v4699
        %v4920 = vsub.f32 0.0, %v4701
        %v4921 = vsub.f32 0.0, %v4704
        %v4922 = vsub.f32 0.0, %v4706
        %v4923 = vsub.f32 0.0, %v4709
        %v4924 = vsub.f32 0.0, %v4711
        %v4925 = vsub.f32 0.0, %v4714
        %v4926 = vsub.f32 0.0, %v4716
        %v4927 = vsub.f32 0.0, %v4719
        %v4928 = vsub.f32 0.0, %v4721
        %v4929 = vsub.f32 0.0, %v4724
        %v4930 = vsub.f32 0.0, %v4726
        %v4931 = vsub.f32 0.0, %v4729
        %v4932 = vsub.f32 0.0, %v4731
        %v4933 = vsub.f32 0.0, %v4734
        %v4934 = vsub.f32 0.0, %v4736
        %v4935 = vsub.f32 0.0, %v4739
        %v4936 = vsub.f32 0.0, %v4741
        %v4937 = vsub.f32 0.0, %v4744
        %v4938 = vsub.f32 0.0, %v4746
        %v4939 = vsub.f32 0.0, %v4749
        %v4940 = vsub.f32 0.0, %v4751
        %v4941 = vmul.f32 %v4909, 1.442695
        %v4942 = vpow.pop %v4941
        %v4943 = vmul.f32 %v4910, 1.442695
        %v4944 = vpow.pop %v4943
        %v4945 = vmul.f32 %v4911, 1.442695
        %v4946 = vpow.pop %v4945
        %v4947 = vmul.f32 %v4912, 1.442695
        %v4948 = vpow.pop %v4947
        %v4949 = vmul.f32 %v4913, 1.442695
        %v4950 = vpow.pop %v4949
        %v4951 = vmul.f32 %v4914, 1.442695
        %v4952 = vpow.pop %v4951
        %v4953 = vmul.f32 %v4915, 1.442695
        %v4954 = vpow.pop %v4953
        %v4955 = vmul.f32 %v4916, 1.442695
        %v4956 = vpow.pop %v4955
        %v4957 = vmul.f32 %v4917, 1.442695
        %v4958 = vpow.pop %v4957
        %v4959 = vmul.f32 %v4918, 1.442695
        %v4960 = vpow.pop %v4959
        %v4961 = vmul.f32 %v4919, 1.442695
        %v4962 = vpow.pop %v4961
        %v4963 = vmul.f32 %v4920, 1.442695
        %v4964 = vpow.pop %v4963
        %v4965 = vmul.f32 %v4921, 1.442695
        %v4966 = vpow.pop %v4965
        %v4967 = vmul.f32 %v4922, 1.442695
        %v4968 = vpow.pop %v4967
        %v4969 = vmul.f32 %v4923, 1.442695
        %v4970 = vpow.pop %v4969
        %v4971 = vmul.f32 %v4924, 1.442695
        %v4972 = vpow.pop %v4971
        %v4973 = vmul.f32 %v4925, 1.442695
        %v4974 = vpow.pop %v4973
        %v4975 = vmul.f32 %v4926, 1.442695
        %v4976 = vpow.pop %v4975
        %v4977 = vmul.f32 %v4927, 1.442695
        %v4978 = vpow.pop %v4977
        %v4979 = vmul.f32 %v4928, 1.442695
        %v4980 = vpow.pop %v4979
        %v4981 = vmul.f32 %v4929, 1.442695
        %v4982 = vpow.pop %v4981
        %v4983 = vmul.f32 %v4930, 1.442695
        %v4984 = vpow.pop %v4983
        %v4985 = vmul.f32 %v4931, 1.442695
        %v4986 = vpow.pop %v4985
        %v4987 = vmul.f32 %v4932, 1.442695
        %v4988 = vpow.pop %v4987
        %v4989 = vmul.f32 %v4933, 1.442695
        %v4990 = vpow.pop %v4989
        %v4991 = vmul.f32 %v4934, 1.442695
        %v4992 = vpow.pop %v4991
        %v4993 = vmul.f32 %v4935, 1.442695
        %v4994 = vpow.pop %v4993
        %v4995 = vmul.f32 %v4936, 1.442695
        %v4996 = vpow.pop %v4995
        %v4997 = vmul.f32 %v4937, 1.442695
        %v4998 = vpow.pop %v4997
        %v4999 = vmul.f32 %v4938, 1.442695
        %v5000 = vpow.pop %v4999
        %v5001 = vmul.f32 %v4939, 1.442695
        %v5002 = vpow.pop %v5001
        %v5003 = vmul.f32 %v4940, 1.442695
        %v5004 = vpow.pop %v5003
        %v5005 = vmul.f32 %v4877, %v4942
        %v5006 = vmul.f32 %v4878, %v4944
        %v5007 = vmul.f32 %v4879, %v4946
        %v5008 = vmul.f32 %v4880, %v4948
        %v5009 = vmul.f32 %v4881, %v4950
        %v5010 = vmul.f32 %v4882, %v4952
        %v5011 = vmul.f32 %v4883, %v4954
        %v5012 = vmul.f32 %v4884, %v4956
        %v5013 = vmul.f32 %v4885, %v4958
        %v5014 = vmul.f32 %v4886, %v4960
        %v5015 = vmul.f32 %v4887, %v4962
        %v5016 = vmul.f32 %v4888, %v4964
        %v5017 = vmul.f32 %v4889, %v4966
        %v5018 = vmul.f32 %v4890, %v4968
        %v5019 = vmul.f32 %v4891, %v4970
        %v5020 = vmul.f32 %v4892, %v4972
        %v5021 = vmul.f32 %v4893, %v4974
        %v5022 = vmul.f32 %v4894, %v4976
        %v5023 = vmul.f32 %v4895, %v4978
        %v5024 = vmul.f32 %v4896, %v4980
        %v5025 = vmul.f32 %v4897, %v4982
        %v5026 = vmul.f32 %v4898, %v4984
        %v5027 = vmul.f32 %v4899, %v4986
        %v5028 = vmul.f32 %v4900, %v4988
        %v5029 = vmul.f32 %v4901, %v4990
        %v5030 = vmul.f32 %v4902, %v4992
        %v5031 = vmul.f32 %v4903, %v4994
        %v5032 = vmul.f32 %v4904, %v4996
        %v5033 = vmul.f32 %v4905, %v4998
        %v5034 = vmul.f32 %v4906, %v5000
        %v5035 = vmul.f32 %v4907, %v5002
        %v5036 = vmul.f32 %v4908, %v5004
        %v5037 = vadd.f32 %v3970, %v5005
        %v5038 = vadd.f32 %v3971, %v5006
        %v5039 = vadd.f32 %v3972, %v5007
        %v5040 = vadd.f32 %v3973, %v5008
        %v5041 = vadd.f32 %v3974, %v5009
        %v5042 = vadd.f32 %v3975, %v5010
        %v5043 = vadd.f32 %v3976, %v5011
        %v5044 = vadd.f32 %v3977, %v5012
        %v5045 = vadd.f32 %v3978, %v5013
        %v5046 = vadd.f32 %v3979, %v5014
        %v5047 = vadd.f32 %v3980, %v5015
        %v5048 = vadd.f32 %v3981, %v5016
        %v5049 = vadd.f32 %v3982, %v5017
        %v5050 = vadd.f32 %v3983, %v5018
        %v5051 = vadd.f32 %v3984, %v5019
        %v5052 = vadd.f32 %v3985, %v5020
        %v5053 = vadd.f32 %v3986, %v5021
        %v5054 = vadd.f32 %v3987, %v5022
        %v5055 = vadd.f32 %v3988, %v5023
        %v5056 = vadd.f32 %v3989, %v5024
        %v5057 = vadd.f32 %v3990, %v5025
        %v5058 = vadd.f32 %v3991, %v5026
        %v5059 = vadd.f32 %v3992, %v5027
        %v5060 = vadd.f32 %v3993, %v5028
        %v5061 = vadd.f32 %v3994, %v5029
        %v5062 = vadd.f32 %v3995, %v5030
        %v5063 = vadd.f32 %v3996, %v5031
        %v5064 = vadd.f32 %v3997, %v5032
        %v5065 = vadd.f32 %v3998, %v5033
        %v5066 = vadd.f32 %v3999, %v5034
        %v5067 = vadd.f32 %v4000, %v5035
        %v5068 = vadd.f32 %v4001, %v5036
        %v5069 = vmul.f32 %v4875, %v4674
        %v5070 = vmul.f32 %v4875, %v4676
        %v5071 = vmul.f32 %v4875, %v4679
        %v5072 = vmul.f32 %v4875, %v4681
        %v5073 = vmul.f32 %v4875, %v4684
        %v5074 = vmul.f32 %v4875, %v4686
        %v5075 = vmul.f32 %v4875, %v4689
        %v5076 = vmul.f32 %v4875, %v4691
        %v5077 = vmul.f32 %v4875, %v4694
        %v5078 = vmul.f32 %v4875, %v4696
        %v5079 = vmul.f32 %v4875, %v4699
        %v5080 = vmul.f32 %v4875, %v4701
        %v5081 = vmul.f32 %v4875, %v4704
        %v5082 = vmul.f32 %v4875, %v4706
        %v5083 = vmul.f32 %v4875, %v4709
        %v5084 = vmul.f32 %v4875, %v4711
        %v5085 = vmul.f32 %v4875, %v4714
        %v5086 = vmul.f32 %v4875, %v4716
        %v5087 = vmul.f32 %v4875, %v4719
        %v5088 = vmul.f32 %v4875, %v4721
        %v5089 = vmul.f32 %v4875, %v4724
        %v5090 = vmul.f32 %v4875, %v4726
        %v5091 = vmul.f32 %v4875, %v4729
        %v5092 = vmul.f32 %v4875, %v4731
        %v5093 = vmul.f32 %v4875, %v4734
        %v5094 = vmul.f32 %v4875, %v4736
        %v5095 = vmul.f32 %v4875, %v4739
        %v5096 = vmul.f32 %v4875, %v4741
        %v5097 = vmul.f32 %v4875, %v4744
        %v5098 = vmul.f32 %v4875, %v4746
        %v5099 = vmul.f32 %v4875, %v4749
        %v5100 = vmul.f32 %v4875, %v4751
        %v5101 = vsub.f32 %v3932, %v5069
        %v5102 = vsub.f32 %v3933, %v5070
        %v5103 = vsub.f32 %v3934, %v5071
        %v5104 = vsub.f32 %v3935, %v5072
        %v5105 = vsub.f32 %v3936, %v5073
        %v5106 = vsub.f32 %v3937, %v5074
        %v5107 = vsub.f32 %v3938, %v5075
        %v5108 = vsub.f32 %v3939, %v5076
        %v5109 = vsub.f32 %v3940, %v5077
        %v5110 = vsub.f32 %v3941, %v5078
        %v5111 = vsub.f32 %v3942, %v5079
        %v5112 = vsub.f32 %v3943, %v5080
        %v5113 = vsub.f32 %v3944, %v5081
        %v5114 = vsub.f32 %v3945, %v5082
        %v5115 = vsub.f32 %v3946, %v5083
        %v5116 = vsub.f32 %v3947, %v5084
        %v5117 = vsub.f32 %v3948, %v5085
        %v5118 = vsub.f32 %v3949, %v5086
        %v5119 = vsub.f32 %v3950, %v5087
        %v5120 = vsub.f32 %v3951, %v5088
        %v5121 = vsub.f32 %v3952, %v5089
        %v5122 = vsub.f32 %v3953, %v5090
        %v5123 = vsub.f32 %v3954, %v5091
        %v5124 = vsub.f32 %v3955, %v5092
        %v5125 = vsub.f32 %v3956, %v5093
        %v5126 = vsub.f32 %v3957, %v5094
        %v5127 = vsub.f32 %v3958, %v5095
        %v5128 = vsub.f32 %v3959, %v5096
        %v5129 = vsub.f32 %v3960, %v5097
        %v5130 = vsub.f32 %v3961, %v5098
        %v5131 = vsub.f32 %v3962, %v5099
        %v5132 = vsub.f32 %v3963, %v5100
        %5133 = vst [vmem:[%s424] sm:$0xff] %v5037
        %5134 = vst [vmem:[%s424 + $0x10] sm:$0xff] %v5038
        %5135 = vst [vmem:[%s424 + $0x20] sm:$0xff] %v5039
        %5136 = vst [vmem:[%s424 + $0x30] sm:$0xff] %v5040
        %5137 = vst [vmem:[%s424 + $0x40] sm:$0xff] %v5041
        %5138 = vst [vmem:[%s424 + $0x50] sm:$0xff] %v5042
        %5139 = vst [vmem:[%s424 + $0x60] sm:$0xff] %v5043
        %5140 = vst [vmem:[%s424 + $0x70] sm:$0xff] %v5044
        %5141 = vst [vmem:[%s424 + $0x80] sm:$0xff] %v5045
        %5142 = vst [vmem:[%s424 + $0x90] sm:$0xff] %v5046
        %5143 = vst [vmem:[%s424 + $0xa0] sm:$0xff] %v5047
        %5144 = vst [vmem:[%s424 + $0xb0] sm:$0xff] %v5048
        %5145 = vst [vmem:[%s424 + $0xc0] sm:$0xff] %v5049
        %5146 = vst [vmem:[%s424 + $0xd0] sm:$0xff] %v5050
        %5147 = vst [vmem:[%s424 + $0xe0] sm:$0xff] %v5051
        %5148 = vst [vmem:[%s424 + $0xf0] sm:$0xff] %v5052
        %5149 = vst [vmem:[%s424 + $0x100] sm:$0xff] %v5053
        %5150 = vst [vmem:[%s424 + $0x110] sm:$0xff] %v5054
        %5151 = vst [vmem:[%s424 + $0x120] sm:$0xff] %v5055
        %5152 = vst [vmem:[%s424 + $0x130] sm:$0xff] %v5056
        %5153 = vst [vmem:[%s424 + $0x140] sm:$0xff] %v5057
        %5154 = vst [vmem:[%s424 + $0x150] sm:$0xff] %v5058
        %5155 = vst [vmem:[%s424 + $0x160] sm:$0xff] %v5059
        %5156 = vst [vmem:[%s424 + $0x170] sm:$0xff] %v5060
        %5157 = vst [vmem:[%s424 + $0x180] sm:$0xff] %v5061
        %5158 = vst [vmem:[%s424 + $0x190] sm:$0xff] %v5062
        %5159 = vst [vmem:[%s424 + $0x1a0] sm:$0xff] %v5063
        %5160 = vst [vmem:[%s424 + $0x1b0] sm:$0xff] %v5064
        %5161 = vst [vmem:[%s424 + $0x1c0] sm:$0xff] %v5065
        %5162 = vst [vmem:[%s424 + $0x1d0] sm:$0xff] %v5066
        %5163 = vst [vmem:[%s424 + $0x1e0] sm:$0xff] %v5067
        %5164 = vst [vmem:[%s424 + $0x1f0] sm:$0xff] %v5068
        %5165 = vst [vmem:[%s424 + $0x8] sm:$0xff] %v5101
        %5166 = vst [vmem:[%s424 + $0x18] sm:$0xff] %v5102
        %5167 = vst [vmem:[%s424 + $0x28] sm:$0xff] %v5103
        %5168 = vst [vmem:[%s424 + $0x38] sm:$0xff] %v5104
        %5169 = vst [vmem:[%s424 + $0x48] sm:$0xff] %v5105
        %5170 = vst [vmem:[%s424 + $0x58] sm:$0xff] %v5106
        %5171 = vst [vmem:[%s424 + $0x68] sm:$0xff] %v5107
        %5172 = vst [vmem:[%s424 + $0x78] sm:$0xff] %v5108
        %5173 = vst [vmem:[%s424 + $0x88] sm:$0xff] %v5109
        %5174 = vst [vmem:[%s424 + $0x98] sm:$0xff] %v5110
        %5175 = vst [vmem:[%s424 + $0xa8] sm:$0xff] %v5111
        %5176 = vst [vmem:[%s424 + $0xb8] sm:$0xff] %v5112
        %5177 = vst [vmem:[%s424 + $0xc8] sm:$0xff] %v5113
        %5178 = vst [vmem:[%s424 + $0xd8] sm:$0xff] %v5114
        %5179 = vst [vmem:[%s424 + $0xe8] sm:$0xff] %v5115
        %5180 = vst [vmem:[%s424 + $0xf8] sm:$0xff] %v5116
        %5181 = vst [vmem:[%s424 + $0x108] sm:$0xff] %v5117
        %5182 = vst [vmem:[%s424 + $0x118] sm:$0xff] %v5118
        %5183 = vst [vmem:[%s424 + $0x128] sm:$0xff] %v5119
        %5184 = vst [vmem:[%s424 + $0x138] sm:$0xff] %v5120
        %5185 = vst [vmem:[%s424 + $0x148] sm:$0xff] %v5121
        %5186 = vst [vmem:[%s424 + $0x158] sm:$0xff] %v5122
        %5187 = vst [vmem:[%s424 + $0x168] sm:$0xff] %v5123
        %5188 = vst [vmem:[%s424 + $0x178] sm:$0xff] %v5124
        %5189 = vst [vmem:[%s424 + $0x188] sm:$0xff] %v5125
        %5190 = vst [vmem:[%s424 + $0x198] sm:$0xff] %v5126
        %5191 = vst [vmem:[%s424 + $0x1a8] sm:$0xff] %v5127
        %5192 = vst [vmem:[%s424 + $0x1b8] sm:$0xff] %v5128
        %5193 = vst [vmem:[%s424 + $0x1c8] sm:$0xff] %v5129
        %5194 = vst [vmem:[%s424 + $0x1d8] sm:$0xff] %v5130
        %5195 = vst [vmem:[%s424 + $0x1e8] sm:$0xff] %v5131
        %5196 = vst [vmem:[%s424 + $0x1f8] sm:$0xff] %v5132
        %s5197 = sand.u32 %s209, 1
        %s5198 = scalar_lea.sflag [#allocation4], %s5197
        %s5199 = sand.u32 %s209, 1
        %s5200 = smul.addr %s5199, 512
        %s5201 = scalar_lea.vmem [#allocation14], %s5200
        // Predicated region
        $region81: #{tpu_custom_call.1} parent=51 // pred_check
          %p5202 = pneg %p219
        $region82: #{tpu_custom_call.1} parent=51 // pred_check_branch
          %5204 = sbr.rel (%p5202) target = $region84
        $region83: #{tpu_custom_call.1} parent=51 // pred_region
          %s5205 = smul.u32 32, %s28
          %5207 = vsyncadd %s5198, 0
          %s5208 = smul.addr %s5205, 2
          %s5209 = smul.addr %s5208, 8
          %s5210 = scalar_lea.hbm %s8, %s5209
          %s5211 = sshll.u32 %s5201, 4
          %s5212 = int_to_ptr.vmem [resolvable:$true] %s5211
          %s5213 = sshll.u32 %s5210, 4
          %s5214 = int_to_ptr.hbm [resolvable:$true] %s5213
          %5219 = dma.vmem_to_hbm [thread:$0]  %s5212, 8192, %s5214, %s5198, 256, 256, 16
        $region84: #{tpu_custom_call.1} parent=51 // pred_fallthru
          _
      $region52: #{tpu_custom_call.1} parent=5 // pred_fallthru
        _
      %p5220 = scmp.le.s32.totalorder 2, %s23
      // Predicated region
      $region85: #{tpu_custom_call.1} parent=5 // pred_check
        %p5221 = pneg %p5220
      $region86: #{tpu_custom_call.1} parent=5 // pred_check_branch
        %5223 = sbr.rel (%p5221) target = $region88
      $region87: #{tpu_custom_call.1} parent=5 // pred_region
        %s5224 = ssub.s32 %s23, 2
        // Predicated region
        $region89: #{tpu_custom_call.1} parent=87 // pred_check
          %p5225 = pneg %p225
        $region90: #{tpu_custom_call.1} parent=87 // pred_check_branch
          %5227 = sbr.rel (%p5225) target = $region92
        $region91: #{tpu_custom_call.1} parent=87 // pred_region
          %s5228 = sand.u32 %s210, 1
          %s5229 = scalar_lea.sflag [#allocation4], %s5228
          %s5230 = sand.u32 %s210, 1
          %s5231 = smul.addr %s5230, 512
          %s5232 = scalar_lea.vmem [#allocation14], %s5231
          %5234 = dma.done %s5229, 8192
        $region92: #{tpu_custom_call.1} parent=87 // pred_fallthru
          _
      $region88: #{tpu_custom_call.1} parent=5 // pred_fallthru
        _
    $region6: #{tpu_custom_call.1} parent=1 // loop_footer
      %s27 = sadd.s32 1, %s23
    $region7: #{tpu_custom_call.1} parent=1 // loop_footer_branch
      %22 = sbr.rel target = $region3
    $region8: #{tpu_custom_call.1} parent=1 // loop_exit
      _
    %5235 = vsyncpa [#allocation3], 1
    %s5236 = scalar_lea.sflag [#allocation3], 1
    %5237 = vsyncpa %s5236, 1
    %5238 = vsyncpa [#allocation6], 1
    %5239 = vsyncpa [#allocation9], 1
    %5240 = vsyncpa [#allocation12], 1
    %5241 = vsyncpa [#allocation4], 1
    %s5242 = scalar_lea.sflag [#allocation4], 1
    %5243 = vsyncpa %s5242, 1

</llo_original>
